<compile_context>
chip_gen: v7x
topology: tpu7x:2x2x1
jax: 0.10.0
libtpu: 0.0.40
codegen_flags: <defaults>
</compile_context>

<pallas_src>
import functools

import jax
import jax.numpy as jnp
from jax.experimental import pallas as pl
from jax.experimental.pallas import tpu as pltpu


# ------------------------------------------------------------------ fused cell kernel
def _cell_kernel(*refs, img_w, num_nodes, C):
    """Whole SearchCell, all batch elements, one invocation.

    refs = (x_ref, cm_ref, w_0, sh_0, ..., w_{S-1}, sh_{S-1}, o_ref), S = num_nodes-1
      x_ref  : (C, Q)        input node 0; channels on sublanes, Q = N*H*W on lanes
      cm_ref : (10, Q)       rows 0..8: {0,1} validity mask per 3x3 tap,
                             row 9: 1/valid-count for avg_pool (count_include_pad=False)
      w_s    : (9, M_s, C)   source-s folded weights; tap t block = BN-scaled conv3x3
                             tap (+ BN-scaled conv1x1 on the centre tap), edges of the
                             same source stacked along M (M_s = (#edges from s) * C)
      sh_s   : (M_s, 1)      folded BN shifts, packed to match the rows of w_s
      o_ref  : (C, Q)        cell output (last node)
    """
    S = num_nodes - 1
    x_ref, cm_ref = refs[0], refs[1]
    w_refs = [refs[2 + 2 * s] for s in range(S)]
    sh_refs = [refs[3 + 2 * s] for s in range(S)]
    o_ref = refs[-1]

    Q = x_ref.shape[1]
    # flat-pixel offset of each 3x3 tap, t = ky*3 + kx
    offs = [(ky - 1) * img_w + (kx - 1) for ky in range(3) for kx in range(3)]

    cm = cm_ref[...]          # (10, Q)
    inv_cnt = cm[9:10, :]     # (1, Q)

    def process_source(src, s):
        """All edge bundles leaving source node `s`, evaluated once on `src`."""
        n_edges = num_nodes - 1 - s
        psum = None           # avg-pool numerator (shared by every edge of this source)
        conv = None           # (n_edges*C, Q): conv1x1+conv3x3 of ALL edges of this source
        for t, off in enumerate(offs):
            if off == 0:
                shifted = src                       # centre tap: always valid
            else:
                # s[c, q] = src[c, q + off] if the tap stays inside the image else 0.
                # Lane rotate on the XLU; wrapped values (incl. cross-image wrap from
                # the folded batch) are killed by the {0,1} tap mask.
                shifted = pltpu.roll(src, shift=(-off) % Q, axis=1) * cm[t:t + 1, :]
            psum = shifted if psum is None else psum + shifted
            # ReLU commutes with the {0,1}-masked shift -> im2col of relu(src)
            r = jnp.maximum(shifted, 0.0)
            # one small MXU dot per tap; K = C, M = n_edges*C (same-source edges fused)
            part = jnp.dot(w_refs[s][t], r, preferred_element_type=jnp.float32)
            conv = part if conv is None else conv + part
        conv = conv + sh_refs[s][...]               # folded BN shift (shift1 + shift3)
        # none(=0) + skip_connect + avg_pool_3x3 shared base, plus per-edge conv chunk
        base = src + psum * inv_cnt
        return [base + conv[j * C:(j + 1) * C, :] for j in range(n_edges)]

    # node wiring of SearchCell.forward (keep_mask all True), grouped by source node
    outs = [x_ref[...]]
    pending = [None] * num_nodes
    for s in range(S):
        contribs = process_source(outs[s], s)       # contributions to nodes s+1..S
        for j, dest in enumerate(range(s + 1, num_nodes)):
            pending[dest] = contribs[j] if pending[dest] is None else pending[dest] + contribs[j]
        outs.append(pending[s + 1])                 # node s+1 is now complete
    o_ref[...] = outs[-1]


# ---------------------------------------------------------------------------- wrapper
@functools.partial(jax.jit, static_argnames=("num_nodes",))
def search_cell_pallas(x_nchw, w_list, sh_list, cmaps, *, num_nodes=4):
    N, C, H, W = x_nchw.shape
    L = H * W
    Q = N * L
    # fold batch into the lane axis: (N,C,H,W) -> (C, N*H*W); lane-dense 512-wide slab
    x_flat = jnp.transpose(x_nchw.reshape(N, C, L), (1, 0, 2)).reshape(C, Q)
    cm_tiled = jnp.tile(cmaps, (1, N))              # per-image masks replicated on lanes

    inputs = [x_flat, cm_tiled]
    in_specs = [pl.BlockSpec((C, Q), lambda i: (0, 0)),
                pl.BlockSpec((10, Q), lambda i: (0, 0))]
    for w_s, sh_s in zip(w_list, sh_list):
        inputs += [w_s, sh_s]
        in_specs += [pl.BlockSpec(w_s.shape, lambda i: (0, 0, 0)),
                     pl.BlockSpec(sh_s.shape, lambda i: (0, 0))]

    kernel = functools.partial(_cell_kernel, img_w=W, num_nodes=num_nodes, C=C)
    out_flat = pl.pallas_call(
        kernel,
        out_shape=jax.ShapeDtypeStruct((C, Q), jnp.float32),
        grid=(1,),                                   # single step: whole cell fits VMEM
        in_specs=in_specs,
        out_specs=pl.BlockSpec((C, Q), lambda i: (0, 0)),
        compiler_params=pltpu.CompilerParams(dimension_semantics=("arbitrary",)),
    )(*inputs)
    return jnp.transpose(out_flat.reshape(C, N, H, W), (1, 0, 2, 3))


# --------------------------------------------------------------- parameter preparation
def bn_fold(g, b, m, v, eps=1e-5):
    s = g * jax.lax.rsqrt(v + eps)
    return s, b - m * s


def _fold_edge(p, C):
    """One edge: BN scale folded into conv weights, 1x1 folded into the centre 3x3 tap."""
    s1, t1 = bn_fold(p["g1"], p["b1"], p["m1"], p["v1"])
    s3, t3 = bn_fold(p["g3"], p["b3"], p["m3"], p["v3"])
    w1 = s1[:, None] * p["w1"][:, :, 0, 0]                                   # (O, I)
    # (O, I, ky, kx) -> (ky, kx, O, I) -> (9, O, I), tap index t = ky*3 + kx
    w3 = s3[None, :, None] * jnp.transpose(p["w3"], (2, 3, 0, 1)).reshape(9, C, C)
    w = w3.at[4].add(w1)                            # 1x1 conv == centre tap (ky=kx=1)
    return w, (t1 + t3)[:, None]                    # (9, C, C), (C, 1)


def pack_cell_params(raw_params, C, num_nodes=4):
    """Group the folded per-edge weights by SOURCE node, stacking same-source edges
    along the output-channel axis (destination order), so each source needs one slab."""
    folded = [_fold_edge(p, C) for p in raw_params]
    w_list, sh_list = [], []
    for src in range(num_nodes - 1):
        # edge index of (curr, prev=src) in module order: curr*(curr+1)//2 + prev
        idxs = [curr * (curr + 1) // 2 + src for curr in range(src, num_nodes - 1)]
        w_list.append(jnp.concatenate([folded[i][0] for i in idxs], axis=1))   # (9, nC, C)
        sh_list.append(jnp.concatenate([folded[i][1] for i in idxs], axis=0))  # (nC, 1)
    return tuple(w_list), tuple(sh_list)


def make_cmaps(H, W):
    """(10, H*W): rows 0..8 = per-tap validity masks, row 9 = 1/valid-count (avg pool)."""
    ii = jnp.arange(H)[:, None]
    jj = jnp.arange(W)[None, :]
    masks = []
    for ky in range(3):
        for kx in range(3):
            ok = ((ii + ky - 1 >= 0) & (ii + ky - 1 < H) &
                  (jj + kx - 1 >= 0) & (jj + kx - 1 < W))
            masks.append(ok.astype(jnp.float32).reshape(H * W))
    tap = jnp.stack(masks, axis=0)                            # (9, H*W)
    inv_cnt = 1.0 / jnp.sum(tap, axis=0, keepdims=True)       # (1, H*W)
    return jnp.concatenate([tap, inv_cnt], axis=0)


def make_edge_params(key, C):
    """Raw torch-like params for one edge (conv weights OIHW, eval-mode BN stats)."""
    ks = jax.random.split(key, 10)
    return dict(
        w1=0.2 * jax.random.normal(ks[0], (C, C, 1, 1), jnp.float32),   # bias=False (affine)
        w3=0.2 * jax.random.normal(ks[1], (C, C, 3, 3), jnp.float32),
        g1=1.0 + 0.1 * jax.random.normal(ks[2], (C,), jnp.float32),
        b1=0.1 * jax.random.normal(ks[3], (C,), jnp.float32),
        m1=0.1 * jax.random.normal(ks[4], (C,), jnp.float32),
        v1=jax.random.uniform(ks[5], (C,), jnp.float32, 0.5, 1.5),
        g3=1.0 + 0.1 * jax.random.normal(ks[6], (C,), jnp.float32),
        b3=0.1 * jax.random.normal(ks[7], (C,), jnp.float32),
        m3=0.1 * jax.random.normal(ks[8], (C,), jnp.float32),
        v3=jax.random.uniform(ks[9], (C,), jnp.float32, 0.5, 1.5),
    )


# ----------------------------------------------------------------- pure-JAX reference
def _bn(x, g, b, m, v):
    s, t = bn_fold(g, b, m, v)
    return x * s[None, :, None, None] + t[None, :, None, None]


def edge_ref(x, p):
    """Unfused NCHW reference of one edge bundle (sum of the 5 candidate ops)."""
    N, C, H, W = x.shape
    r = jnp.maximum(x, 0.0)
    y1 = _bn(jnp.einsum("nchw,oc->nohw", r, p["w1"][:, :, 0, 0]),
             p["g1"], p["b1"], p["m1"], p["v1"])
    y3 = _bn(jax.lax.conv_general_dilated(
                 r, p["w3"], window_strides=(1, 1), padding=((1, 1), (1, 1)),
                 dimension_numbers=("NCHW", "OIHW", "NCHW")),
             p["g3"], p["b3"], p["m3"], p["v3"])
    xp = jnp.pad(x, ((0, 0), (0, 0), (1, 1), (1, 1)))
    psum = jnp.zeros_like(x)
    for dy in range(3):
        for dx in range(3):
            psum = psum + xp[:, :, dy:dy + H, dx:dx + W]
    ri = jnp.arange(H)
    ci = jnp.arange(W)
    cnt = ((3.0 - (ri == 0) - (ri == H - 1))[:, None] *
           (3.0 - (ci == 0) - (ci == W - 1))[None, :])
    pool = psum / cnt[None, None, :, :]
    return x * 0.0 + x + y1 + y3 + pool


def search_cell_ref(x, raw_params, num_nodes=4):
    outs = [x]
    idx = 0
    for curr in range(num_nodes - 1):
        acc = None
        for prev in range(curr + 1):
            eo = edge_ref(outs[prev], raw_params[idx])
            idx += 1
            acc = eo if acc is None else acc + eo
        outs.append(acc)
    return outs[-1]


# --------------------------------------------------------------------------------- main
if __name__ == "__main__":
    N, C, H, W = 2, 4, 16, 16                     # in_channels == out_channels, stride=1
    num_nodes = 4
    num_edges = sum(range(1, num_nodes))          # 6 (prev, curr) edges

    key = jax.random.PRNGKey(0)
    kx_, kp_ = jax.random.split(key)
    x = jax.random.normal(kx_, (N, C, H, W), jnp.float32)     # PyTorch NCHW input
    raw = [make_edge_params(k, C) for k in jax.random.split(kp_, num_edges)]

    w_list, sh_list = pack_cell_params(raw, C, num_nodes)     # per-source weight slabs
    cmaps = make_cmaps(H, W)                                  # (10, H*W)

    out = search_cell_pallas(x, w_list, sh_list, cmaps, num_nodes=num_nodes)
    out = jax.block_until_ready(out)

    ref = jax.block_until_ready(search_cell_ref(x, raw, num_nodes=num_nodes))

    assert out.shape == (N, C, H, W), out.shape
    err = float(jnp.max(jnp.abs(out - ref)))
    assert jnp.allclose(out, ref, atol=1e-3, rtol=1e-3), err
    print("KERNEL_OK")
</pallas_src>

<mosaic_0001>
module attributes {stable_mosaic.version = 11 : i64} {
  func.func @_cell_kernel(%arg0: i32, %arg1: memref<4x512xf32, #tpu.memory_space<vmem>>, %arg2: memref<10x512xf32, #tpu.memory_space<vmem>>, %arg3: memref<9x12x4xf32, #tpu.memory_space<vmem>>, %arg4: memref<12x1xf32, #tpu.memory_space<vmem>>, %arg5: memref<9x8x4xf32, #tpu.memory_space<vmem>>, %arg6: memref<8x1xf32, #tpu.memory_space<vmem>>, %arg7: memref<9x4x4xf32, #tpu.memory_space<vmem>>, %arg8: memref<4x1xf32, #tpu.memory_space<vmem>>, %arg9: memref<4x512xf32, #tpu.memory_space<vmem>>) attributes {dimension_semantics = [#tpu.dimension_semantics<arbitrary>], iteration_bounds = array<i64: 1>, scalar_prefetch = 0 : i64, scratch_operands = 0 : i64, tpu.core_type = #tpu.core_type<tc>, window_params = [{pipeline_mode = #tpu.pipeline_mode<synchronous>, transform_indices = @transform_0, window_bounds = array<i64: 4, 512>}, {pipeline_mode = #tpu.pipeline_mode<synchronous>, transform_indices = @transform_1, window_bounds = array<i64: 10, 512>}, {pipeline_mode = #tpu.pipeline_mode<synchronous>, transform_indices = @transform_2, window_bounds = array<i64: 9, 12, 4>}, {pipeline_mode = #tpu.pipeline_mode<synchronous>, transform_indices = @transform_3, window_bounds = array<i64: 12, 1>}, {pipeline_mode = #tpu.pipeline_mode<synchronous>, transform_indices = @transform_4, window_bounds = array<i64: 9, 8, 4>}, {pipeline_mode = #tpu.pipeline_mode<synchronous>, transform_indices = @transform_5, window_bounds = array<i64: 8, 1>}, {pipeline_mode = #tpu.pipeline_mode<synchronous>, transform_indices = @transform_6, window_bounds = array<i64: 9, 4, 4>}, {pipeline_mode = #tpu.pipeline_mode<synchronous>, transform_indices = @transform_7, window_bounds = array<i64: 4, 1>}, {pipeline_mode = #tpu.pipeline_mode<synchronous>, transform_indices = @transform_8, window_bounds = array<i64: 4, 512>}]} {
    %c0 = arith.constant 0 : index
    %c0_0 = arith.constant 0 : index
    %0 = vector.load %arg2[%c0, %c0_0] : memref<10x512xf32, #tpu.memory_space<vmem>>, vector<10x512xf32>
    %1 = vector.extract_strided_slice %0 {offsets = [9, 0], sizes = [1, 512], strides = [1, 1]} : vector<10x512xf32> to vector<1x512xf32>
    %c0_1 = arith.constant 0 : index
    %c0_2 = arith.constant 0 : index
    %2 = vector.load %arg1[%c0_1, %c0_2] : memref<4x512xf32, #tpu.memory_space<vmem>>, vector<4x512xf32>
    %c17_i32 = arith.constant 17 : i32
    %3 = tpu.dynamic_rotate %2 by %c17_i32 dim 1 : vector<4x512xf32>, i32 -> vector<4x512xf32>
    %4 = vector.extract_strided_slice %0 {offsets = [0, 0], sizes = [1, 512], strides = [1, 1]} : vector<10x512xf32> to vector<1x512xf32>
    %5 = vector.broadcast %4 : vector<1x512xf32> to vector<4x512xf32>
    %6 = arith.mulf %3, %5 : vector<4x512xf32>
    %cst = arith.constant 0.000000e+00 : f32
    %7 = vector.broadcast %cst : f32 to vector<4x512xf32>
    %8 = arith.maximumf %6, %7 : vector<4x512xf32>
    %c0_3 = arith.constant 0 : index
    %c0_4 = arith.constant 0 : index
    %c0_5 = arith.constant 0 : index
    %9 = vector.load %arg3[%c0_3, %c0_4, %c0_5] : memref<9x12x4xf32, #tpu.memory_space<vmem>>, vector<1x12x4xf32>
    %10 = vector.shape_cast %9 : vector<1x12x4xf32> to vector<12x4xf32>
    %cst_6 = arith.constant dense<0.000000e+00> : vector<12x512xf32>
    %11 = tpu.matmul %10, %8, %cst_6 {dimension_numbers = #tpu.dot_dimension_numbers<[1], [0], [0], [1], [0, 0, 1, 1], [], []>} : vector<12x4xf32>, vector<4x512xf32>, vector<12x512xf32> -> vector<12x512xf32>
    %c16_i32 = arith.constant 16 : i32
    %12 = tpu.dynamic_rotate %2 by %c16_i32 dim 1 : vector<4x512xf32>, i32 -> vector<4x512xf32>
    %13 = vector.extract_strided_slice %0 {offsets = [1, 0], sizes = [1, 512], strides = [1, 1]} : vector<10x512xf32> to vector<1x512xf32>
    %14 = vector.broadcast %13 : vector<1x512xf32> to vector<4x512xf32>
    %15 = arith.mulf %12, %14 : vector<4x512xf32>
    %16 = arith.addf %6, %15 : vector<4x512xf32>
    %cst_7 = arith.constant 0.000000e+00 : f32
    %17 = vector.broadcast %cst_7 : f32 to vector<4x512xf32>
    %18 = arith.maximumf %15, %17 : vector<4x512xf32>
    %c1 = arith.constant 1 : index
    %c0_8 = arith.constant 0 : index
    %c0_9 = arith.constant 0 : index
    %19 = vector.load %arg3[%c1, %c0_8, %c0_9] : memref<9x12x4xf32, #tpu.memory_space<vmem>>, vector<1x12x4xf32>
    %20 = vector.shape_cast %19 : vector<1x12x4xf32> to vector<12x4xf32>
    %cst_10 = arith.constant dense<0.000000e+00> : vector<12x512xf32>
    %21 = tpu.matmul %20, %18, %cst_10 {dimension_numbers = #tpu.dot_dimension_numbers<[1], [0], [0], [1], [0, 0, 1, 1], [], []>} : vector<12x4xf32>, vector<4x512xf32>, vector<12x512xf32> -> vector<12x512xf32>
    %22 = arith.addf %11, %21 : vector<12x512xf32>
    %c15_i32 = arith.constant 15 : i32
    %23 = tpu.dynamic_rotate %2 by %c15_i32 dim 1 : vector<4x512xf32>, i32 -> vector<4x512xf32>
    %24 = vector.extract_strided_slice %0 {offsets = [2, 0], sizes = [1, 512], strides = [1, 1]} : vector<10x512xf32> to vector<1x512xf32>
    %25 = vector.broadcast %24 : vector<1x512xf32> to vector<4x512xf32>
    %26 = arith.mulf %23, %25 : vector<4x512xf32>
    %27 = arith.addf %16, %26 : vector<4x512xf32>
    %cst_11 = arith.constant 0.000000e+00 : f32
    %28 = vector.broadcast %cst_11 : f32 to vector<4x512xf32>
    %29 = arith.maximumf %26, %28 : vector<4x512xf32>
    %c2 = arith.constant 2 : index
    %c0_12 = arith.constant 0 : index
    %c0_13 = arith.constant 0 : index
    %30 = vector.load %arg3[%c2, %c0_12, %c0_13] : memref<9x12x4xf32, #tpu.memory_space<vmem>>, vector<1x12x4xf32>
    %31 = vector.shape_cast %30 : vector<1x12x4xf32> to vector<12x4xf32>
    %cst_14 = arith.constant dense<0.000000e+00> : vector<12x512xf32>
    %32 = tpu.matmul %31, %29, %cst_14 {dimension_numbers = #tpu.dot_dimension_numbers<[1], [0], [0], [1], [0, 0, 1, 1], [], []>} : vector<12x4xf32>, vector<4x512xf32>, vector<12x512xf32> -> vector<12x512xf32>
    %33 = arith.addf %22, %32 : vector<12x512xf32>
    %c1_i32 = arith.constant 1 : i32
    %34 = tpu.dynamic_rotate %2 by %c1_i32 dim 1 : vector<4x512xf32>, i32 -> vector<4x512xf32>
    %35 = vector.extract_strided_slice %0 {offsets = [3, 0], sizes = [1, 512], strides = [1, 1]} : vector<10x512xf32> to vector<1x512xf32>
    %36 = vector.broadcast %35 : vector<1x512xf32> to vector<4x512xf32>
    %37 = arith.mulf %34, %36 : vector<4x512xf32>
    %38 = arith.addf %27, %37 : vector<4x512xf32>
    %cst_15 = arith.constant 0.000000e+00 : f32
    %39 = vector.broadcast %cst_15 : f32 to vector<4x512xf32>
    %40 = arith.maximumf %37, %39 : vector<4x512xf32>
    %c3 = arith.constant 3 : index
    %c0_16 = arith.constant 0 : index
    %c0_17 = arith.constant 0 : index
    %41 = vector.load %arg3[%c3, %c0_16, %c0_17] : memref<9x12x4xf32, #tpu.memory_space<vmem>>, vector<1x12x4xf32>
    %42 = vector.shape_cast %41 : vector<1x12x4xf32> to vector<12x4xf32>
    %cst_18 = arith.constant dense<0.000000e+00> : vector<12x512xf32>
    %43 = tpu.matmul %42, %40, %cst_18 {dimension_numbers = #tpu.dot_dimension_numbers<[1], [0], [0], [1], [0, 0, 1, 1], [], []>} : vector<12x4xf32>, vector<4x512xf32>, vector<12x512xf32> -> vector<12x512xf32>
    %44 = arith.addf %33, %43 : vector<12x512xf32>
    %45 = arith.addf %38, %2 : vector<4x512xf32>
    %cst_19 = arith.constant 0.000000e+00 : f32
    %46 = vector.broadcast %cst_19 : f32 to vector<4x512xf32>
    %47 = arith.maximumf %2, %46 : vector<4x512xf32>
    %c4 = arith.constant 4 : index
    %c0_20 = arith.constant 0 : index
    %c0_21 = arith.constant 0 : index
    %48 = vector.load %arg3[%c4, %c0_20, %c0_21] : memref<9x12x4xf32, #tpu.memory_space<vmem>>, vector<1x12x4xf32>
    %49 = vector.shape_cast %48 : vector<1x12x4xf32> to vector<12x4xf32>
    %cst_22 = arith.constant dense<0.000000e+00> : vector<12x512xf32>
    %50 = tpu.matmul %49, %47, %cst_22 {dimension_numbers = #tpu.dot_dimension_numbers<[1], [0], [0], [1], [0, 0, 1, 1], [], []>} : vector<12x4xf32>, vector<4x512xf32>, vector<12x512xf32> -> vector<12x512xf32>
    %51 = arith.addf %44, %50 : vector<12x512xf32>
    %c511_i32 = arith.constant 511 : i32
    %52 = tpu.dynamic_rotate %2 by %c511_i32 dim 1 : vector<4x512xf32>, i32 -> vector<4x512xf32>
    %53 = vector.extract_strided_slice %0 {offsets = [5, 0], sizes = [1, 512], strides = [1, 1]} : vector<10x512xf32> to vector<1x512xf32>
    %54 = vector.broadcast %53 : vector<1x512xf32> to vector<4x512xf32>
    %55 = arith.mulf %52, %54 : vector<4x512xf32>
    %56 = arith.addf %45, %55 : vector<4x512xf32>
    %cst_23 = arith.constant 0.000000e+00 : f32
    %57 = vector.broadcast %cst_23 : f32 to vector<4x512xf32>
    %58 = arith.maximumf %55, %57 : vector<4x512xf32>
    %c5 = arith.constant 5 : index
    %c0_24 = arith.constant 0 : index
    %c0_25 = arith.constant 0 : index
    %59 = vector.load %arg3[%c5, %c0_24, %c0_25] : memref<9x12x4xf32, #tpu.memory_space<vmem>>, vector<1x12x4xf32>
    %60 = vector.shape_cast %59 : vector<1x12x4xf32> to vector<12x4xf32>
    %cst_26 = arith.constant dense<0.000000e+00> : vector<12x512xf32>
    %61 = tpu.matmul %60, %58, %cst_26 {dimension_numbers = #tpu.dot_dimension_numbers<[1], [0], [0], [1], [0, 0, 1, 1], [], []>} : vector<12x4xf32>, vector<4x512xf32>, vector<12x512xf32> -> vector<12x512xf32>
    %62 = arith.addf %51, %61 : vector<12x512xf32>
    %c497_i32 = arith.constant 497 : i32
    %63 = tpu.dynamic_rotate %2 by %c497_i32 dim 1 : vector<4x512xf32>, i32 -> vector<4x512xf32>
    %64 = vector.extract_strided_slice %0 {offsets = [6, 0], sizes = [1, 512], strides = [1, 1]} : vector<10x512xf32> to vector<1x512xf32>
    %65 = vector.broadcast %64 : vector<1x512xf32> to vector<4x512xf32>
    %66 = arith.mulf %63, %65 : vector<4x512xf32>
    %67 = arith.addf %56, %66 : vector<4x512xf32>
    %cst_27 = arith.constant 0.000000e+00 : f32
    %68 = vector.broadcast %cst_27 : f32 to vector<4x512xf32>
    %69 = arith.maximumf %66, %68 : vector<4x512xf32>
    %c6 = arith.constant 6 : index
    %c0_28 = arith.constant 0 : index
    %c0_29 = arith.constant 0 : index
    %70 = vector.load %arg3[%c6, %c0_28, %c0_29] : memref<9x12x4xf32, #tpu.memory_space<vmem>>, vector<1x12x4xf32>
    %71 = vector.shape_cast %70 : vector<1x12x4xf32> to vector<12x4xf32>
    %cst_30 = arith.constant dense<0.000000e+00> : vector<12x512xf32>
    %72 = tpu.matmul %71, %69, %cst_30 {dimension_numbers = #tpu.dot_dimension_numbers<[1], [0], [0], [1], [0, 0, 1, 1], [], []>} : vector<12x4xf32>, vector<4x512xf32>, vector<12x512xf32> -> vector<12x512xf32>
    %73 = arith.addf %62, %72 : vector<12x512xf32>
    %c496_i32 = arith.constant 496 : i32
    %74 = tpu.dynamic_rotate %2 by %c496_i32 dim 1 : vector<4x512xf32>, i32 -> vector<4x512xf32>
    %75 = vector.extract_strided_slice %0 {offsets = [7, 0], sizes = [1, 512], strides = [1, 1]} : vector<10x512xf32> to vector<1x512xf32>
    %76 = vector.broadcast %75 : vector<1x512xf32> to vector<4x512xf32>
    %77 = arith.mulf %74, %76 : vector<4x512xf32>
    %78 = arith.addf %67, %77 : vector<4x512xf32>
    %cst_31 = arith.constant 0.000000e+00 : f32
    %79 = vector.broadcast %cst_31 : f32 to vector<4x512xf32>
    %80 = arith.maximumf %77, %79 : vector<4x512xf32>
    %c7 = arith.constant 7 : index
    %c0_32 = arith.constant 0 : index
    %c0_33 = arith.constant 0 : index
    %81 = vector.load %arg3[%c7, %c0_32, %c0_33] : memref<9x12x4xf32, #tpu.memory_space<vmem>>, vector<1x12x4xf32>
    %82 = vector.shape_cast %81 : vector<1x12x4xf32> to vector<12x4xf32>
    %cst_34 = arith.constant dense<0.000000e+00> : vector<12x512xf32>
    %83 = tpu.matmul %82, %80, %cst_34 {dimension_numbers = #tpu.dot_dimension_numbers<[1], [0], [0], [1], [0, 0, 1, 1], [], []>} : vector<12x4xf32>, vector<4x512xf32>, vector<12x512xf32> -> vector<12x512xf32>
    %84 = arith.addf %73, %83 : vector<12x512xf32>
    %c495_i32 = arith.constant 495 : i32
    %85 = tpu.dynamic_rotate %2 by %c495_i32 dim 1 : vector<4x512xf32>, i32 -> vector<4x512xf32>
    %86 = vector.extract_strided_slice %0 {offsets = [8, 0], sizes = [1, 512], strides = [1, 1]} : vector<10x512xf32> to vector<1x512xf32>
    %87 = vector.broadcast %86 : vector<1x512xf32> to vector<4x512xf32>
    %88 = arith.mulf %85, %87 : vector<4x512xf32>
    %89 = arith.addf %78, %88 : vector<4x512xf32>
    %cst_35 = arith.constant 0.000000e+00 : f32
    %90 = vector.broadcast %cst_35 : f32 to vector<4x512xf32>
    %91 = arith.maximumf %88, %90 : vector<4x512xf32>
    %c8 = arith.constant 8 : index
    %c0_36 = arith.constant 0 : index
    %c0_37 = arith.constant 0 : index
    %92 = vector.load %arg3[%c8, %c0_36, %c0_37] : memref<9x12x4xf32, #tpu.memory_space<vmem>>, vector<1x12x4xf32>
    %93 = vector.shape_cast %92 : vector<1x12x4xf32> to vector<12x4xf32>
    %cst_38 = arith.constant dense<0.000000e+00> : vector<12x512xf32>
    %94 = tpu.matmul %93, %91, %cst_38 {dimension_numbers = #tpu.dot_dimension_numbers<[1], [0], [0], [1], [0, 0, 1, 1], [], []>} : vector<12x4xf32>, vector<4x512xf32>, vector<12x512xf32> -> vector<12x512xf32>
    %95 = arith.addf %84, %94 : vector<12x512xf32>
    %c0_39 = arith.constant 0 : index
    %c0_40 = arith.constant 0 : index
    %96 = vector.load %arg4[%c0_39, %c0_40] : memref<12x1xf32, #tpu.memory_space<vmem>>, vector<12x1xf32>
    %97 = vector.broadcast %96 : vector<12x1xf32> to vector<12x512xf32>
    %98 = arith.addf %95, %97 : vector<12x512xf32>
    %99 = vector.broadcast %1 : vector<1x512xf32> to vector<4x512xf32>
    %100 = arith.mulf %89, %99 : vector<4x512xf32>
    %101 = arith.addf %2, %100 : vector<4x512xf32>
    %102 = vector.extract_strided_slice %98 {offsets = [0, 0], sizes = [4, 512], strides = [1, 1]} : vector<12x512xf32> to vector<4x512xf32>
    %103 = arith.addf %101, %102 : vector<4x512xf32>
    %104 = vector.extract_strided_slice %98 {offsets = [4, 0], sizes = [4, 512], strides = [1, 1]} : vector<12x512xf32> to vector<4x512xf32>
    %105 = arith.addf %101, %104 : vector<4x512xf32>
    %106 = vector.extract_strided_slice %98 {offsets = [8, 0], sizes = [4, 512], strides = [1, 1]} : vector<12x512xf32> to vector<4x512xf32>
    %107 = arith.addf %101, %106 : vector<4x512xf32>
    %c17_i32_41 = arith.constant 17 : i32
    %108 = tpu.dynamic_rotate %103 by %c17_i32_41 dim 1 : vector<4x512xf32>, i32 -> vector<4x512xf32>
    %109 = vector.extract_strided_slice %0 {offsets = [0, 0], sizes = [1, 512], strides = [1, 1]} : vector<10x512xf32> to vector<1x512xf32>
    %110 = vector.broadcast %109 : vector<1x512xf32> to vector<4x512xf32>
    %111 = arith.mulf %108, %110 : vector<4x512xf32>
    %cst_42 = arith.constant 0.000000e+00 : f32
    %112 = vector.broadcast %cst_42 : f32 to vector<4x512xf32>
    %113 = arith.maximumf %111, %112 : vector<4x512xf32>
    %c0_43 = arith.constant 0 : index
    %c0_44 = arith.constant 0 : index
    %c0_45 = arith.constant 0 : index
    %114 = vector.load %arg5[%c0_43, %c0_44, %c0_45] : memref<9x8x4xf32, #tpu.memory_space<vmem>>, vector<1x8x4xf32>
    %115 = vector.shape_cast %114 : vector<1x8x4xf32> to vector<8x4xf32>
    %cst_46 = arith.constant dense<0.000000e+00> : vector<8x512xf32>
    %116 = tpu.matmul %115, %113, %cst_46 {dimension_numbers = #tpu.dot_dimension_numbers<[1], [0], [0], [1], [0, 0, 1, 1], [], []>} : vector<8x4xf32>, vector<4x512xf32>, vector<8x512xf32> -> vector<8x512xf32>
    %c16_i32_47 = arith.constant 16 : i32
    %117 = tpu.dynamic_rotate %103 by %c16_i32_47 dim 1 : vector<4x512xf32>, i32 -> vector<4x512xf32>
    %118 = vector.extract_strided_slice %0 {offsets = [1, 0], sizes = [1, 512], strides = [1, 1]} : vector<10x512xf32> to vector<1x512xf32>
    %119 = vector.broadcast %118 : vector<1x512xf32> to vector<4x512xf32>
    %120 = arith.mulf %117, %119 : vector<4x512xf32>
    %121 = arith.addf %111, %120 : vector<4x512xf32>
    %cst_48 = arith.constant 0.000000e+00 : f32
    %122 = vector.broadcast %cst_48 : f32 to vector<4x512xf32>
    %123 = arith.maximumf %120, %122 : vector<4x512xf32>
    %c1_49 = arith.constant 1 : index
    %c0_50 = arith.constant 0 : index
    %c0_51 = arith.constant 0 : index
    %124 = vector.load %arg5[%c1_49, %c0_50, %c0_51] : memref<9x8x4xf32, #tpu.memory_space<vmem>>, vector<1x8x4xf32>
    %125 = vector.shape_cast %124 : vector<1x8x4xf32> to vector<8x4xf32>
    %cst_52 = arith.constant dense<0.000000e+00> : vector<8x512xf32>
    %126 = tpu.matmul %125, %123, %cst_52 {dimension_numbers = #tpu.dot_dimension_numbers<[1], [0], [0], [1], [0, 0, 1, 1], [], []>} : vector<8x4xf32>, vector<4x512xf32>, vector<8x512xf32> -> vector<8x512xf32>
    %127 = arith.addf %116, %126 : vector<8x512xf32>
    %c15_i32_53 = arith.constant 15 : i32
    %128 = tpu.dynamic_rotate %103 by %c15_i32_53 dim 1 : vector<4x512xf32>, i32 -> vector<4x512xf32>
    %129 = vector.extract_strided_slice %0 {offsets = [2, 0], sizes = [1, 512], strides = [1, 1]} : vector<10x512xf32> to vector<1x512xf32>
    %130 = vector.broadcast %129 : vector<1x512xf32> to vector<4x512xf32>
    %131 = arith.mulf %128, %130 : vector<4x512xf32>
    %132 = arith.addf %121, %131 : vector<4x512xf32>
    %cst_54 = arith.constant 0.000000e+00 : f32
    %133 = vector.broadcast %cst_54 : f32 to vector<4x512xf32>
    %134 = arith.maximumf %131, %133 : vector<4x512xf32>
    %c2_55 = arith.constant 2 : index
    %c0_56 = arith.constant 0 : index
    %c0_57 = arith.constant 0 : index
    %135 = vector.load %arg5[%c2_55, %c0_56, %c0_57] : memref<9x8x4xf32, #tpu.memory_space<vmem>>, vector<1x8x4xf32>
    %136 = vector.shape_cast %135 : vector<1x8x4xf32> to vector<8x4xf32>
    %cst_58 = arith.constant dense<0.000000e+00> : vector<8x512xf32>
    %137 = tpu.matmul %136, %134, %cst_58 {dimension_numbers = #tpu.dot_dimension_numbers<[1], [0], [0], [1], [0, 0, 1, 1], [], []>} : vector<8x4xf32>, vector<4x512xf32>, vector<8x512xf32> -> vector<8x512xf32>
    %138 = arith.addf %127, %137 : vector<8x512xf32>
    %c1_i32_59 = arith.constant 1 : i32
    %139 = tpu.dynamic_rotate %103 by %c1_i32_59 dim 1 : vector<4x512xf32>, i32 -> vector<4x512xf32>
    %140 = vector.extract_strided_slice %0 {offsets = [3, 0], sizes = [1, 512], strides = [1, 1]} : vector<10x512xf32> to vector<1x512xf32>
    %141 = vector.broadcast %140 : vector<1x512xf32> to vector<4x512xf32>
    %142 = arith.mulf %139, %141 : vector<4x512xf32>
    %143 = arith.addf %132, %142 : vector<4x512xf32>
    %cst_60 = arith.constant 0.000000e+00 : f32
    %144 = vector.broadcast %cst_60 : f32 to vector<4x512xf32>
    %145 = arith.maximumf %142, %144 : vector<4x512xf32>
    %c3_61 = arith.constant 3 : index
    %c0_62 = arith.constant 0 : index
    %c0_63 = arith.constant 0 : index
    %146 = vector.load %arg5[%c3_61, %c0_62, %c0_63] : memref<9x8x4xf32, #tpu.memory_space<vmem>>, vector<1x8x4xf32>
    %147 = vector.shape_cast %146 : vector<1x8x4xf32> to vector<8x4xf32>
    %cst_64 = arith.constant dense<0.000000e+00> : vector<8x512xf32>
    %148 = tpu.matmul %147, %145, %cst_64 {dimension_numbers = #tpu.dot_dimension_numbers<[1], [0], [0], [1], [0, 0, 1, 1], [], []>} : vector<8x4xf32>, vector<4x512xf32>, vector<8x512xf32> -> vector<8x512xf32>
    %149 = arith.addf %138, %148 : vector<8x512xf32>
    %150 = arith.addf %143, %103 : vector<4x512xf32>
    %cst_65 = arith.constant 0.000000e+00 : f32
    %151 = vector.broadcast %cst_65 : f32 to vector<4x512xf32>
    %152 = arith.maximumf %103, %151 : vector<4x512xf32>
    %c4_66 = arith.constant 4 : index
    %c0_67 = arith.constant 0 : index
    %c0_68 = arith.constant 0 : index
    %153 = vector.load %arg5[%c4_66, %c0_67, %c0_68] : memref<9x8x4xf32, #tpu.memory_space<vmem>>, vector<1x8x4xf32>
    %154 = vector.shape_cast %153 : vector<1x8x4xf32> to vector<8x4xf32>
    %cst_69 = arith.constant dense<0.000000e+00> : vector<8x512xf32>
    %155 = tpu.matmul %154, %152, %cst_69 {dimension_numbers = #tpu.dot_dimension_numbers<[1], [0], [0], [1], [0, 0, 1, 1], [], []>} : vector<8x4xf32>, vector<4x512xf32>, vector<8x512xf32> -> vector<8x512xf32>
    %156 = arith.addf %149, %155 : vector<8x512xf32>
    %c511_i32_70 = arith.constant 511 : i32
    %157 = tpu.dynamic_rotate %103 by %c511_i32_70 dim 1 : vector<4x512xf32>, i32 -> vector<4x512xf32>
    %158 = vector.extract_strided_slice %0 {offsets = [5, 0], sizes = [1, 512], strides = [1, 1]} : vector<10x512xf32> to vector<1x512xf32>
    %159 = vector.broadcast %158 : vector<1x512xf32> to vector<4x512xf32>
    %160 = arith.mulf %157, %159 : vector<4x512xf32>
    %161 = arith.addf %150, %160 : vector<4x512xf32>
    %cst_71 = arith.constant 0.000000e+00 : f32
    %162 = vector.broadcast %cst_71 : f32 to vector<4x512xf32>
    %163 = arith.maximumf %160, %162 : vector<4x512xf32>
    %c5_72 = arith.constant 5 : index
    %c0_73 = arith.constant 0 : index
    %c0_74 = arith.constant 0 : index
    %164 = vector.load %arg5[%c5_72, %c0_73, %c0_74] : memref<9x8x4xf32, #tpu.memory_space<vmem>>, vector<1x8x4xf32>
    %165 = vector.shape_cast %164 : vector<1x8x4xf32> to vector<8x4xf32>
    %cst_75 = arith.constant dense<0.000000e+00> : vector<8x512xf32>
    %166 = tpu.matmul %165, %163, %cst_75 {dimension_numbers = #tpu.dot_dimension_numbers<[1], [0], [0], [1], [0, 0, 1, 1], [], []>} : vector<8x4xf32>, vector<4x512xf32>, vector<8x512xf32> -> vector<8x512xf32>
    %167 = arith.addf %156, %166 : vector<8x512xf32>
    %c497_i32_76 = arith.constant 497 : i32
    %168 = tpu.dynamic_rotate %103 by %c497_i32_76 dim 1 : vector<4x512xf32>, i32 -> vector<4x512xf32>
    %169 = vector.extract_strided_slice %0 {offsets = [6, 0], sizes = [1, 512], strides = [1, 1]} : vector<10x512xf32> to vector<1x512xf32>
    %170 = vector.broadcast %169 : vector<1x512xf32> to vector<4x512xf32>
    %171 = arith.mulf %168, %170 : vector<4x512xf32>
    %172 = arith.addf %161, %171 : vector<4x512xf32>
    %cst_77 = arith.constant 0.000000e+00 : f32
    %173 = vector.broadcast %cst_77 : f32 to vector<4x512xf32>
    %174 = arith.maximumf %171, %173 : vector<4x512xf32>
    %c6_78 = arith.constant 6 : index
    %c0_79 = arith.constant 0 : index
    %c0_80 = arith.constant 0 : index
    %175 = vector.load %arg5[%c6_78, %c0_79, %c0_80] : memref<9x8x4xf32, #tpu.memory_space<vmem>>, vector<1x8x4xf32>
    %176 = vector.shape_cast %175 : vector<1x8x4xf32> to vector<8x4xf32>
    %cst_81 = arith.constant dense<0.000000e+00> : vector<8x512xf32>
    %177 = tpu.matmul %176, %174, %cst_81 {dimension_numbers = #tpu.dot_dimension_numbers<[1], [0], [0], [1], [0, 0, 1, 1], [], []>} : vector<8x4xf32>, vector<4x512xf32>, vector<8x512xf32> -> vector<8x512xf32>
    %178 = arith.addf %167, %177 : vector<8x512xf32>
    %c496_i32_82 = arith.constant 496 : i32
    %179 = tpu.dynamic_rotate %103 by %c496_i32_82 dim 1 : vector<4x512xf32>, i32 -> vector<4x512xf32>
    %180 = vector.extract_strided_slice %0 {offsets = [7, 0], sizes = [1, 512], strides = [1, 1]} : vector<10x512xf32> to vector<1x512xf32>
    %181 = vector.broadcast %180 : vector<1x512xf32> to vector<4x512xf32>
    %182 = arith.mulf %179, %181 : vector<4x512xf32>
    %183 = arith.addf %172, %182 : vector<4x512xf32>
    %cst_83 = arith.constant 0.000000e+00 : f32
    %184 = vector.broadcast %cst_83 : f32 to vector<4x512xf32>
    %185 = arith.maximumf %182, %184 : vector<4x512xf32>
    %c7_84 = arith.constant 7 : index
    %c0_85 = arith.constant 0 : index
    %c0_86 = arith.constant 0 : index
    %186 = vector.load %arg5[%c7_84, %c0_85, %c0_86] : memref<9x8x4xf32, #tpu.memory_space<vmem>>, vector<1x8x4xf32>
    %187 = vector.shape_cast %186 : vector<1x8x4xf32> to vector<8x4xf32>
    %cst_87 = arith.constant dense<0.000000e+00> : vector<8x512xf32>
    %188 = tpu.matmul %187, %185, %cst_87 {dimension_numbers = #tpu.dot_dimension_numbers<[1], [0], [0], [1], [0, 0, 1, 1], [], []>} : vector<8x4xf32>, vector<4x512xf32>, vector<8x512xf32> -> vector<8x512xf32>
    %189 = arith.addf %178, %188 : vector<8x512xf32>
    %c495_i32_88 = arith.constant 495 : i32
    %190 = tpu.dynamic_rotate %103 by %c495_i32_88 dim 1 : vector<4x512xf32>, i32 -> vector<4x512xf32>
    %191 = vector.extract_strided_slice %0 {offsets = [8, 0], sizes = [1, 512], strides = [1, 1]} : vector<10x512xf32> to vector<1x512xf32>
    %192 = vector.broadcast %191 : vector<1x512xf32> to vector<4x512xf32>
    %193 = arith.mulf %190, %192 : vector<4x512xf32>
    %194 = arith.addf %183, %193 : vector<4x512xf32>
    %cst_89 = arith.constant 0.000000e+00 : f32
    %195 = vector.broadcast %cst_89 : f32 to vector<4x512xf32>
    %196 = arith.maximumf %193, %195 : vector<4x512xf32>
    %c8_90 = arith.constant 8 : index
    %c0_91 = arith.constant 0 : index
    %c0_92 = arith.constant 0 : index
    %197 = vector.load %arg5[%c8_90, %c0_91, %c0_92] : memref<9x8x4xf32, #tpu.memory_space<vmem>>, vector<1x8x4xf32>
    %198 = vector.shape_cast %197 : vector<1x8x4xf32> to vector<8x4xf32>
    %cst_93 = arith.constant dense<0.000000e+00> : vector<8x512xf32>
    %199 = tpu.matmul %198, %196, %cst_93 {dimension_numbers = #tpu.dot_dimension_numbers<[1], [0], [0], [1], [0, 0, 1, 1], [], []>} : vector<8x4xf32>, vector<4x512xf32>, vector<8x512xf32> -> vector<8x512xf32>
    %200 = arith.addf %189, %199 : vector<8x512xf32>
    %c0_94 = arith.constant 0 : index
    %c0_95 = arith.constant 0 : index
    %201 = vector.load %arg6[%c0_94, %c0_95] : memref<8x1xf32, #tpu.memory_space<vmem>>, vector<8x1xf32>
    %202 = vector.broadcast %201 : vector<8x1xf32> to vector<8x512xf32>
    %203 = arith.addf %200, %202 : vector<8x512xf32>
    %204 = vector.broadcast %1 : vector<1x512xf32> to vector<4x512xf32>
    %205 = arith.mulf %194, %204 : vector<4x512xf32>
    %206 = arith.addf %103, %205 : vector<4x512xf32>
    %207 = vector.extract_strided_slice %203 {offsets = [0, 0], sizes = [4, 512], strides = [1, 1]} : vector<8x512xf32> to vector<4x512xf32>
    %208 = arith.addf %206, %207 : vector<4x512xf32>
    %209 = vector.extract_strided_slice %203 {offsets = [4, 0], sizes = [4, 512], strides = [1, 1]} : vector<8x512xf32> to vector<4x512xf32>
    %210 = arith.addf %206, %209 : vector<4x512xf32>
    %211 = arith.addf %105, %208 : vector<4x512xf32>
    %212 = arith.addf %107, %210 : vector<4x512xf32>
    %c17_i32_96 = arith.constant 17 : i32
    %213 = tpu.dynamic_rotate %211 by %c17_i32_96 dim 1 : vector<4x512xf32>, i32 -> vector<4x512xf32>
    %214 = vector.extract_strided_slice %0 {offsets = [0, 0], sizes = [1, 512], strides = [1, 1]} : vector<10x512xf32> to vector<1x512xf32>
    %215 = vector.broadcast %214 : vector<1x512xf32> to vector<4x512xf32>
    %216 = arith.mulf %213, %215 : vector<4x512xf32>
    %cst_97 = arith.constant 0.000000e+00 : f32
    %217 = vector.broadcast %cst_97 : f32 to vector<4x512xf32>
    %218 = arith.maximumf %216, %217 : vector<4x512xf32>
    %c0_98 = arith.constant 0 : index
    %c0_99 = arith.constant 0 : index
    %c0_100 = arith.constant 0 : index
    %219 = vector.load %arg7[%c0_98, %c0_99, %c0_100] : memref<9x4x4xf32, #tpu.memory_space<vmem>>, vector<1x4x4xf32>
    %220 = vector.shape_cast %219 : vector<1x4x4xf32> to vector<4x4xf32>
    %cst_101 = arith.constant dense<0.000000e+00> : vector<4x512xf32>
    %221 = tpu.matmul %220, %218, %cst_101 {dimension_numbers = #tpu.dot_dimension_numbers<[1], [0], [0], [1], [0, 0, 1, 1], [], []>} : vector<4x4xf32>, vector<4x512xf32>, vector<4x512xf32> -> vector<4x512xf32>
    %c16_i32_102 = arith.constant 16 : i32
    %222 = tpu.dynamic_rotate %211 by %c16_i32_102 dim 1 : vector<4x512xf32>, i32 -> vector<4x512xf32>
    %223 = vector.extract_strided_slice %0 {offsets = [1, 0], sizes = [1, 512], strides = [1, 1]} : vector<10x512xf32> to vector<1x512xf32>
    %224 = vector.broadcast %223 : vector<1x512xf32> to vector<4x512xf32>
    %225 = arith.mulf %222, %224 : vector<4x512xf32>
    %226 = arith.addf %216, %225 : vector<4x512xf32>
    %cst_103 = arith.constant 0.000000e+00 : f32
    %227 = vector.broadcast %cst_103 : f32 to vector<4x512xf32>
    %228 = arith.maximumf %225, %227 : vector<4x512xf32>
    %c1_104 = arith.constant 1 : index
    %c0_105 = arith.constant 0 : index
    %c0_106 = arith.constant 0 : index
    %229 = vector.load %arg7[%c1_104, %c0_105, %c0_106] : memref<9x4x4xf32, #tpu.memory_space<vmem>>, vector<1x4x4xf32>
    %230 = vector.shape_cast %229 : vector<1x4x4xf32> to vector<4x4xf32>
    %cst_107 = arith.constant dense<0.000000e+00> : vector<4x512xf32>
    %231 = tpu.matmul %230, %228, %cst_107 {dimension_numbers = #tpu.dot_dimension_numbers<[1], [0], [0], [1], [0, 0, 1, 1], [], []>} : vector<4x4xf32>, vector<4x512xf32>, vector<4x512xf32> -> vector<4x512xf32>
    %232 = arith.addf %221, %231 : vector<4x512xf32>
    %c15_i32_108 = arith.constant 15 : i32
    %233 = tpu.dynamic_rotate %211 by %c15_i32_108 dim 1 : vector<4x512xf32>, i32 -> vector<4x512xf32>
    %234 = vector.extract_strided_slice %0 {offsets = [2, 0], sizes = [1, 512], strides = [1, 1]} : vector<10x512xf32> to vector<1x512xf32>
    %235 = vector.broadcast %234 : vector<1x512xf32> to vector<4x512xf32>
    %236 = arith.mulf %233, %235 : vector<4x512xf32>
    %237 = arith.addf %226, %236 : vector<4x512xf32>
    %cst_109 = arith.constant 0.000000e+00 : f32
    %238 = vector.broadcast %cst_109 : f32 to vector<4x512xf32>
    %239 = arith.maximumf %236, %238 : vector<4x512xf32>
    %c2_110 = arith.constant 2 : index
    %c0_111 = arith.constant 0 : index
    %c0_112 = arith.constant 0 : index
    %240 = vector.load %arg7[%c2_110, %c0_111, %c0_112] : memref<9x4x4xf32, #tpu.memory_space<vmem>>, vector<1x4x4xf32>
    %241 = vector.shape_cast %240 : vector<1x4x4xf32> to vector<4x4xf32>
    %cst_113 = arith.constant dense<0.000000e+00> : vector<4x512xf32>
    %242 = tpu.matmul %241, %239, %cst_113 {dimension_numbers = #tpu.dot_dimension_numbers<[1], [0], [0], [1], [0, 0, 1, 1], [], []>} : vector<4x4xf32>, vector<4x512xf32>, vector<4x512xf32> -> vector<4x512xf32>
    %243 = arith.addf %232, %242 : vector<4x512xf32>
    %c1_i32_114 = arith.constant 1 : i32
    %244 = tpu.dynamic_rotate %211 by %c1_i32_114 dim 1 : vector<4x512xf32>, i32 -> vector<4x512xf32>
    %245 = vector.extract_strided_slice %0 {offsets = [3, 0], sizes = [1, 512], strides = [1, 1]} : vector<10x512xf32> to vector<1x512xf32>
    %246 = vector.broadcast %245 : vector<1x512xf32> to vector<4x512xf32>
    %247 = arith.mulf %244, %246 : vector<4x512xf32>
    %248 = arith.addf %237, %247 : vector<4x512xf32>
    %cst_115 = arith.constant 0.000000e+00 : f32
    %249 = vector.broadcast %cst_115 : f32 to vector<4x512xf32>
    %250 = arith.maximumf %247, %249 : vector<4x512xf32>
    %c3_116 = arith.constant 3 : index
    %c0_117 = arith.constant 0 : index
    %c0_118 = arith.constant 0 : index
    %251 = vector.load %arg7[%c3_116, %c0_117, %c0_118] : memref<9x4x4xf32, #tpu.memory_space<vmem>>, vector<1x4x4xf32>
    %252 = vector.shape_cast %251 : vector<1x4x4xf32> to vector<4x4xf32>
    %cst_119 = arith.constant dense<0.000000e+00> : vector<4x512xf32>
    %253 = tpu.matmul %252, %250, %cst_119 {dimension_numbers = #tpu.dot_dimension_numbers<[1], [0], [0], [1], [0, 0, 1, 1], [], []>} : vector<4x4xf32>, vector<4x512xf32>, vector<4x512xf32> -> vector<4x512xf32>
    %254 = arith.addf %243, %253 : vector<4x512xf32>
    %255 = arith.addf %248, %211 : vector<4x512xf32>
    %cst_120 = arith.constant 0.000000e+00 : f32
    %256 = vector.broadcast %cst_120 : f32 to vector<4x512xf32>
    %257 = arith.maximumf %211, %256 : vector<4x512xf32>
    %c4_121 = arith.constant 4 : index
    %c0_122 = arith.constant 0 : index
    %c0_123 = arith.constant 0 : index
    %258 = vector.load %arg7[%c4_121, %c0_122, %c0_123] : memref<9x4x4xf32, #tpu.memory_space<vmem>>, vector<1x4x4xf32>
    %259 = vector.shape_cast %258 : vector<1x4x4xf32> to vector<4x4xf32>
    %cst_124 = arith.constant dense<0.000000e+00> : vector<4x512xf32>
    %260 = tpu.matmul %259, %257, %cst_124 {dimension_numbers = #tpu.dot_dimension_numbers<[1], [0], [0], [1], [0, 0, 1, 1], [], []>} : vector<4x4xf32>, vector<4x512xf32>, vector<4x512xf32> -> vector<4x512xf32>
    %261 = arith.addf %254, %260 : vector<4x512xf32>
    %c511_i32_125 = arith.constant 511 : i32
    %262 = tpu.dynamic_rotate %211 by %c511_i32_125 dim 1 : vector<4x512xf32>, i32 -> vector<4x512xf32>
    %263 = vector.extract_strided_slice %0 {offsets = [5, 0], sizes = [1, 512], strides = [1, 1]} : vector<10x512xf32> to vector<1x512xf32>
    %264 = vector.broadcast %263 : vector<1x512xf32> to vector<4x512xf32>
    %265 = arith.mulf %262, %264 : vector<4x512xf32>
    %266 = arith.addf %255, %265 : vector<4x512xf32>
    %cst_126 = arith.constant 0.000000e+00 : f32
    %267 = vector.broadcast %cst_126 : f32 to vector<4x512xf32>
    %268 = arith.maximumf %265, %267 : vector<4x512xf32>
    %c5_127 = arith.constant 5 : index
    %c0_128 = arith.constant 0 : index
    %c0_129 = arith.constant 0 : index
    %269 = vector.load %arg7[%c5_127, %c0_128, %c0_129] : memref<9x4x4xf32, #tpu.memory_space<vmem>>, vector<1x4x4xf32>
    %270 = vector.shape_cast %269 : vector<1x4x4xf32> to vector<4x4xf32>
    %cst_130 = arith.constant dense<0.000000e+00> : vector<4x512xf32>
    %271 = tpu.matmul %270, %268, %cst_130 {dimension_numbers = #tpu.dot_dimension_numbers<[1], [0], [0], [1], [0, 0, 1, 1], [], []>} : vector<4x4xf32>, vector<4x512xf32>, vector<4x512xf32> -> vector<4x512xf32>
    %272 = arith.addf %261, %271 : vector<4x512xf32>
    %c497_i32_131 = arith.constant 497 : i32
    %273 = tpu.dynamic_rotate %211 by %c497_i32_131 dim 1 : vector<4x512xf32>, i32 -> vector<4x512xf32>
    %274 = vector.extract_strided_slice %0 {offsets = [6, 0], sizes = [1, 512], strides = [1, 1]} : vector<10x512xf32> to vector<1x512xf32>
    %275 = vector.broadcast %274 : vector<1x512xf32> to vector<4x512xf32>
    %276 = arith.mulf %273, %275 : vector<4x512xf32>
    %277 = arith.addf %266, %276 : vector<4x512xf32>
    %cst_132 = arith.constant 0.000000e+00 : f32
    %278 = vector.broadcast %cst_132 : f32 to vector<4x512xf32>
    %279 = arith.maximumf %276, %278 : vector<4x512xf32>
    %c6_133 = arith.constant 6 : index
    %c0_134 = arith.constant 0 : index
    %c0_135 = arith.constant 0 : index
    %280 = vector.load %arg7[%c6_133, %c0_134, %c0_135] : memref<9x4x4xf32, #tpu.memory_space<vmem>>, vector<1x4x4xf32>
    %281 = vector.shape_cast %280 : vector<1x4x4xf32> to vector<4x4xf32>
    %cst_136 = arith.constant dense<0.000000e+00> : vector<4x512xf32>
    %282 = tpu.matmul %281, %279, %cst_136 {dimension_numbers = #tpu.dot_dimension_numbers<[1], [0], [0], [1], [0, 0, 1, 1], [], []>} : vector<4x4xf32>, vector<4x512xf32>, vector<4x512xf32> -> vector<4x512xf32>
    %283 = arith.addf %272, %282 : vector<4x512xf32>
    %c496_i32_137 = arith.constant 496 : i32
    %284 = tpu.dynamic_rotate %211 by %c496_i32_137 dim 1 : vector<4x512xf32>, i32 -> vector<4x512xf32>
    %285 = vector.extract_strided_slice %0 {offsets = [7, 0], sizes = [1, 512], strides = [1, 1]} : vector<10x512xf32> to vector<1x512xf32>
    %286 = vector.broadcast %285 : vector<1x512xf32> to vector<4x512xf32>
    %287 = arith.mulf %284, %286 : vector<4x512xf32>
    %288 = arith.addf %277, %287 : vector<4x512xf32>
    %cst_138 = arith.constant 0.000000e+00 : f32
    %289 = vector.broadcast %cst_138 : f32 to vector<4x512xf32>
    %290 = arith.maximumf %287, %289 : vector<4x512xf32>
    %c7_139 = arith.constant 7 : index
    %c0_140 = arith.constant 0 : index
    %c0_141 = arith.constant 0 : index
    %291 = vector.load %arg7[%c7_139, %c0_140, %c0_141] : memref<9x4x4xf32, #tpu.memory_space<vmem>>, vector<1x4x4xf32>
    %292 = vector.shape_cast %291 : vector<1x4x4xf32> to vector<4x4xf32>
    %cst_142 = arith.constant dense<0.000000e+00> : vector<4x512xf32>
    %293 = tpu.matmul %292, %290, %cst_142 {dimension_numbers = #tpu.dot_dimension_numbers<[1], [0], [0], [1], [0, 0, 1, 1], [], []>} : vector<4x4xf32>, vector<4x512xf32>, vector<4x512xf32> -> vector<4x512xf32>
    %294 = arith.addf %283, %293 : vector<4x512xf32>
    %c495_i32_143 = arith.constant 495 : i32
    %295 = tpu.dynamic_rotate %211 by %c495_i32_143 dim 1 : vector<4x512xf32>, i32 -> vector<4x512xf32>
    %296 = vector.extract_strided_slice %0 {offsets = [8, 0], sizes = [1, 512], strides = [1, 1]} : vector<10x512xf32> to vector<1x512xf32>
    %297 = vector.broadcast %296 : vector<1x512xf32> to vector<4x512xf32>
    %298 = arith.mulf %295, %297 : vector<4x512xf32>
    %299 = arith.addf %288, %298 : vector<4x512xf32>
    %cst_144 = arith.constant 0.000000e+00 : f32
    %300 = vector.broadcast %cst_144 : f32 to vector<4x512xf32>
    %301 = arith.maximumf %298, %300 : vector<4x512xf32>
    %c8_145 = arith.constant 8 : index
    %c0_146 = arith.constant 0 : index
    %c0_147 = arith.constant 0 : index
    %302 = vector.load %arg7[%c8_145, %c0_146, %c0_147] : memref<9x4x4xf32, #tpu.memory_space<vmem>>, vector<1x4x4xf32>
    %303 = vector.shape_cast %302 : vector<1x4x4xf32> to vector<4x4xf32>
    %cst_148 = arith.constant dense<0.000000e+00> : vector<4x512xf32>
    %304 = tpu.matmul %303, %301, %cst_148 {dimension_numbers = #tpu.dot_dimension_numbers<[1], [0], [0], [1], [0, 0, 1, 1], [], []>} : vector<4x4xf32>, vector<4x512xf32>, vector<4x512xf32> -> vector<4x512xf32>
    %305 = arith.addf %294, %304 : vector<4x512xf32>
    %c0_149 = arith.constant 0 : index
    %c0_150 = arith.constant 0 : index
    %306 = vector.load %arg8[%c0_149, %c0_150] : memref<4x1xf32, #tpu.memory_space<vmem>>, vector<4x1xf32>
    %307 = vector.broadcast %306 : vector<4x1xf32> to vector<4x512xf32>
    %308 = arith.addf %305, %307 : vector<4x512xf32>
    %309 = vector.broadcast %1 : vector<1x512xf32> to vector<4x512xf32>
    %310 = arith.mulf %299, %309 : vector<4x512xf32>
    %311 = arith.addf %211, %310 : vector<4x512xf32>
    %312 = arith.addf %311, %308 : vector<4x512xf32>
    %313 = arith.addf %212, %312 : vector<4x512xf32>
    %c0_151 = arith.constant 0 : index
    %c0_152 = arith.constant 0 : index
    %314 = vector.load %arg9[%c0_151, %c0_152] : memref<4x512xf32, #tpu.memory_space<vmem>>, vector<4x512xf32>
    tpu.vector_store %arg9[%c0_151, %c0_152], %313 {strides = array<i32>} : memref<4x512xf32, #tpu.memory_space<vmem>>, vector<4x512xf32>,
    return
  }
  func.func @transform_0(%arg0: i32) -> (i32, i32) {
    %c0_i32 = arith.constant 0 : i32
    %c0_i32_0 = arith.constant 0 : i32
    %c0_i32_1 = arith.constant 0 : i32
    return %c0_i32, %c0_i32_0 : i32, i32
  }
  func.func @transform_1(%arg0: i32) -> (i32, i32) {
    %c0_i32 = arith.constant 0 : i32
    %c0_i32_0 = arith.constant 0 : i32
    %c0_i32_1 = arith.constant 0 : i32
    return %c0_i32, %c0_i32_0 : i32, i32
  }
  func.func @transform_2(%arg0: i32) -> (i32, i32, i32) {
    %c0_i32 = arith.constant 0 : i32
    %c0_i32_0 = arith.constant 0 : i32
    %c0_i32_1 = arith.constant 0 : i32
    %c0_i32_2 = arith.constant 0 : i32
    return %c0_i32, %c0_i32_0, %c0_i32_1 : i32, i32, i32
  }
  func.func @transform_3(%arg0: i32) -> (i32, i32) {
    %c0_i32 = arith.constant 0 : i32
    %c0_i32_0 = arith.constant 0 : i32
    %c0_i32_1 = arith.constant 0 : i32
    return %c0_i32, %c0_i32_0 : i32, i32
  }
  func.func @transform_4(%arg0: i32) -> (i32, i32, i32) {
    %c0_i32 = arith.constant 0 : i32
    %c0_i32_0 = arith.constant 0 : i32
    %c0_i32_1 = arith.constant 0 : i32
    %c0_i32_2 = arith.constant 0 : i32
    return %c0_i32, %c0_i32_0, %c0_i32_1 : i32, i32, i32
  }
  func.func @transform_5(%arg0: i32) -> (i32, i32) {
    %c0_i32 = arith.constant 0 : i32
    %c0_i32_0 = arith.constant 0 : i32
    %c0_i32_1 = arith.constant 0 : i32
    return %c0_i32, %c0_i32_0 : i32, i32
  }
  func.func @transform_6(%arg0: i32) -> (i32, i32, i32) {
    %c0_i32 = arith.constant 0 : i32
    %c0_i32_0 = arith.constant 0 : i32
    %c0_i32_1 = arith.constant 0 : i32
    %c0_i32_2 = arith.constant 0 : i32
    return %c0_i32, %c0_i32_0, %c0_i32_1 : i32, i32, i32
  }
  func.func @transform_7(%arg0: i32) -> (i32, i32) {
    %c0_i32 = arith.constant 0 : i32
    %c0_i32_0 = arith.constant 0 : i32
    %c0_i32_1 = arith.constant 0 : i32
    return %c0_i32, %c0_i32_0 : i32, i32
  }
  func.func @transform_8(%arg0: i32) -> (i32, i32) {
    %c0_i32 = arith.constant 0 : i32
    %c0_i32_0 = arith.constant 0 : i32
    %c0_i32_1 = arith.constant 0 : i32
    return %c0_i32, %c0_i32_0 : i32, i32
  }
}

</mosaic_0001>

<llo_original>
// kernel: search_cell_pallas.1
$region0: #{search_cell_pallas.1}
  #allocation0 [shape = 'u32[]', space=smem, size = 0x4, offset = 0x4, fixed_abs, tag = 'smem constant byte address 0x4 - core index']
  #allocation1 [shape = 'u32[144,128]{1,0:T(1,128)}', space=vmem, size = 0x12000, scoped, tag = 'internal scratch']
  %s0 = inlined_call_operand.vmem [shape: f32[4,512], index: 0, kind: input, shape index: {}]
  %s1 = inlined_call_operand.vmem [shape: f32[10,512], index: 1, kind: input, shape index: {}]
  %s2 = inlined_call_operand.vmem [shape: f32[9,12,4], index: 2, kind: input, shape index: {}]
  %s3 = inlined_call_operand.vmem [shape: f32[12,1], index: 3, kind: input, shape index: {}]
  %s4 = inlined_call_operand.vmem [shape: f32[9,8,4], index: 4, kind: input, shape index: {}]
  %s5 = inlined_call_operand.vmem [shape: f32[8,1], index: 5, kind: input, shape index: {}]
  %s6 = inlined_call_operand.vmem [shape: f32[9,4,4], index: 6, kind: input, shape index: {}]
  %s7 = inlined_call_operand.vmem [shape: f32[4,1], index: 7, kind: input, shape index: {}]
  %s8 = inlined_call_operand.vmem [shape: f32[4,512], index: 8, kind: output, shape index: {}]
  %s9 = sld [smem:[#allocation0]]
  $region42: #{search_cell_pallas.1} parent=0
    _
  %s11 = ssub.s32 1, %s9
  %s12 = scalar_select 0, %s11, %s9
  // Predicated region
  $region2: #{search_cell_pallas.1} parent=0 // pred_check
    _
  $region3: #{search_cell_pallas.1} parent=0 // pred_check_branch
    %14 = sbr.rel (0) target = $region5
  $region4: #{search_cell_pallas.1} parent=0 // pred_region
    _
  $region5: #{search_cell_pallas.1} parent=0 // pred_fallthru
    _
  // Predicated region
  $region6: #{search_cell_pallas.1} parent=0 // pred_check
    _
  $region7: #{search_cell_pallas.1} parent=0 // pred_check_branch
    %16 = sbr.rel (0) target = $region9
  $region8: #{search_cell_pallas.1} parent=0 // pred_region
    _
  $region9: #{search_cell_pallas.1} parent=0 // pred_fallthru
    _
  // Predicated region
  $region10: #{search_cell_pallas.1} parent=0 // pred_check
    _
  $region11: #{search_cell_pallas.1} parent=0 // pred_check_branch
    %18 = sbr.rel (0) target = $region13
  $region12: #{search_cell_pallas.1} parent=0 // pred_region
    _
  $region13: #{search_cell_pallas.1} parent=0 // pred_fallthru
    _
  // Predicated region
  $region14: #{search_cell_pallas.1} parent=0 // pred_check
    _
  $region15: #{search_cell_pallas.1} parent=0 // pred_check_branch
    %20 = sbr.rel (0) target = $region17
  $region16: #{search_cell_pallas.1} parent=0 // pred_region
    _
  $region17: #{search_cell_pallas.1} parent=0 // pred_fallthru
    _
  // Predicated region
  $region18: #{search_cell_pallas.1} parent=0 // pred_check
    _
  $region19: #{search_cell_pallas.1} parent=0 // pred_check_branch
    %22 = sbr.rel (0) target = $region21
  $region20: #{search_cell_pallas.1} parent=0 // pred_region
    _
  $region21: #{search_cell_pallas.1} parent=0 // pred_fallthru
    _
  // Predicated region
  $region22: #{search_cell_pallas.1} parent=0 // pred_check
    _
  $region23: #{search_cell_pallas.1} parent=0 // pred_check_branch
    %24 = sbr.rel (0) target = $region25
  $region24: #{search_cell_pallas.1} parent=0 // pred_region
    _
  $region25: #{search_cell_pallas.1} parent=0 // pred_fallthru
    _
  // Predicated region
  $region26: #{search_cell_pallas.1} parent=0 // pred_check
    _
  $region27: #{search_cell_pallas.1} parent=0 // pred_check_branch
    %26 = sbr.rel (0) target = $region29
  $region28: #{search_cell_pallas.1} parent=0 // pred_region
    _
  $region29: #{search_cell_pallas.1} parent=0 // pred_fallthru
    _
  // Predicated region
  $region30: #{search_cell_pallas.1} parent=0 // pred_check
    _
  $region31: #{search_cell_pallas.1} parent=0 // pred_check_branch
    %28 = sbr.rel (0) target = $region33
  $region32: #{search_cell_pallas.1} parent=0 // pred_region
    _
  $region33: #{search_cell_pallas.1} parent=0 // pred_fallthru
    _
  %v29 = vld [vmem:[%s1] sm:$0xff]
  %v30 = vld [vmem:[%s1 + $0x8] sm:$0xff]
  %v31 = vld [vmem:[%s1 + $0x10] sm:$0xff]
  %v32 = vld [vmem:[%s1 + $0x18] sm:$0xff]
  %v33 = vld [vmem:[%s1 + $0x20] sm:$0x3]
  %v34 = vld [vmem:[%s1 + $0x28] sm:$0x3]
  %v35 = vld [vmem:[%s1 + $0x30] sm:$0x3]
  %v36 = vld [vmem:[%s1 + $0x38] sm:$0x3]
  %v37 = vld [vmem:[%s0] sm:$0xff]
  %v38 = vld [vmem:[%s0 + $0x8] sm:$0xff]
  %v41 = vcombine.high %v37, %v37
  %v42 = vcombine.high %v38, %v38
  %45 = vrot.lane.b32.xlu0 %v37, 17
  %v46 = vpop.permute.xlu0 %45
  %47 = vrot.lane.b32.xlu0 %v41, 17
  %v48 = vpop.permute.xlu0 %47
  %49 = vrot.lane.b32.xlu0 %v38, 17
  %v50 = vpop.permute.xlu0 %49
  %51 = vrot.lane.b32.xlu0 %v42, 17
  %v52 = vpop.permute.xlu0 %51
  %v53 = vlaneseq
  %v54 = vand.u32 %v53, 127
  %vm55 = vcmp.lt.s32.totalorder %v54, 17
  %v56 = vsel %vm55, %v50, %v52
  %v57 = vsel %vm55, %v48, %v50
  %v58 = vsel %vm55, %v46, %v48
  %v59 = vsel %vm55, %v52, %v46
  %v60 = vlaneseq
  %v61 = vshrl.u32 %v60, 7
  %v62 = vsub.s32 0, %v61
  %v63 = vrot.slane %v29, %v62
  %v64 = vlaneseq
  %v65 = vshrl.u32 %v64, 7
  %v66 = vsub.s32 0, %v65
  %v67 = vrot.slane %v30, %v66
  %v68 = vlaneseq
  %v69 = vshrl.u32 %v68, 7
  %v70 = vsub.s32 0, %v69
  %v71 = vrot.slane %v31, %v70
  %v72 = vlaneseq
  %v73 = vshrl.u32 %v72, 7
  %v74 = vsub.s32 0, %v73
  %v75 = vrot.slane %v32, %v74
  %v76 = vmul.f32 %v59, %v63
  %v77 = vmul.f32 %v58, %v67
  %v78 = vmul.f32 %v57, %v71
  %v79 = vmul.f32 %v56, %v75
  %v80 = vmax.f32 %v76, 0.0
  %v81 = vmax.f32 %v77, 0.0
  %v82 = vmax.f32 %v78, 0.0
  %v83 = vmax.f32 %v79, 0.0
  %v84 = vld [vmem:[%s2] sm:$0xff]
  %v85 = vld [vmem:[%s2 + $0x8] sm:$0xf]
  %86 = vrot.lane.b32.xlu0 %v37, 16
  %v87 = vpop.permute.xlu0 %86
  %88 = vrot.lane.b32.xlu0 %v41, 16
  %v89 = vpop.permute.xlu0 %88
  %90 = vrot.lane.b32.xlu0 %v38, 16
  %v91 = vpop.permute.xlu0 %90
  %92 = vrot.lane.b32.xlu0 %v42, 16
  %v93 = vpop.permute.xlu0 %92
  %vm94 = vcmp.lt.s32.totalorder %v54, 16
  %v95 = vsel %vm94, %v91, %v93
  %v96 = vsel %vm94, %v89, %v91
  %v97 = vsel %vm94, %v87, %v89
  %v98 = vsel %vm94, %v93, %v87
  %v99 = vlaneseq
  %v100 = vshrl.u32 %v99, 7
  %v101 = vsub.s32 1, %v100
  %v102 = vrot.slane %v29, %v101
  %v103 = vlaneseq
  %v104 = vshrl.u32 %v103, 7
  %v105 = vsub.s32 1, %v104
  %v106 = vrot.slane %v30, %v105
  %v107 = vlaneseq
  %v108 = vshrl.u32 %v107, 7
  %v109 = vsub.s32 1, %v108
  %v110 = vrot.slane %v31, %v109
  %v111 = vlaneseq
  %v112 = vshrl.u32 %v111, 7
  %v113 = vsub.s32 1, %v112
  %v114 = vrot.slane %v32, %v113
  %v115 = vmul.f32 %v98, %v102
  %v116 = vmul.f32 %v97, %v106
  %v117 = vmul.f32 %v96, %v110
  %v118 = vmul.f32 %v95, %v114
  %v119 = vadd.f32 %v76, %v115
  %v120 = vadd.f32 %v77, %v116
  %v121 = vadd.f32 %v78, %v117
  %v122 = vadd.f32 %v79, %v118
  %v123 = vmax.f32 %v115, 0.0
  %v124 = vmax.f32 %v116, 0.0
  %v125 = vmax.f32 %v117, 0.0
  %v126 = vmax.f32 %v118, 0.0
  %s127 = scalar_lea.vmem %s2, 16
  %v128 = vld [vmem:[%s127] sm:$0xff]
  %v129 = vld [vmem:[%s127 + $0x8] sm:$0xf]
  %vm130 = vcmask 31744
  %v132 = vsel %vm130, %v128, 0
  %v135 = vsel %vm130, %v129, 0
  %vm137 = vcmask 1043456
  %v139 = vsel %vm137, %v123, 0
  %v142 = vsel %vm137, %v124, 0
  %v145 = vsel %vm137, %v125, 0
  %v148 = vsel %vm137, %v126, 0
  %150 = vmatprep.subr.mxu0 %v142
  %151 = vmatpush1.msra.mxu0 %v139
  %152 = vmatprep.subr.mxu0 0.0
  %153 = vmatpush1.msra.mxu0 0.0
  %154 = vmatprep.subr.mxu0 0.0
  %155 = vmatpush1.msra.mxu0 0.0
  %156 = vmatprep.subr.mxu0 0.0
  %157 = vmatpush1.msra.mxu0 0.0
  %158 = vmatprep.subr.mxu0 0.0
  %159 = vmatpush1.msra.mxu0 0.0
  %160 = vmatprep.subr.mxu0 0.0
  %161 = vmatpush1.msra.mxu0 0.0
  %162 = vmatprep.subr.mxu0 0.0
  %163 = vmatpush1.msra.mxu0 0.0
  %164 = vmatprep.subr.mxu0 0.0
  %165 = vmatpush1.msra.mxu0 0.0
  %166 = vmatprep.subr.mxu0 0.0
  %167 = vmatpush1.msra.mxu0 0.0
  %168 = vmatprep.subr.mxu0 0.0
  %169 = vmatpush1.msra.mxu0 0.0
  %170 = vmatprep.subr.mxu0 0.0
  %171 = vmatpush1.msra.mxu0 0.0
  %172 = vmatprep.subr.mxu0 0.0
  %173 = vmatpush1.msra.mxu0 0.0
  %174 = vmatprep.subr.mxu0 0.0
  %175 = vmatpush1.msra.mxu0 0.0
  %176 = vmatprep.subr.mxu0 0.0
  %177 = vmatpush1.msra.mxu0 0.0
  %178 = vmatprep.subr.mxu0 0.0
  %179 = vmatpush1.msra.mxu0 0.0
  %180 = vmatprep.subr.mxu0 0.0
  %181 = vmatpush1.msra.mxu0 0.0
  %182 = vmatprep.subr.mxu0 0.0
  %183 = vmatpush1.msra.mxu0 0.0
  %184 = vmatprep.subr.mxu0 0.0
  %185 = vmatpush1.msra.mxu0 0.0
  %186 = vmatprep.subr.mxu0 0.0
  %187 = vmatpush1.msra.mxu0 0.0
  %188 = vmatprep.subr.mxu0 0.0
  %189 = vmatpush1.msra.mxu0 0.0
  %190 = vmatprep.subr.mxu0 0.0
  %191 = vmatpush1.msra.mxu0 0.0
  %192 = vmatprep.subr.mxu0 0.0
  %193 = vmatpush1.msra.mxu0 0.0
  %194 = vmatprep.subr.mxu0 0.0
  %195 = vmatpush1.msra.mxu0 0.0
  %196 = vmatprep.subr.mxu0 0.0
  %197 = vmatpush1.msra.mxu0 0.0
  %198 = vmatprep.subr.mxu0 0.0
  %199 = vmatpush1.msra.mxu0 0.0
  %200 = vmatprep.subr.mxu0 0.0
  %201 = vmatpush1.msra.mxu0 0.0
  %202 = vmatprep.subr.mxu0 0.0
  %203 = vmatpush1.msra.mxu0 0.0
  %204 = vmatprep.subr.mxu0 0.0
  %205 = vmatpush1.msra.mxu0 0.0
  %206 = vmatprep.subr.mxu0 0.0
  %207 = vmatpush1.msra.mxu0 0.0
  %208 = vmatprep.subr.mxu0 0.0
  %209 = vmatpush1.msra.mxu0 0.0
  %210 = vmatprep.subr.mxu0 0.0
  %211 = vmatpush1.msra.mxu0 0.0
  %212 = vmatprep.subr.mxu0 0.0
  %213 = vmatpush1.msra.mxu0 0.0
  %214 = vmatprep.mubr.f32.mxu0 0.0
  %215 = vmatmul.mubr.f32.gmra.mrb[0].mxu0 %v132
  %v216 = vpop.f32.mrb[0].mxu0
  %v217 = vadd.f32 0.0, %v216
  %v218 = vpop.f32.mrb[0].mxu0
  %v219 = vadd.f32 0.0, %v218
  %220 = vmatprep.mubr.f32.mxu0 0.0
  %221 = vmatmul.mubr.f32.gmra.mrb[0].mxu0 %v135
  %v222 = vpop.f32.mrb[0].mxu0
  %v223 = vadd.f32 0.0, %v222
  %v224 = vpop.f32.mrb[0].mxu0
  %v225 = vadd.f32 0.0, %v224
  %226 = vdwg.mxu0
  %227 = vmatprep.subr.mxu0 %v148
  %228 = vmatpush1.msra.mxu0 %v145
  %229 = vmatprep.subr.mxu0 0.0
  %230 = vmatpush1.msra.mxu0 0.0
  %231 = vmatprep.subr.mxu0 0.0
  %232 = vmatpush1.msra.mxu0 0.0
  %233 = vmatprep.subr.mxu0 0.0
  %234 = vmatpush1.msra.mxu0 0.0
  %235 = vmatprep.subr.mxu0 0.0
  %236 = vmatpush1.msra.mxu0 0.0
  %237 = vmatprep.subr.mxu0 0.0
  %238 = vmatpush1.msra.mxu0 0.0
  %239 = vmatprep.subr.mxu0 0.0
  %240 = vmatpush1.msra.mxu0 0.0
  %241 = vmatprep.subr.mxu0 0.0
  %242 = vmatpush1.msra.mxu0 0.0
  %243 = vmatprep.subr.mxu0 0.0
  %244 = vmatpush1.msra.mxu0 0.0
  %245 = vmatprep.subr.mxu0 0.0
  %246 = vmatpush1.msra.mxu0 0.0
  %247 = vmatprep.subr.mxu0 0.0
  %248 = vmatpush1.msra.mxu0 0.0
  %249 = vmatprep.subr.mxu0 0.0
  %250 = vmatpush1.msra.mxu0 0.0
  %251 = vmatprep.subr.mxu0 0.0
  %252 = vmatpush1.msra.mxu0 0.0
  %253 = vmatprep.subr.mxu0 0.0
  %254 = vmatpush1.msra.mxu0 0.0
  %255 = vmatprep.subr.mxu0 0.0
  %256 = vmatpush1.msra.mxu0 0.0
  %257 = vmatprep.subr.mxu0 0.0
  %258 = vmatpush1.msra.mxu0 0.0
  %259 = vmatprep.subr.mxu0 0.0
  %260 = vmatpush1.msra.mxu0 0.0
  %261 = vmatprep.subr.mxu0 0.0
  %262 = vmatpush1.msra.mxu0 0.0
  %263 = vmatprep.subr.mxu0 0.0
  %264 = vmatpush1.msra.mxu0 0.0
  %265 = vmatprep.subr.mxu0 0.0
  %266 = vmatpush1.msra.mxu0 0.0
  %267 = vmatprep.subr.mxu0 0.0
  %268 = vmatpush1.msra.mxu0 0.0
  %269 = vmatprep.subr.mxu0 0.0
  %270 = vmatpush1.msra.mxu0 0.0
  %271 = vmatprep.subr.mxu0 0.0
  %272 = vmatpush1.msra.mxu0 0.0
  %273 = vmatprep.subr.mxu0 0.0
  %274 = vmatpush1.msra.mxu0 0.0
  %275 = vmatprep.subr.mxu0 0.0
  %276 = vmatpush1.msra.mxu0 0.0
  %277 = vmatprep.subr.mxu0 0.0
  %278 = vmatpush1.msra.mxu0 0.0
  %279 = vmatprep.subr.mxu0 0.0
  %280 = vmatpush1.msra.mxu0 0.0
  %281 = vmatprep.subr.mxu0 0.0
  %282 = vmatpush1.msra.mxu0 0.0
  %283 = vmatprep.subr.mxu0 0.0
  %284 = vmatpush1.msra.mxu0 0.0
  %285 = vmatprep.subr.mxu0 0.0
  %286 = vmatpush1.msra.mxu0 0.0
  %287 = vmatprep.subr.mxu0 0.0
  %288 = vmatpush1.msra.mxu0 0.0
  %289 = vmatprep.subr.mxu0 0.0
  %290 = vmatpush1.msra.mxu0 0.0
  %291 = vmatprep.mubr.f32.mxu0 0.0
  %292 = vmatmul.mubr.f32.gmra.mrb[0].mxu0 %v132
  %v293 = vpop.f32.mrb[0].mxu0
  %v294 = vadd.f32 0.0, %v293
  %v295 = vpop.f32.mrb[0].mxu0
  %v296 = vadd.f32 0.0, %v295
  %297 = vmatprep.mubr.f32.mxu0 0.0
  %298 = vmatmul.mubr.f32.gmra.mrb[0].mxu0 %v135
  %v299 = vpop.f32.mrb[0].mxu0
  %v300 = vadd.f32 0.0, %v299
  %v301 = vpop.f32.mrb[0].mxu0
  %v302 = vadd.f32 0.0, %v301
  %303 = vdwg.mxu0
  %v305 = vsel %vm130, %v84, 0
  %v308 = vsel %vm130, %v85, 0
  %v311 = vsel %vm137, %v80, 0
  %v314 = vsel %vm137, %v81, 0
  %v317 = vsel %vm137, %v82, 0
  %v320 = vsel %vm137, %v83, 0
  %322 = vmatprep.subr.mxu0 %v314
  %323 = vmatpush1.msra.mxu0 %v311
  %324 = vmatprep.subr.mxu0 0.0
  %325 = vmatpush1.msra.mxu0 0.0
  %326 = vmatprep.subr.mxu0 0.0
  %327 = vmatpush1.msra.mxu0 0.0
  %328 = vmatprep.subr.mxu0 0.0
  %329 = vmatpush1.msra.mxu0 0.0
  %330 = vmatprep.subr.mxu0 0.0
  %331 = vmatpush1.msra.mxu0 0.0
  %332 = vmatprep.subr.mxu0 0.0
  %333 = vmatpush1.msra.mxu0 0.0
  %334 = vmatprep.subr.mxu0 0.0
  %335 = vmatpush1.msra.mxu0 0.0
  %336 = vmatprep.subr.mxu0 0.0
  %337 = vmatpush1.msra.mxu0 0.0
  %338 = vmatprep.subr.mxu0 0.0
  %339 = vmatpush1.msra.mxu0 0.0
  %340 = vmatprep.subr.mxu0 0.0
  %341 = vmatpush1.msra.mxu0 0.0
  %342 = vmatprep.subr.mxu0 0.0
  %343 = vmatpush1.msra.mxu0 0.0
  %344 = vmatprep.subr.mxu0 0.0
  %345 = vmatpush1.msra.mxu0 0.0
  %346 = vmatprep.subr.mxu0 0.0
  %347 = vmatpush1.msra.mxu0 0.0
  %348 = vmatprep.subr.mxu0 0.0
  %349 = vmatpush1.msra.mxu0 0.0
  %350 = vmatprep.subr.mxu0 0.0
  %351 = vmatpush1.msra.mxu0 0.0
  %352 = vmatprep.subr.mxu0 0.0
  %353 = vmatpush1.msra.mxu0 0.0
  %354 = vmatprep.subr.mxu0 0.0
  %355 = vmatpush1.msra.mxu0 0.0
  %356 = vmatprep.subr.mxu0 0.0
  %357 = vmatpush1.msra.mxu0 0.0
  %358 = vmatprep.subr.mxu0 0.0
  %359 = vmatpush1.msra.mxu0 0.0
  %360 = vmatprep.subr.mxu0 0.0
  %361 = vmatpush1.msra.mxu0 0.0
  %362 = vmatprep.subr.mxu0 0.0
  %363 = vmatpush1.msra.mxu0 0.0
  %364 = vmatprep.subr.mxu0 0.0
  %365 = vmatpush1.msra.mxu0 0.0
  %366 = vmatprep.subr.mxu0 0.0
  %367 = vmatpush1.msra.mxu0 0.0
  %368 = vmatprep.subr.mxu0 0.0
  %369 = vmatpush1.msra.mxu0 0.0
  %370 = vmatprep.subr.mxu0 0.0
  %371 = vmatpush1.msra.mxu0 0.0
  %372 = vmatprep.subr.mxu0 0.0
  %373 = vmatpush1.msra.mxu0 0.0
  %374 = vmatprep.subr.mxu0 0.0
  %375 = vmatpush1.msra.mxu0 0.0
  %376 = vmatprep.subr.mxu0 0.0
  %377 = vmatpush1.msra.mxu0 0.0
  %378 = vmatprep.subr.mxu0 0.0
  %379 = vmatpush1.msra.mxu0 0.0
  %380 = vmatprep.subr.mxu0 0.0
  %381 = vmatpush1.msra.mxu0 0.0
  %382 = vmatprep.subr.mxu0 0.0
  %383 = vmatpush1.msra.mxu0 0.0
  %384 = vmatprep.subr.mxu0 0.0
  %385 = vmatpush1.msra.mxu0 0.0
  %386 = vmatprep.mubr.f32.mxu0 0.0
  %387 = vmatmul.mubr.f32.gmra.mrb[0].mxu0 %v305
  %v388 = vpop.f32.mrb[0].mxu0
  %v389 = vadd.f32 %v217, %v388
  %v390 = vpop.f32.mrb[0].mxu0
  %v391 = vadd.f32 %v219, %v390
  %392 = vmatprep.mubr.f32.mxu0 0.0
  %393 = vmatmul.mubr.f32.gmra.mrb[0].mxu0 %v308
  %v394 = vpop.f32.mrb[0].mxu0
  %v395 = vadd.f32 %v223, %v394
  %v396 = vpop.f32.mrb[0].mxu0
  %v397 = vadd.f32 %v225, %v396
  %398 = vdwg.mxu0
  %399 = vmatprep.subr.mxu0 %v320
  %400 = vmatpush1.msra.mxu0 %v317
  %401 = vmatprep.subr.mxu0 0.0
  %402 = vmatpush1.msra.mxu0 0.0
  %403 = vmatprep.subr.mxu0 0.0
  %404 = vmatpush1.msra.mxu0 0.0
  %405 = vmatprep.subr.mxu0 0.0
  %406 = vmatpush1.msra.mxu0 0.0
  %407 = vmatprep.subr.mxu0 0.0
  %408 = vmatpush1.msra.mxu0 0.0
  %409 = vmatprep.subr.mxu0 0.0
  %410 = vmatpush1.msra.mxu0 0.0
  %411 = vmatprep.subr.mxu0 0.0
  %412 = vmatpush1.msra.mxu0 0.0
  %413 = vmatprep.subr.mxu0 0.0
  %414 = vmatpush1.msra.mxu0 0.0
  %415 = vmatprep.subr.mxu0 0.0
  %416 = vmatpush1.msra.mxu0 0.0
  %417 = vmatprep.subr.mxu0 0.0
  %418 = vmatpush1.msra.mxu0 0.0
  %419 = vmatprep.subr.mxu0 0.0
  %420 = vmatpush1.msra.mxu0 0.0
  %421 = vmatprep.subr.mxu0 0.0
  %422 = vmatpush1.msra.mxu0 0.0
  %423 = vmatprep.subr.mxu0 0.0
  %424 = vmatpush1.msra.mxu0 0.0
  %425 = vmatprep.subr.mxu0 0.0
  %426 = vmatpush1.msra.mxu0 0.0
  %427 = vmatprep.subr.mxu0 0.0
  %428 = vmatpush1.msra.mxu0 0.0
  %429 = vmatprep.subr.mxu0 0.0
  %430 = vmatpush1.msra.mxu0 0.0
  %431 = vmatprep.subr.mxu0 0.0
  %432 = vmatpush1.msra.mxu0 0.0
  %433 = vmatprep.subr.mxu0 0.0
  %434 = vmatpush1.msra.mxu0 0.0
  %435 = vmatprep.subr.mxu0 0.0
  %436 = vmatpush1.msra.mxu0 0.0
  %437 = vmatprep.subr.mxu0 0.0
  %438 = vmatpush1.msra.mxu0 0.0
  %439 = vmatprep.subr.mxu0 0.0
  %440 = vmatpush1.msra.mxu0 0.0
  %441 = vmatprep.subr.mxu0 0.0
  %442 = vmatpush1.msra.mxu0 0.0
  %443 = vmatprep.subr.mxu0 0.0
  %444 = vmatpush1.msra.mxu0 0.0
  %445 = vmatprep.subr.mxu0 0.0
  %446 = vmatpush1.msra.mxu0 0.0
  %447 = vmatprep.subr.mxu0 0.0
  %448 = vmatpush1.msra.mxu0 0.0
  %449 = vmatprep.subr.mxu0 0.0
  %450 = vmatpush1.msra.mxu0 0.0
  %451 = vmatprep.subr.mxu0 0.0
  %452 = vmatpush1.msra.mxu0 0.0
  %453 = vmatprep.subr.mxu0 0.0
  %454 = vmatpush1.msra.mxu0 0.0
  %455 = vmatprep.subr.mxu0 0.0
  %456 = vmatpush1.msra.mxu0 0.0
  %457 = vmatprep.subr.mxu0 0.0
  %458 = vmatpush1.msra.mxu0 0.0
  %459 = vmatprep.subr.mxu0 0.0
  %460 = vmatpush1.msra.mxu0 0.0
  %461 = vmatprep.subr.mxu0 0.0
  %462 = vmatpush1.msra.mxu0 0.0
  %463 = vmatprep.mubr.f32.mxu0 0.0
  %464 = vmatmul.mubr.f32.gmra.mrb[0].mxu0 %v305
  %v465 = vpop.f32.mrb[0].mxu0
  %v466 = vadd.f32 %v294, %v465
  %v467 = vpop.f32.mrb[0].mxu0
  %v468 = vadd.f32 %v296, %v467
  %469 = vmatprep.mubr.f32.mxu0 0.0
  %470 = vmatmul.mubr.f32.gmra.mrb[0].mxu0 %v308
  %v471 = vpop.f32.mrb[0].mxu0
  %v472 = vadd.f32 %v300, %v471
  %v473 = vpop.f32.mrb[0].mxu0
  %v474 = vadd.f32 %v302, %v473
  %475 = vdwg.mxu0
  %476 = vrot.lane.b32.xlu0 %v37, 15
  %v477 = vpop.permute.xlu0 %476
  %478 = vrot.lane.b32.xlu0 %v41, 15
  %v479 = vpop.permute.xlu0 %478
  %480 = vrot.lane.b32.xlu0 %v38, 15
  %v481 = vpop.permute.xlu0 %480
  %482 = vrot.lane.b32.xlu0 %v42, 15
  %v483 = vpop.permute.xlu0 %482
  %vm484 = vcmp.lt.s32.totalorder %v54, 15
  %v485 = vsel %vm484, %v481, %v483
  %v486 = vsel %vm484, %v479, %v481
  %v487 = vsel %vm484, %v477, %v479
  %v488 = vsel %vm484, %v483, %v477
  %v489 = vlaneseq
  %v490 = vshrl.u32 %v489, 7
  %v491 = vsub.s32 2, %v490
  %v492 = vrot.slane %v29, %v491
  %v493 = vlaneseq
  %v494 = vshrl.u32 %v493, 7
  %v495 = vsub.s32 2, %v494
  %v496 = vrot.slane %v30, %v495
  %v497 = vlaneseq
  %v498 = vshrl.u32 %v497, 7
  %v499 = vsub.s32 2, %v498
  %v500 = vrot.slane %v31, %v499
  %v501 = vlaneseq
  %v502 = vshrl.u32 %v501, 7
  %v503 = vsub.s32 2, %v502
  %v504 = vrot.slane %v32, %v503
  %v505 = vmul.f32 %v488, %v492
  %v506 = vmul.f32 %v487, %v496
  %v507 = vmul.f32 %v486, %v500
  %v508 = vmul.f32 %v485, %v504
  %v509 = vadd.f32 %v119, %v505
  %v510 = vadd.f32 %v120, %v506
  %v511 = vadd.f32 %v121, %v507
  %v512 = vadd.f32 %v122, %v508
  %v513 = vmax.f32 %v505, 0.0
  %v514 = vmax.f32 %v506, 0.0
  %v515 = vmax.f32 %v507, 0.0
  %v516 = vmax.f32 %v508, 0.0
  %s517 = scalar_lea.vmem %s2, 32
  %v518 = vld [vmem:[%s517] sm:$0xff]
  %v519 = vld [vmem:[%s517 + $0x8] sm:$0xf]
  %v521 = vsel %vm130, %v518, 0
  %v524 = vsel %vm130, %v519, 0
  %v527 = vsel %vm137, %v513, 0
  %v530 = vsel %vm137, %v514, 0
  %v533 = vsel %vm137, %v515, 0
  %v536 = vsel %vm137, %v516, 0
  %538 = vmatprep.subr.mxu0 %v530
  %539 = vmatpush1.msra.mxu0 %v527
  %540 = vmatprep.subr.mxu0 0.0
  %541 = vmatpush1.msra.mxu0 0.0
  %542 = vmatprep.subr.mxu0 0.0
  %543 = vmatpush1.msra.mxu0 0.0
  %544 = vmatprep.subr.mxu0 0.0
  %545 = vmatpush1.msra.mxu0 0.0
  %546 = vmatprep.subr.mxu0 0.0
  %547 = vmatpush1.msra.mxu0 0.0
  %548 = vmatprep.subr.mxu0 0.0
  %549 = vmatpush1.msra.mxu0 0.0
  %550 = vmatprep.subr.mxu0 0.0
  %551 = vmatpush1.msra.mxu0 0.0
  %552 = vmatprep.subr.mxu0 0.0
  %553 = vmatpush1.msra.mxu0 0.0
  %554 = vmatprep.subr.mxu0 0.0
  %555 = vmatpush1.msra.mxu0 0.0
  %556 = vmatprep.subr.mxu0 0.0
  %557 = vmatpush1.msra.mxu0 0.0
  %558 = vmatprep.subr.mxu0 0.0
  %559 = vmatpush1.msra.mxu0 0.0
  %560 = vmatprep.subr.mxu0 0.0
  %561 = vmatpush1.msra.mxu0 0.0
  %562 = vmatprep.subr.mxu0 0.0
  %563 = vmatpush1.msra.mxu0 0.0
  %564 = vmatprep.subr.mxu0 0.0
  %565 = vmatpush1.msra.mxu0 0.0
  %566 = vmatprep.subr.mxu0 0.0
  %567 = vmatpush1.msra.mxu0 0.0
  %568 = vmatprep.subr.mxu0 0.0
  %569 = vmatpush1.msra.mxu0 0.0
  %570 = vmatprep.subr.mxu0 0.0
  %571 = vmatpush1.msra.mxu0 0.0
  %572 = vmatprep.subr.mxu0 0.0
  %573 = vmatpush1.msra.mxu0 0.0
  %574 = vmatprep.subr.mxu0 0.0
  %575 = vmatpush1.msra.mxu0 0.0
  %576 = vmatprep.subr.mxu0 0.0
  %577 = vmatpush1.msra.mxu0 0.0
  %578 = vmatprep.subr.mxu0 0.0
  %579 = vmatpush1.msra.mxu0 0.0
  %580 = vmatprep.subr.mxu0 0.0
  %581 = vmatpush1.msra.mxu0 0.0
  %582 = vmatprep.subr.mxu0 0.0
  %583 = vmatpush1.msra.mxu0 0.0
  %584 = vmatprep.subr.mxu0 0.0
  %585 = vmatpush1.msra.mxu0 0.0
  %586 = vmatprep.subr.mxu0 0.0
  %587 = vmatpush1.msra.mxu0 0.0
  %588 = vmatprep.subr.mxu0 0.0
  %589 = vmatpush1.msra.mxu0 0.0
  %590 = vmatprep.subr.mxu0 0.0
  %591 = vmatpush1.msra.mxu0 0.0
  %592 = vmatprep.subr.mxu0 0.0
  %593 = vmatpush1.msra.mxu0 0.0
  %594 = vmatprep.subr.mxu0 0.0
  %595 = vmatpush1.msra.mxu0 0.0
  %596 = vmatprep.subr.mxu0 0.0
  %597 = vmatpush1.msra.mxu0 0.0
  %598 = vmatprep.subr.mxu0 0.0
  %599 = vmatpush1.msra.mxu0 0.0
  %600 = vmatprep.subr.mxu0 0.0
  %601 = vmatpush1.msra.mxu0 0.0
  %602 = vmatprep.mubr.f32.mxu0 0.0
  %603 = vmatmul.mubr.f32.gmra.mrb[0].mxu0 %v521
  %v604 = vpop.f32.mrb[0].mxu0
  %v605 = vadd.f32 0.0, %v604
  %v606 = vpop.f32.mrb[0].mxu0
  %v607 = vadd.f32 0.0, %v606
  %608 = vmatprep.mubr.f32.mxu0 0.0
  %609 = vmatmul.mubr.f32.gmra.mrb[0].mxu0 %v524
  %v610 = vpop.f32.mrb[0].mxu0
  %v611 = vadd.f32 0.0, %v610
  %v612 = vpop.f32.mrb[0].mxu0
  %v613 = vadd.f32 0.0, %v612
  %614 = vdwg.mxu0
  %615 = vmatprep.subr.mxu0 %v536
  %616 = vmatpush1.msra.mxu0 %v533
  %617 = vmatprep.subr.mxu0 0.0
  %618 = vmatpush1.msra.mxu0 0.0
  %619 = vmatprep.subr.mxu0 0.0
  %620 = vmatpush1.msra.mxu0 0.0
  %621 = vmatprep.subr.mxu0 0.0
  %622 = vmatpush1.msra.mxu0 0.0
  %623 = vmatprep.subr.mxu0 0.0
  %624 = vmatpush1.msra.mxu0 0.0
  %625 = vmatprep.subr.mxu0 0.0
  %626 = vmatpush1.msra.mxu0 0.0
  %627 = vmatprep.subr.mxu0 0.0
  %628 = vmatpush1.msra.mxu0 0.0
  %629 = vmatprep.subr.mxu0 0.0
  %630 = vmatpush1.msra.mxu0 0.0
  %631 = vmatprep.subr.mxu0 0.0
  %632 = vmatpush1.msra.mxu0 0.0
  %633 = vmatprep.subr.mxu0 0.0
  %634 = vmatpush1.msra.mxu0 0.0
  %635 = vmatprep.subr.mxu0 0.0
  %636 = vmatpush1.msra.mxu0 0.0
  %637 = vmatprep.subr.mxu0 0.0
  %638 = vmatpush1.msra.mxu0 0.0
  %639 = vmatprep.subr.mxu0 0.0
  %640 = vmatpush1.msra.mxu0 0.0
  %641 = vmatprep.subr.mxu0 0.0
  %642 = vmatpush1.msra.mxu0 0.0
  %643 = vmatprep.subr.mxu0 0.0
  %644 = vmatpush1.msra.mxu0 0.0
  %645 = vmatprep.subr.mxu0 0.0
  %646 = vmatpush1.msra.mxu0 0.0
  %647 = vmatprep.subr.mxu0 0.0
  %648 = vmatpush1.msra.mxu0 0.0
  %649 = vmatprep.subr.mxu0 0.0
  %650 = vmatpush1.msra.mxu0 0.0
  %651 = vmatprep.subr.mxu0 0.0
  %652 = vmatpush1.msra.mxu0 0.0
  %653 = vmatprep.subr.mxu0 0.0
  %654 = vmatpush1.msra.mxu0 0.0
  %655 = vmatprep.subr.mxu0 0.0
  %656 = vmatpush1.msra.mxu0 0.0
  %657 = vmatprep.subr.mxu0 0.0
  %658 = vmatpush1.msra.mxu0 0.0
  %659 = vmatprep.subr.mxu0 0.0
  %660 = vmatpush1.msra.mxu0 0.0
  %661 = vmatprep.subr.mxu0 0.0
  %662 = vmatpush1.msra.mxu0 0.0
  %663 = vmatprep.subr.mxu0 0.0
  %664 = vmatpush1.msra.mxu0 0.0
  %665 = vmatprep.subr.mxu0 0.0
  %666 = vmatpush1.msra.mxu0 0.0
  %667 = vmatprep.subr.mxu0 0.0
  %668 = vmatpush1.msra.mxu0 0.0
  %669 = vmatprep.subr.mxu0 0.0
  %670 = vmatpush1.msra.mxu0 0.0
  %671 = vmatprep.subr.mxu0 0.0
  %672 = vmatpush1.msra.mxu0 0.0
  %673 = vmatprep.subr.mxu0 0.0
  %674 = vmatpush1.msra.mxu0 0.0
  %675 = vmatprep.subr.mxu0 0.0
  %676 = vmatpush1.msra.mxu0 0.0
  %677 = vmatprep.subr.mxu0 0.0
  %678 = vmatpush1.msra.mxu0 0.0
  %679 = vmatprep.mubr.f32.mxu0 0.0
  %680 = vmatmul.mubr.f32.gmra.mrb[0].mxu0 %v521
  %v681 = vpop.f32.mrb[0].mxu0
  %v682 = vadd.f32 0.0, %v681
  %v683 = vpop.f32.mrb[0].mxu0
  %v684 = vadd.f32 0.0, %v683
  %685 = vmatprep.mubr.f32.mxu0 0.0
  %686 = vmatmul.mubr.f32.gmra.mrb[0].mxu0 %v524
  %v687 = vpop.f32.mrb[0].mxu0
  %v688 = vadd.f32 0.0, %v687
  %v689 = vpop.f32.mrb[0].mxu0
  %v690 = vadd.f32 0.0, %v689
  %691 = vdwg.mxu0
  %v692 = vadd.f32 %v389, %v605
  %v693 = vadd.f32 %v391, %v607
  %v694 = vadd.f32 %v466, %v682
  %v695 = vadd.f32 %v468, %v684
  %v696 = vadd.f32 %v395, %v611
  %v697 = vadd.f32 %v397, %v613
  %v698 = vadd.f32 %v472, %v688
  %v699 = vadd.f32 %v474, %v690
  %700 = vrot.lane.b32.xlu0 %v37, 1
  %v701 = vpop.permute.xlu0 %700
  %702 = vrot.lane.b32.xlu0 %v41, 1
  %v703 = vpop.permute.xlu0 %702
  %704 = vrot.lane.b32.xlu0 %v38, 1
  %v705 = vpop.permute.xlu0 %704
  %706 = vrot.lane.b32.xlu0 %v42, 1
  %v707 = vpop.permute.xlu0 %706
  %vm708 = vcmp.lt.s32.totalorder %v54, 1
  %v709 = vsel %vm708, %v705, %v707
  %v710 = vsel %vm708, %v703, %v705
  %v711 = vsel %vm708, %v701, %v703
  %v712 = vsel %vm708, %v707, %v701
  %v713 = vlaneseq
  %v714 = vshrl.u32 %v713, 7
  %v715 = vsub.s32 3, %v714
  %v716 = vrot.slane %v29, %v715
  %v717 = vlaneseq
  %v718 = vshrl.u32 %v717, 7
  %v719 = vsub.s32 3, %v718
  %v720 = vrot.slane %v30, %v719
  %v721 = vlaneseq
  %v722 = vshrl.u32 %v721, 7
  %v723 = vsub.s32 3, %v722
  %v724 = vrot.slane %v31, %v723
  %v725 = vlaneseq
  %v726 = vshrl.u32 %v725, 7
  %v727 = vsub.s32 3, %v726
  %v728 = vrot.slane %v32, %v727
  %v729 = vmul.f32 %v712, %v716
  %v730 = vmul.f32 %v711, %v720
  %v731 = vmul.f32 %v710, %v724
  %v732 = vmul.f32 %v709, %v728
  %v733 = vadd.f32 %v509, %v729
  %v734 = vadd.f32 %v510, %v730
  %v735 = vadd.f32 %v511, %v731
  %v736 = vadd.f32 %v512, %v732
  %v737 = vmax.f32 %v729, 0.0
  %v738 = vmax.f32 %v730, 0.0
  %v739 = vmax.f32 %v731, 0.0
  %v740 = vmax.f32 %v732, 0.0
  %s741 = scalar_lea.vmem %s2, 48
  %v742 = vld [vmem:[%s741] sm:$0xff]
  %v743 = vld [vmem:[%s741 + $0x8] sm:$0xf]
  %v745 = vsel %vm130, %v742, 0
  %v748 = vsel %vm130, %v743, 0
  %v751 = vsel %vm137, %v737, 0
  %v754 = vsel %vm137, %v738, 0
  %v757 = vsel %vm137, %v739, 0
  %v760 = vsel %vm137, %v740, 0
  %762 = vmatprep.subr.mxu0 %v754
  %763 = vmatpush1.msra.mxu0 %v751
  %764 = vmatprep.subr.mxu0 0.0
  %765 = vmatpush1.msra.mxu0 0.0
  %766 = vmatprep.subr.mxu0 0.0
  %767 = vmatpush1.msra.mxu0 0.0
  %768 = vmatprep.subr.mxu0 0.0
  %769 = vmatpush1.msra.mxu0 0.0
  %770 = vmatprep.subr.mxu0 0.0
  %771 = vmatpush1.msra.mxu0 0.0
  %772 = vmatprep.subr.mxu0 0.0
  %773 = vmatpush1.msra.mxu0 0.0
  %774 = vmatprep.subr.mxu0 0.0
  %775 = vmatpush1.msra.mxu0 0.0
  %776 = vmatprep.subr.mxu0 0.0
  %777 = vmatpush1.msra.mxu0 0.0
  %778 = vmatprep.subr.mxu0 0.0
  %779 = vmatpush1.msra.mxu0 0.0
  %780 = vmatprep.subr.mxu0 0.0
  %781 = vmatpush1.msra.mxu0 0.0
  %782 = vmatprep.subr.mxu0 0.0
  %783 = vmatpush1.msra.mxu0 0.0
  %784 = vmatprep.subr.mxu0 0.0
  %785 = vmatpush1.msra.mxu0 0.0
  %786 = vmatprep.subr.mxu0 0.0
  %787 = vmatpush1.msra.mxu0 0.0
  %788 = vmatprep.subr.mxu0 0.0
  %789 = vmatpush1.msra.mxu0 0.0
  %790 = vmatprep.subr.mxu0 0.0
  %791 = vmatpush1.msra.mxu0 0.0
  %792 = vmatprep.subr.mxu0 0.0
  %793 = vmatpush1.msra.mxu0 0.0
  %794 = vmatprep.subr.mxu0 0.0
  %795 = vmatpush1.msra.mxu0 0.0
  %796 = vmatprep.subr.mxu0 0.0
  %797 = vmatpush1.msra.mxu0 0.0
  %798 = vmatprep.subr.mxu0 0.0
  %799 = vmatpush1.msra.mxu0 0.0
  %800 = vmatprep.subr.mxu0 0.0
  %801 = vmatpush1.msra.mxu0 0.0
  %802 = vmatprep.subr.mxu0 0.0
  %803 = vmatpush1.msra.mxu0 0.0
  %804 = vmatprep.subr.mxu0 0.0
  %805 = vmatpush1.msra.mxu0 0.0
  %806 = vmatprep.subr.mxu0 0.0
  %807 = vmatpush1.msra.mxu0 0.0
  %808 = vmatprep.subr.mxu0 0.0
  %809 = vmatpush1.msra.mxu0 0.0
  %810 = vmatprep.subr.mxu0 0.0
  %811 = vmatpush1.msra.mxu0 0.0
  %812 = vmatprep.subr.mxu0 0.0
  %813 = vmatpush1.msra.mxu0 0.0
  %814 = vmatprep.subr.mxu0 0.0
  %815 = vmatpush1.msra.mxu0 0.0
  %816 = vmatprep.subr.mxu0 0.0
  %817 = vmatpush1.msra.mxu0 0.0
  %818 = vmatprep.subr.mxu0 0.0
  %819 = vmatpush1.msra.mxu0 0.0
  %820 = vmatprep.subr.mxu0 0.0
  %821 = vmatpush1.msra.mxu0 0.0
  %822 = vmatprep.subr.mxu0 0.0
  %823 = vmatpush1.msra.mxu0 0.0
  %824 = vmatprep.subr.mxu0 0.0
  %825 = vmatpush1.msra.mxu0 0.0
  %826 = vmatprep.mubr.f32.mxu0 0.0
  %827 = vmatmul.mubr.f32.gmra.mrb[0].mxu0 %v745
  %v828 = vpop.f32.mrb[0].mxu0
  %v829 = vadd.f32 0.0, %v828
  %v830 = vpop.f32.mrb[0].mxu0
  %v831 = vadd.f32 0.0, %v830
  %832 = vmatprep.mubr.f32.mxu0 0.0
  %833 = vmatmul.mubr.f32.gmra.mrb[0].mxu0 %v748
  %v834 = vpop.f32.mrb[0].mxu0
  %v835 = vadd.f32 0.0, %v834
  %v836 = vpop.f32.mrb[0].mxu0
  %v837 = vadd.f32 0.0, %v836
  %838 = vdwg.mxu0
  %839 = vmatprep.subr.mxu0 %v760
  %840 = vmatpush1.msra.mxu0 %v757
  %841 = vmatprep.subr.mxu0 0.0
  %842 = vmatpush1.msra.mxu0 0.0
  %843 = vmatprep.subr.mxu0 0.0
  %844 = vmatpush1.msra.mxu0 0.0
  %845 = vmatprep.subr.mxu0 0.0
  %846 = vmatpush1.msra.mxu0 0.0
  %847 = vmatprep.subr.mxu0 0.0
  %848 = vmatpush1.msra.mxu0 0.0
  %849 = vmatprep.subr.mxu0 0.0
  %850 = vmatpush1.msra.mxu0 0.0
  %851 = vmatprep.subr.mxu0 0.0
  %852 = vmatpush1.msra.mxu0 0.0
  %853 = vmatprep.subr.mxu0 0.0
  %854 = vmatpush1.msra.mxu0 0.0
  %855 = vmatprep.subr.mxu0 0.0
  %856 = vmatpush1.msra.mxu0 0.0
  %857 = vmatprep.subr.mxu0 0.0
  %858 = vmatpush1.msra.mxu0 0.0
  %859 = vmatprep.subr.mxu0 0.0
  %860 = vmatpush1.msra.mxu0 0.0
  %861 = vmatprep.subr.mxu0 0.0
  %862 = vmatpush1.msra.mxu0 0.0
  %863 = vmatprep.subr.mxu0 0.0
  %864 = vmatpush1.msra.mxu0 0.0
  %865 = vmatprep.subr.mxu0 0.0
  %866 = vmatpush1.msra.mxu0 0.0
  %867 = vmatprep.subr.mxu0 0.0
  %868 = vmatpush1.msra.mxu0 0.0
  %869 = vmatprep.subr.mxu0 0.0
  %870 = vmatpush1.msra.mxu0 0.0
  %871 = vmatprep.subr.mxu0 0.0
  %872 = vmatpush1.msra.mxu0 0.0
  %873 = vmatprep.subr.mxu0 0.0
  %874 = vmatpush1.msra.mxu0 0.0
  %875 = vmatprep.subr.mxu0 0.0
  %876 = vmatpush1.msra.mxu0 0.0
  %877 = vmatprep.subr.mxu0 0.0
  %878 = vmatpush1.msra.mxu0 0.0
  %879 = vmatprep.subr.mxu0 0.0
  %880 = vmatpush1.msra.mxu0 0.0
  %881 = vmatprep.subr.mxu0 0.0
  %882 = vmatpush1.msra.mxu0 0.0
  %883 = vmatprep.subr.mxu0 0.0
  %884 = vmatpush1.msra.mxu0 0.0
  %885 = vmatprep.subr.mxu0 0.0
  %886 = vmatpush1.msra.mxu0 0.0
  %887 = vmatprep.subr.mxu0 0.0
  %888 = vmatpush1.msra.mxu0 0.0
  %889 = vmatprep.subr.mxu0 0.0
  %890 = vmatpush1.msra.mxu0 0.0
  %891 = vmatprep.subr.mxu0 0.0
  %892 = vmatpush1.msra.mxu0 0.0
  %893 = vmatprep.subr.mxu0 0.0
  %894 = vmatpush1.msra.mxu0 0.0
  %895 = vmatprep.subr.mxu0 0.0
  %896 = vmatpush1.msra.mxu0 0.0
  %897 = vmatprep.subr.mxu0 0.0
  %898 = vmatpush1.msra.mxu0 0.0
  %899 = vmatprep.subr.mxu0 0.0
  %900 = vmatpush1.msra.mxu0 0.0
  %901 = vmatprep.subr.mxu0 0.0
  %902 = vmatpush1.msra.mxu0 0.0
  %903 = vmatprep.mubr.f32.mxu0 0.0
  %904 = vmatmul.mubr.f32.gmra.mrb[0].mxu0 %v745
  %v905 = vpop.f32.mrb[0].mxu0
  %v906 = vadd.f32 0.0, %v905
  %v907 = vpop.f32.mrb[0].mxu0
  %v908 = vadd.f32 0.0, %v907
  %909 = vmatprep.mubr.f32.mxu0 0.0
  %910 = vmatmul.mubr.f32.gmra.mrb[0].mxu0 %v748
  %v911 = vpop.f32.mrb[0].mxu0
  %v912 = vadd.f32 0.0, %v911
  %v913 = vpop.f32.mrb[0].mxu0
  %v914 = vadd.f32 0.0, %v913
  %915 = vdwg.mxu0
  %v916 = vadd.f32 %v692, %v829
  %v917 = vadd.f32 %v693, %v831
  %v918 = vadd.f32 %v694, %v906
  %v919 = vadd.f32 %v695, %v908
  %v920 = vadd.f32 %v696, %v835
  %v921 = vadd.f32 %v697, %v837
  %v922 = vadd.f32 %v698, %v912
  %v923 = vadd.f32 %v699, %v914
  %v924 = vadd.f32 %v733, %v37
  %v925 = vadd.f32 %v734, %v41
  %v926 = vadd.f32 %v735, %v38
  %v927 = vadd.f32 %v736, %v42
  %v928 = vmax.f32 %v37, 0.0
  %v929 = vmax.f32 %v38, 0.0
  %s930 = scalar_lea.vmem %s2, 64
  %v931 = vld [vmem:[%s930] sm:$0xff]
  %v932 = vld [vmem:[%s930 + $0x8] sm:$0xf]
  %v935 = vcombine.high %v928, %v928
  %v936 = vcombine.high %v929, %v929
  %v938 = vsel %vm130, %v931, 0
  %v941 = vsel %vm130, %v932, 0
  %v943 = vsel %vm137, %v928, 0
  %v945 = vsel %vm137, %v935, 0
  %v947 = vsel %vm137, %v929, 0
  %v949 = vsel %vm137, %v936, 0
  %951 = vmatprep.subr.mxu0 %v945
  %952 = vmatpush1.msra.mxu0 %v943
  %953 = vmatprep.subr.mxu0 0.0
  %954 = vmatpush1.msra.mxu0 0.0
  %955 = vmatprep.subr.mxu0 0.0
  %956 = vmatpush1.msra.mxu0 0.0
  %957 = vmatprep.subr.mxu0 0.0
  %958 = vmatpush1.msra.mxu0 0.0
  %959 = vmatprep.subr.mxu0 0.0
  %960 = vmatpush1.msra.mxu0 0.0
  %961 = vmatprep.subr.mxu0 0.0
  %962 = vmatpush1.msra.mxu0 0.0
  %963 = vmatprep.subr.mxu0 0.0
  %964 = vmatpush1.msra.mxu0 0.0
  %965 = vmatprep.subr.mxu0 0.0
  %966 = vmatpush1.msra.mxu0 0.0
  %967 = vmatprep.subr.mxu0 0.0
  %968 = vmatpush1.msra.mxu0 0.0
  %969 = vmatprep.subr.mxu0 0.0
  %970 = vmatpush1.msra.mxu0 0.0
  %971 = vmatprep.subr.mxu0 0.0
  %972 = vmatpush1.msra.mxu0 0.0
  %973 = vmatprep.subr.mxu0 0.0
  %974 = vmatpush1.msra.mxu0 0.0
  %975 = vmatprep.subr.mxu0 0.0
  %976 = vmatpush1.msra.mxu0 0.0
  %977 = vmatprep.subr.mxu0 0.0
  %978 = vmatpush1.msra.mxu0 0.0
  %979 = vmatprep.subr.mxu0 0.0
  %980 = vmatpush1.msra.mxu0 0.0
  %981 = vmatprep.subr.mxu0 0.0
  %982 = vmatpush1.msra.mxu0 0.0
  %983 = vmatprep.subr.mxu0 0.0
  %984 = vmatpush1.msra.mxu0 0.0
  %985 = vmatprep.subr.mxu0 0.0
  %986 = vmatpush1.msra.mxu0 0.0
  %987 = vmatprep.subr.mxu0 0.0
  %988 = vmatpush1.msra.mxu0 0.0
  %989 = vmatprep.subr.mxu0 0.0
  %990 = vmatpush1.msra.mxu0 0.0
  %991 = vmatprep.subr.mxu0 0.0
  %992 = vmatpush1.msra.mxu0 0.0
  %993 = vmatprep.subr.mxu0 0.0
  %994 = vmatpush1.msra.mxu0 0.0
  %995 = vmatprep.subr.mxu0 0.0
  %996 = vmatpush1.msra.mxu0 0.0
  %997 = vmatprep.subr.mxu0 0.0
  %998 = vmatpush1.msra.mxu0 0.0
  %999 = vmatprep.subr.mxu0 0.0
  %1000 = vmatpush1.msra.mxu0 0.0
  %1001 = vmatprep.subr.mxu0 0.0
  %1002 = vmatpush1.msra.mxu0 0.0
  %1003 = vmatprep.subr.mxu0 0.0
  %1004 = vmatpush1.msra.mxu0 0.0
  %1005 = vmatprep.subr.mxu0 0.0
  %1006 = vmatpush1.msra.mxu0 0.0
  %1007 = vmatprep.subr.mxu0 0.0
  %1008 = vmatpush1.msra.mxu0 0.0
  %1009 = vmatprep.subr.mxu0 0.0
  %1010 = vmatpush1.msra.mxu0 0.0
  %1011 = vmatprep.subr.mxu0 0.0
  %1012 = vmatpush1.msra.mxu0 0.0
  %1013 = vmatprep.subr.mxu0 0.0
  %1014 = vmatpush1.msra.mxu0 0.0
  %1015 = vmatprep.mubr.f32.mxu0 0.0
  %1016 = vmatmul.mubr.f32.gmra.mrb[0].mxu0 %v938
  %v1017 = vpop.f32.mrb[0].mxu0
  %v1018 = vadd.f32 0.0, %v1017
  %v1019 = vpop.f32.mrb[0].mxu0
  %v1020 = vadd.f32 0.0, %v1019
  %1021 = vmatprep.mubr.f32.mxu0 0.0
  %1022 = vmatmul.mubr.f32.gmra.mrb[0].mxu0 %v941
  %v1023 = vpop.f32.mrb[0].mxu0
  %v1024 = vadd.f32 0.0, %v1023
  %v1025 = vpop.f32.mrb[0].mxu0
  %v1026 = vadd.f32 0.0, %v1025
  %1027 = vdwg.mxu0
  %1028 = vmatprep.subr.mxu0 %v949
  %1029 = vmatpush1.msra.mxu0 %v947
  %1030 = vmatprep.subr.mxu0 0.0
  %1031 = vmatpush1.msra.mxu0 0.0
  %1032 = vmatprep.subr.mxu0 0.0
  %1033 = vmatpush1.msra.mxu0 0.0
  %1034 = vmatprep.subr.mxu0 0.0
  %1035 = vmatpush1.msra.mxu0 0.0
  %1036 = vmatprep.subr.mxu0 0.0
  %1037 = vmatpush1.msra.mxu0 0.0
  %1038 = vmatprep.subr.mxu0 0.0
  %1039 = vmatpush1.msra.mxu0 0.0
  %1040 = vmatprep.subr.mxu0 0.0
  %1041 = vmatpush1.msra.mxu0 0.0
  %1042 = vmatprep.subr.mxu0 0.0
  %1043 = vmatpush1.msra.mxu0 0.0
  %1044 = vmatprep.subr.mxu0 0.0
  %1045 = vmatpush1.msra.mxu0 0.0
  %1046 = vmatprep.subr.mxu0 0.0
  %1047 = vmatpush1.msra.mxu0 0.0
  %1048 = vmatprep.subr.mxu0 0.0
  %1049 = vmatpush1.msra.mxu0 0.0
  %1050 = vmatprep.subr.mxu0 0.0
  %1051 = vmatpush1.msra.mxu0 0.0
  %1052 = vmatprep.subr.mxu0 0.0
  %1053 = vmatpush1.msra.mxu0 0.0
  %1054 = vmatprep.subr.mxu0 0.0
  %1055 = vmatpush1.msra.mxu0 0.0
  %1056 = vmatprep.subr.mxu0 0.0
  %1057 = vmatpush1.msra.mxu0 0.0
  %1058 = vmatprep.subr.mxu0 0.0
  %1059 = vmatpush1.msra.mxu0 0.0
  %1060 = vmatprep.subr.mxu0 0.0
  %1061 = vmatpush1.msra.mxu0 0.0
  %1062 = vmatprep.subr.mxu0 0.0
  %1063 = vmatpush1.msra.mxu0 0.0
  %1064 = vmatprep.subr.mxu0 0.0
  %1065 = vmatpush1.msra.mxu0 0.0
  %1066 = vmatprep.subr.mxu0 0.0
  %1067 = vmatpush1.msra.mxu0 0.0
  %1068 = vmatprep.subr.mxu0 0.0
  %1069 = vmatpush1.msra.mxu0 0.0
  %1070 = vmatprep.subr.mxu0 0.0
  %1071 = vmatpush1.msra.mxu0 0.0
  %1072 = vmatprep.subr.mxu0 0.0
  %1073 = vmatpush1.msra.mxu0 0.0
  %1074 = vmatprep.subr.mxu0 0.0
  %1075 = vmatpush1.msra.mxu0 0.0
  %1076 = vmatprep.subr.mxu0 0.0
  %1077 = vmatpush1.msra.mxu0 0.0
  %1078 = vmatprep.subr.mxu0 0.0
  %1079 = vmatpush1.msra.mxu0 0.0
  %1080 = vmatprep.subr.mxu0 0.0
  %1081 = vmatpush1.msra.mxu0 0.0
  %1082 = vmatprep.subr.mxu0 0.0
  %1083 = vmatpush1.msra.mxu0 0.0
  %1084 = vmatprep.subr.mxu0 0.0
  %1085 = vmatpush1.msra.mxu0 0.0
  %1086 = vmatprep.subr.mxu0 0.0
  %1087 = vmatpush1.msra.mxu0 0.0
  %1088 = vmatprep.subr.mxu0 0.0
  %1089 = vmatpush1.msra.mxu0 0.0
  %1090 = vmatprep.subr.mxu0 0.0
  %1091 = vmatpush1.msra.mxu0 0.0
  %1092 = vmatprep.mubr.f32.mxu0 0.0
  %1093 = vmatmul.mubr.f32.gmra.mrb[0].mxu0 %v938
  %v1094 = vpop.f32.mrb[0].mxu0
  %v1095 = vadd.f32 0.0, %v1094
  %v1096 = vpop.f32.mrb[0].mxu0
  %v1097 = vadd.f32 0.0, %v1096
  %1098 = vmatprep.mubr.f32.mxu0 0.0
  %1099 = vmatmul.mubr.f32.gmra.mrb[0].mxu0 %v941
  %v1100 = vpop.f32.mrb[0].mxu0
  %v1101 = vadd.f32 0.0, %v1100
  %v1102 = vpop.f32.mrb[0].mxu0
  %v1103 = vadd.f32 0.0, %v1102
  %1104 = vdwg.mxu0
  %v1105 = vadd.f32 %v916, %v1018
  %v1106 = vadd.f32 %v917, %v1020
  %v1107 = vadd.f32 %v918, %v1095
  %v1108 = vadd.f32 %v919, %v1097
  %v1109 = vadd.f32 %v920, %v1024
  %v1110 = vadd.f32 %v921, %v1026
  %v1111 = vadd.f32 %v922, %v1101
  %v1112 = vadd.f32 %v923, %v1103
  %1113 = vrot.lane.b32.xlu0 %v37, 127
  %v1114 = vpop.permute.xlu0 %1113
  %1115 = vrot.lane.b32.xlu0 %v41, 127
  %v1116 = vpop.permute.xlu0 %1115
  %1117 = vrot.lane.b32.xlu0 %v38, 127
  %v1118 = vpop.permute.xlu0 %1117
  %1119 = vrot.lane.b32.xlu0 %v42, 127
  %v1120 = vpop.permute.xlu0 %1119
  %vm1121 = vcmp.lt.s32.totalorder %v54, 127
  %v1122 = vsel %vm1121, %v1118, %v1120
  %v1123 = vsel %vm1121, %v1116, %v1118
  %v1124 = vsel %vm1121, %v1114, %v1116
  %v1125 = vsel %vm1121, %v1120, %v1114
  %v1126 = vlaneseq
  %v1127 = vshrl.u32 %v1126, 7
  %v1128 = vsub.s32 5, %v1127
  %v1129 = vrot.slane %v29, %v1128
  %v1130 = vlaneseq
  %v1131 = vshrl.u32 %v1130, 7
  %v1132 = vsub.s32 5, %v1131
  %v1133 = vrot.slane %v30, %v1132
  %v1134 = vlaneseq
  %v1135 = vshrl.u32 %v1134, 7
  %v1136 = vsub.s32 5, %v1135
  %v1137 = vrot.slane %v31, %v1136
  %v1138 = vlaneseq
  %v1139 = vshrl.u32 %v1138, 7
  %v1140 = vsub.s32 5, %v1139
  %v1141 = vrot.slane %v32, %v1140
  %v1142 = vmul.f32 %v1124, %v1129
  %v1143 = vmul.f32 %v1123, %v1133
  %v1144 = vmul.f32 %v1122, %v1137
  %v1145 = vmul.f32 %v1125, %v1141
  %v1146 = vadd.f32 %v924, %v1142
  %v1147 = vadd.f32 %v925, %v1143
  %v1148 = vadd.f32 %v926, %v1144
  %v1149 = vadd.f32 %v927, %v1145
  %v1150 = vmax.f32 %v1142, 0.0
  %v1151 = vmax.f32 %v1143, 0.0
  %v1152 = vmax.f32 %v1144, 0.0
  %v1153 = vmax.f32 %v1145, 0.0
  %s1154 = scalar_lea.vmem %s2, 80
  %v1155 = vld [vmem:[%s1154] sm:$0xff]
  %v1156 = vld [vmem:[%s1154 + $0x8] sm:$0xf]
  %v1158 = vsel %vm130, %v1155, 0
  %v1161 = vsel %vm130, %v1156, 0
  %v1164 = vsel %vm137, %v1150, 0
  %v1167 = vsel %vm137, %v1151, 0
  %v1170 = vsel %vm137, %v1152, 0
  %v1173 = vsel %vm137, %v1153, 0
  %1175 = vmatprep.subr.mxu0 %v1167
  %1176 = vmatpush1.msra.mxu0 %v1164
  %1177 = vmatprep.subr.mxu0 0.0
  %1178 = vmatpush1.msra.mxu0 0.0
  %1179 = vmatprep.subr.mxu0 0.0
  %1180 = vmatpush1.msra.mxu0 0.0
  %1181 = vmatprep.subr.mxu0 0.0
  %1182 = vmatpush1.msra.mxu0 0.0
  %1183 = vmatprep.subr.mxu0 0.0
  %1184 = vmatpush1.msra.mxu0 0.0
  %1185 = vmatprep.subr.mxu0 0.0
  %1186 = vmatpush1.msra.mxu0 0.0
  %1187 = vmatprep.subr.mxu0 0.0
  %1188 = vmatpush1.msra.mxu0 0.0
  %1189 = vmatprep.subr.mxu0 0.0
  %1190 = vmatpush1.msra.mxu0 0.0
  %1191 = vmatprep.subr.mxu0 0.0
  %1192 = vmatpush1.msra.mxu0 0.0
  %1193 = vmatprep.subr.mxu0 0.0
  %1194 = vmatpush1.msra.mxu0 0.0
  %1195 = vmatprep.subr.mxu0 0.0
  %1196 = vmatpush1.msra.mxu0 0.0
  %1197 = vmatprep.subr.mxu0 0.0
  %1198 = vmatpush1.msra.mxu0 0.0
  %1199 = vmatprep.subr.mxu0 0.0
  %1200 = vmatpush1.msra.mxu0 0.0
  %1201 = vmatprep.subr.mxu0 0.0
  %1202 = vmatpush1.msra.mxu0 0.0
  %1203 = vmatprep.subr.mxu0 0.0
  %1204 = vmatpush1.msra.mxu0 0.0
  %1205 = vmatprep.subr.mxu0 0.0
  %1206 = vmatpush1.msra.mxu0 0.0
  %1207 = vmatprep.subr.mxu0 0.0
  %1208 = vmatpush1.msra.mxu0 0.0
  %1209 = vmatprep.subr.mxu0 0.0
  %1210 = vmatpush1.msra.mxu0 0.0
  %1211 = vmatprep.subr.mxu0 0.0
  %1212 = vmatpush1.msra.mxu0 0.0
  %1213 = vmatprep.subr.mxu0 0.0
  %1214 = vmatpush1.msra.mxu0 0.0
  %1215 = vmatprep.subr.mxu0 0.0
  %1216 = vmatpush1.msra.mxu0 0.0
  %1217 = vmatprep.subr.mxu0 0.0
  %1218 = vmatpush1.msra.mxu0 0.0
  %1219 = vmatprep.subr.mxu0 0.0
  %1220 = vmatpush1.msra.mxu0 0.0
  %1221 = vmatprep.subr.mxu0 0.0
  %1222 = vmatpush1.msra.mxu0 0.0
  %1223 = vmatprep.subr.mxu0 0.0
  %1224 = vmatpush1.msra.mxu0 0.0
  %1225 = vmatprep.subr.mxu0 0.0
  %1226 = vmatpush1.msra.mxu0 0.0
  %1227 = vmatprep.subr.mxu0 0.0
  %1228 = vmatpush1.msra.mxu0 0.0
  %1229 = vmatprep.subr.mxu0 0.0
  %1230 = vmatpush1.msra.mxu0 0.0
  %1231 = vmatprep.subr.mxu0 0.0
  %1232 = vmatpush1.msra.mxu0 0.0
  %1233 = vmatprep.subr.mxu0 0.0
  %1234 = vmatpush1.msra.mxu0 0.0
  %1235 = vmatprep.subr.mxu0 0.0
  %1236 = vmatpush1.msra.mxu0 0.0
  %1237 = vmatprep.subr.mxu0 0.0
  %1238 = vmatpush1.msra.mxu0 0.0
  %1239 = vmatprep.mubr.f32.mxu0 0.0
  %1240 = vmatmul.mubr.f32.gmra.mrb[0].mxu0 %v1158
  %v1241 = vpop.f32.mrb[0].mxu0
  %v1242 = vadd.f32 0.0, %v1241
  %v1243 = vpop.f32.mrb[0].mxu0
  %v1244 = vadd.f32 0.0, %v1243
  %1245 = vmatprep.mubr.f32.mxu0 0.0
  %1246 = vmatmul.mubr.f32.gmra.mrb[0].mxu0 %v1161
  %v1247 = vpop.f32.mrb[0].mxu0
  %v1248 = vadd.f32 0.0, %v1247
  %v1249 = vpop.f32.mrb[0].mxu0
  %v1250 = vadd.f32 0.0, %v1249
  %1251 = vdwg.mxu0
  %1252 = vmatprep.subr.mxu0 %v1173
  %1253 = vmatpush1.msra.mxu0 %v1170
  %1254 = vmatprep.subr.mxu0 0.0
  %1255 = vmatpush1.msra.mxu0 0.0
  %1256 = vmatprep.subr.mxu0 0.0
  %1257 = vmatpush1.msra.mxu0 0.0
  %1258 = vmatprep.subr.mxu0 0.0
  %1259 = vmatpush1.msra.mxu0 0.0
  %1260 = vmatprep.subr.mxu0 0.0
  %1261 = vmatpush1.msra.mxu0 0.0
  %1262 = vmatprep.subr.mxu0 0.0
  %1263 = vmatpush1.msra.mxu0 0.0
  %1264 = vmatprep.subr.mxu0 0.0
  %1265 = vmatpush1.msra.mxu0 0.0
  %1266 = vmatprep.subr.mxu0 0.0
  %1267 = vmatpush1.msra.mxu0 0.0
  %1268 = vmatprep.subr.mxu0 0.0
  %1269 = vmatpush1.msra.mxu0 0.0
  %1270 = vmatprep.subr.mxu0 0.0
  %1271 = vmatpush1.msra.mxu0 0.0
  %1272 = vmatprep.subr.mxu0 0.0
  %1273 = vmatpush1.msra.mxu0 0.0
  %1274 = vmatprep.subr.mxu0 0.0
  %1275 = vmatpush1.msra.mxu0 0.0
  %1276 = vmatprep.subr.mxu0 0.0
  %1277 = vmatpush1.msra.mxu0 0.0
  %1278 = vmatprep.subr.mxu0 0.0
  %1279 = vmatpush1.msra.mxu0 0.0
  %1280 = vmatprep.subr.mxu0 0.0
  %1281 = vmatpush1.msra.mxu0 0.0
  %1282 = vmatprep.subr.mxu0 0.0
  %1283 = vmatpush1.msra.mxu0 0.0
  %1284 = vmatprep.subr.mxu0 0.0
  %1285 = vmatpush1.msra.mxu0 0.0
  %1286 = vmatprep.subr.mxu0 0.0
  %1287 = vmatpush1.msra.mxu0 0.0
  %1288 = vmatprep.subr.mxu0 0.0
  %1289 = vmatpush1.msra.mxu0 0.0
  %1290 = vmatprep.subr.mxu0 0.0
  %1291 = vmatpush1.msra.mxu0 0.0
  %1292 = vmatprep.subr.mxu0 0.0
  %1293 = vmatpush1.msra.mxu0 0.0
  %1294 = vmatprep.subr.mxu0 0.0
  %1295 = vmatpush1.msra.mxu0 0.0
  %1296 = vmatprep.subr.mxu0 0.0
  %1297 = vmatpush1.msra.mxu0 0.0
  %1298 = vmatprep.subr.mxu0 0.0
  %1299 = vmatpush1.msra.mxu0 0.0
  %1300 = vmatprep.subr.mxu0 0.0
  %1301 = vmatpush1.msra.mxu0 0.0
  %1302 = vmatprep.subr.mxu0 0.0
  %1303 = vmatpush1.msra.mxu0 0.0
  %1304 = vmatprep.subr.mxu0 0.0
  %1305 = vmatpush1.msra.mxu0 0.0
  %1306 = vmatprep.subr.mxu0 0.0
  %1307 = vmatpush1.msra.mxu0 0.0
  %1308 = vmatprep.subr.mxu0 0.0
  %1309 = vmatpush1.msra.mxu0 0.0
  %1310 = vmatprep.subr.mxu0 0.0
  %1311 = vmatpush1.msra.mxu0 0.0
  %1312 = vmatprep.subr.mxu0 0.0
  %1313 = vmatpush1.msra.mxu0 0.0
  %1314 = vmatprep.subr.mxu0 0.0
  %1315 = vmatpush1.msra.mxu0 0.0
  %1316 = vmatprep.mubr.f32.mxu0 0.0
  %1317 = vmatmul.mubr.f32.gmra.mrb[0].mxu0 %v1158
  %v1318 = vpop.f32.mrb[0].mxu0
  %v1319 = vadd.f32 0.0, %v1318
  %v1320 = vpop.f32.mrb[0].mxu0
  %v1321 = vadd.f32 0.0, %v1320
  %1322 = vmatprep.mubr.f32.mxu0 0.0
  %1323 = vmatmul.mubr.f32.gmra.mrb[0].mxu0 %v1161
  %v1324 = vpop.f32.mrb[0].mxu0
  %v1325 = vadd.f32 0.0, %v1324
  %v1326 = vpop.f32.mrb[0].mxu0
  %v1327 = vadd.f32 0.0, %v1326
  %1328 = vdwg.mxu0
  %v1329 = vadd.f32 %v1105, %v1242
  %v1330 = vadd.f32 %v1106, %v1244
  %v1331 = vadd.f32 %v1107, %v1319
  %v1332 = vadd.f32 %v1108, %v1321
  %v1333 = vadd.f32 %v1109, %v1248
  %v1334 = vadd.f32 %v1110, %v1250
  %v1335 = vadd.f32 %v1111, %v1325
  %v1336 = vadd.f32 %v1112, %v1327
  %1337 = vrot.lane.b32.xlu0 %v37, 113
  %v1338 = vpop.permute.xlu0 %1337
  %1339 = vrot.lane.b32.xlu0 %v41, 113
  %v1340 = vpop.permute.xlu0 %1339
  %1341 = vrot.lane.b32.xlu0 %v38, 113
  %v1342 = vpop.permute.xlu0 %1341
  %1343 = vrot.lane.b32.xlu0 %v42, 113
  %v1344 = vpop.permute.xlu0 %1343
  %vm1345 = vcmp.lt.s32.totalorder %v54, 113
  %v1346 = vsel %vm1345, %v1342, %v1344
  %v1347 = vsel %vm1345, %v1340, %v1342
  %v1348 = vsel %vm1345, %v1338, %v1340
  %v1349 = vsel %vm1345, %v1344, %v1338
  %v1350 = vlaneseq
  %v1351 = vshrl.u32 %v1350, 7
  %v1352 = vsub.s32 6, %v1351
  %v1353 = vrot.slane %v29, %v1352
  %v1354 = vlaneseq
  %v1355 = vshrl.u32 %v1354, 7
  %v1356 = vsub.s32 6, %v1355
  %v1357 = vrot.slane %v30, %v1356
  %v1358 = vlaneseq
  %v1359 = vshrl.u32 %v1358, 7
  %v1360 = vsub.s32 6, %v1359
  %v1361 = vrot.slane %v31, %v1360
  %v1362 = vlaneseq
  %v1363 = vshrl.u32 %v1362, 7
  %v1364 = vsub.s32 6, %v1363
  %v1365 = vrot.slane %v32, %v1364
  %v1366 = vmul.f32 %v1348, %v1353
  %v1367 = vmul.f32 %v1347, %v1357
  %v1368 = vmul.f32 %v1346, %v1361
  %v1369 = vmul.f32 %v1349, %v1365
  %v1370 = vadd.f32 %v1146, %v1366
  %v1371 = vadd.f32 %v1147, %v1367
  %v1372 = vadd.f32 %v1148, %v1368
  %v1373 = vadd.f32 %v1149, %v1369
  %v1374 = vmax.f32 %v1366, 0.0
  %v1375 = vmax.f32 %v1367, 0.0
  %v1376 = vmax.f32 %v1368, 0.0
  %v1377 = vmax.f32 %v1369, 0.0
  %s1378 = scalar_lea.vmem %s2, 96
  %v1379 = vld [vmem:[%s1378] sm:$0xff]
  %v1380 = vld [vmem:[%s1378 + $0x8] sm:$0xf]
  %v1382 = vsel %vm130, %v1379, 0
  %v1385 = vsel %vm130, %v1380, 0
  %v1388 = vsel %vm137, %v1374, 0
  %v1391 = vsel %vm137, %v1375, 0
  %v1394 = vsel %vm137, %v1376, 0
  %v1397 = vsel %vm137, %v1377, 0
  %1399 = vmatprep.subr.mxu0 %v1391
  %1400 = vmatpush1.msra.mxu0 %v1388
  %1401 = vmatprep.subr.mxu0 0.0
  %1402 = vmatpush1.msra.mxu0 0.0
  %1403 = vmatprep.subr.mxu0 0.0
  %1404 = vmatpush1.msra.mxu0 0.0
  %1405 = vmatprep.subr.mxu0 0.0
  %1406 = vmatpush1.msra.mxu0 0.0
  %1407 = vmatprep.subr.mxu0 0.0
  %1408 = vmatpush1.msra.mxu0 0.0
  %1409 = vmatprep.subr.mxu0 0.0
  %1410 = vmatpush1.msra.mxu0 0.0
  %1411 = vmatprep.subr.mxu0 0.0
  %1412 = vmatpush1.msra.mxu0 0.0
  %1413 = vmatprep.subr.mxu0 0.0
  %1414 = vmatpush1.msra.mxu0 0.0
  %1415 = vmatprep.subr.mxu0 0.0
  %1416 = vmatpush1.msra.mxu0 0.0
  %1417 = vmatprep.subr.mxu0 0.0
  %1418 = vmatpush1.msra.mxu0 0.0
  %1419 = vmatprep.subr.mxu0 0.0
  %1420 = vmatpush1.msra.mxu0 0.0
  %1421 = vmatprep.subr.mxu0 0.0
  %1422 = vmatpush1.msra.mxu0 0.0
  %1423 = vmatprep.subr.mxu0 0.0
  %1424 = vmatpush1.msra.mxu0 0.0
  %1425 = vmatprep.subr.mxu0 0.0
  %1426 = vmatpush1.msra.mxu0 0.0
  %1427 = vmatprep.subr.mxu0 0.0
  %1428 = vmatpush1.msra.mxu0 0.0
  %1429 = vmatprep.subr.mxu0 0.0
  %1430 = vmatpush1.msra.mxu0 0.0
  %1431 = vmatprep.subr.mxu0 0.0
  %1432 = vmatpush1.msra.mxu0 0.0
  %1433 = vmatprep.subr.mxu0 0.0
  %1434 = vmatpush1.msra.mxu0 0.0
  %1435 = vmatprep.subr.mxu0 0.0
  %1436 = vmatpush1.msra.mxu0 0.0
  %1437 = vmatprep.subr.mxu0 0.0
  %1438 = vmatpush1.msra.mxu0 0.0
  %1439 = vmatprep.subr.mxu0 0.0
  %1440 = vmatpush1.msra.mxu0 0.0
  %1441 = vmatprep.subr.mxu0 0.0
  %1442 = vmatpush1.msra.mxu0 0.0
  %1443 = vmatprep.subr.mxu0 0.0
  %1444 = vmatpush1.msra.mxu0 0.0
  %1445 = vmatprep.subr.mxu0 0.0
  %1446 = vmatpush1.msra.mxu0 0.0
  %1447 = vmatprep.subr.mxu0 0.0
  %1448 = vmatpush1.msra.mxu0 0.0
  %1449 = vmatprep.subr.mxu0 0.0
  %1450 = vmatpush1.msra.mxu0 0.0
  %1451 = vmatprep.subr.mxu0 0.0
  %1452 = vmatpush1.msra.mxu0 0.0
  %1453 = vmatprep.subr.mxu0 0.0
  %1454 = vmatpush1.msra.mxu0 0.0
  %1455 = vmatprep.subr.mxu0 0.0
  %1456 = vmatpush1.msra.mxu0 0.0
  %1457 = vmatprep.subr.mxu0 0.0
  %1458 = vmatpush1.msra.mxu0 0.0
  %1459 = vmatprep.subr.mxu0 0.0
  %1460 = vmatpush1.msra.mxu0 0.0
  %1461 = vmatprep.subr.mxu0 0.0
  %1462 = vmatpush1.msra.mxu0 0.0
  %1463 = vmatprep.mubr.f32.mxu0 0.0
  %1464 = vmatmul.mubr.f32.gmra.mrb[0].mxu0 %v1382
  %v1465 = vpop.f32.mrb[0].mxu0
  %v1466 = vadd.f32 0.0, %v1465
  %v1467 = vpop.f32.mrb[0].mxu0
  %v1468 = vadd.f32 0.0, %v1467
  %1469 = vmatprep.mubr.f32.mxu0 0.0
  %1470 = vmatmul.mubr.f32.gmra.mrb[0].mxu0 %v1385
  %v1471 = vpop.f32.mrb[0].mxu0
  %v1472 = vadd.f32 0.0, %v1471
  %v1473 = vpop.f32.mrb[0].mxu0
  %v1474 = vadd.f32 0.0, %v1473
  %1475 = vdwg.mxu0
  %1476 = vmatprep.subr.mxu0 %v1397
  %1477 = vmatpush1.msra.mxu0 %v1394
  %1478 = vmatprep.subr.mxu0 0.0
  %1479 = vmatpush1.msra.mxu0 0.0
  %1480 = vmatprep.subr.mxu0 0.0
  %1481 = vmatpush1.msra.mxu0 0.0
  %1482 = vmatprep.subr.mxu0 0.0
  %1483 = vmatpush1.msra.mxu0 0.0
  %1484 = vmatprep.subr.mxu0 0.0
  %1485 = vmatpush1.msra.mxu0 0.0
  %1486 = vmatprep.subr.mxu0 0.0
  %1487 = vmatpush1.msra.mxu0 0.0
  %1488 = vmatprep.subr.mxu0 0.0
  %1489 = vmatpush1.msra.mxu0 0.0
  %1490 = vmatprep.subr.mxu0 0.0
  %1491 = vmatpush1.msra.mxu0 0.0
  %1492 = vmatprep.subr.mxu0 0.0
  %1493 = vmatpush1.msra.mxu0 0.0
  %1494 = vmatprep.subr.mxu0 0.0
  %1495 = vmatpush1.msra.mxu0 0.0
  %1496 = vmatprep.subr.mxu0 0.0
  %1497 = vmatpush1.msra.mxu0 0.0
  %1498 = vmatprep.subr.mxu0 0.0
  %1499 = vmatpush1.msra.mxu0 0.0
  %1500 = vmatprep.subr.mxu0 0.0
  %1501 = vmatpush1.msra.mxu0 0.0
  %1502 = vmatprep.subr.mxu0 0.0
  %1503 = vmatpush1.msra.mxu0 0.0
  %1504 = vmatprep.subr.mxu0 0.0
  %1505 = vmatpush1.msra.mxu0 0.0
  %1506 = vmatprep.subr.mxu0 0.0
  %1507 = vmatpush1.msra.mxu0 0.0
  %1508 = vmatprep.subr.mxu0 0.0
  %1509 = vmatpush1.msra.mxu0 0.0
  %1510 = vmatprep.subr.mxu0 0.0
  %1511 = vmatpush1.msra.mxu0 0.0
  %1512 = vmatprep.subr.mxu0 0.0
  %1513 = vmatpush1.msra.mxu0 0.0
  %1514 = vmatprep.subr.mxu0 0.0
  %1515 = vmatpush1.msra.mxu0 0.0
  %1516 = vmatprep.subr.mxu0 0.0
  %1517 = vmatpush1.msra.mxu0 0.0
  %1518 = vmatprep.subr.mxu0 0.0
  %1519 = vmatpush1.msra.mxu0 0.0
  %1520 = vmatprep.subr.mxu0 0.0
  %1521 = vmatpush1.msra.mxu0 0.0
  %1522 = vmatprep.subr.mxu0 0.0
  %1523 = vmatpush1.msra.mxu0 0.0
  %1524 = vmatprep.subr.mxu0 0.0
  %1525 = vmatpush1.msra.mxu0 0.0
  %1526 = vmatprep.subr.mxu0 0.0
  %1527 = vmatpush1.msra.mxu0 0.0
  %1528 = vmatprep.subr.mxu0 0.0
  %1529 = vmatpush1.msra.mxu0 0.0
  %1530 = vmatprep.subr.mxu0 0.0
  %1531 = vmatpush1.msra.mxu0 0.0
  %1532 = vmatprep.subr.mxu0 0.0
  %1533 = vmatpush1.msra.mxu0 0.0
  %1534 = vmatprep.subr.mxu0 0.0
  %1535 = vmatpush1.msra.mxu0 0.0
  %1536 = vmatprep.subr.mxu0 0.0
  %1537 = vmatpush1.msra.mxu0 0.0
  %1538 = vmatprep.subr.mxu0 0.0
  %1539 = vmatpush1.msra.mxu0 0.0
  %1540 = vmatprep.mubr.f32.mxu0 0.0
  %1541 = vmatmul.mubr.f32.gmra.mrb[0].mxu0 %v1382
  %v1542 = vpop.f32.mrb[0].mxu0
  %v1543 = vadd.f32 0.0, %v1542
  %v1544 = vpop.f32.mrb[0].mxu0
  %v1545 = vadd.f32 0.0, %v1544
  %1546 = vmatprep.mubr.f32.mxu0 0.0
  %1547 = vmatmul.mubr.f32.gmra.mrb[0].mxu0 %v1385
  %v1548 = vpop.f32.mrb[0].mxu0
  %v1549 = vadd.f32 0.0, %v1548
  %v1550 = vpop.f32.mrb[0].mxu0
  %v1551 = vadd.f32 0.0, %v1550
  %1552 = vdwg.mxu0
  %v1553 = vadd.f32 %v1329, %v1466
  %v1554 = vadd.f32 %v1330, %v1468
  %v1555 = vadd.f32 %v1331, %v1543
  %v1556 = vadd.f32 %v1332, %v1545
  %v1557 = vadd.f32 %v1333, %v1472
  %v1558 = vadd.f32 %v1334, %v1474
  %v1559 = vadd.f32 %v1335, %v1549
  %v1560 = vadd.f32 %v1336, %v1551
  %1561 = vrot.lane.b32.xlu0 %v37, 112
  %v1562 = vpop.permute.xlu0 %1561
  %1563 = vrot.lane.b32.xlu0 %v41, 112
  %v1564 = vpop.permute.xlu0 %1563
  %1565 = vrot.lane.b32.xlu0 %v38, 112
  %v1566 = vpop.permute.xlu0 %1565
  %1567 = vrot.lane.b32.xlu0 %v42, 112
  %v1568 = vpop.permute.xlu0 %1567
  %vm1569 = vcmp.lt.s32.totalorder %v54, 112
  %v1570 = vsel %vm1569, %v1566, %v1568
  %v1571 = vsel %vm1569, %v1564, %v1566
  %v1572 = vsel %vm1569, %v1562, %v1564
  %v1573 = vsel %vm1569, %v1568, %v1562
  %v1574 = vlaneseq
  %v1575 = vshrl.u32 %v1574, 7
  %v1576 = vsub.s32 7, %v1575
  %v1577 = vrot.slane %v29, %v1576
  %v1578 = vlaneseq
  %v1579 = vshrl.u32 %v1578, 7
  %v1580 = vsub.s32 7, %v1579
  %v1581 = vrot.slane %v30, %v1580
  %v1582 = vlaneseq
  %v1583 = vshrl.u32 %v1582, 7
  %v1584 = vsub.s32 7, %v1583
  %v1585 = vrot.slane %v31, %v1584
  %v1586 = vlaneseq
  %v1587 = vshrl.u32 %v1586, 7
  %v1588 = vsub.s32 7, %v1587
  %v1589 = vrot.slane %v32, %v1588
  %v1590 = vmul.f32 %v1572, %v1577
  %v1591 = vmul.f32 %v1571, %v1581
  %v1592 = vmul.f32 %v1570, %v1585
  %v1593 = vmul.f32 %v1573, %v1589
  %v1594 = vadd.f32 %v1370, %v1590
  %v1595 = vadd.f32 %v1371, %v1591
  %v1596 = vadd.f32 %v1372, %v1592
  %v1597 = vadd.f32 %v1373, %v1593
  %v1598 = vmax.f32 %v1590, 0.0
  %v1599 = vmax.f32 %v1591, 0.0
  %v1600 = vmax.f32 %v1592, 0.0
  %v1601 = vmax.f32 %v1593, 0.0
  %s1602 = scalar_lea.vmem %s2, 112
  %v1603 = vld [vmem:[%s1602] sm:$0xff]
  %v1604 = vld [vmem:[%s1602 + $0x8] sm:$0xf]
  %v1606 = vsel %vm130, %v1603, 0
  %v1609 = vsel %vm130, %v1604, 0
  %v1612 = vsel %vm137, %v1598, 0
  %v1615 = vsel %vm137, %v1599, 0
  %v1618 = vsel %vm137, %v1600, 0
  %v1621 = vsel %vm137, %v1601, 0
  %1623 = vmatprep.subr.mxu0 %v1615
  %1624 = vmatpush1.msra.mxu0 %v1612
  %1625 = vmatprep.subr.mxu0 0.0
  %1626 = vmatpush1.msra.mxu0 0.0
  %1627 = vmatprep.subr.mxu0 0.0
  %1628 = vmatpush1.msra.mxu0 0.0
  %1629 = vmatprep.subr.mxu0 0.0
  %1630 = vmatpush1.msra.mxu0 0.0
  %1631 = vmatprep.subr.mxu0 0.0
  %1632 = vmatpush1.msra.mxu0 0.0
  %1633 = vmatprep.subr.mxu0 0.0
  %1634 = vmatpush1.msra.mxu0 0.0
  %1635 = vmatprep.subr.mxu0 0.0
  %1636 = vmatpush1.msra.mxu0 0.0
  %1637 = vmatprep.subr.mxu0 0.0
  %1638 = vmatpush1.msra.mxu0 0.0
  %1639 = vmatprep.subr.mxu0 0.0
  %1640 = vmatpush1.msra.mxu0 0.0
  %1641 = vmatprep.subr.mxu0 0.0
  %1642 = vmatpush1.msra.mxu0 0.0
  %1643 = vmatprep.subr.mxu0 0.0
  %1644 = vmatpush1.msra.mxu0 0.0
  %1645 = vmatprep.subr.mxu0 0.0
  %1646 = vmatpush1.msra.mxu0 0.0
  %1647 = vmatprep.subr.mxu0 0.0
  %1648 = vmatpush1.msra.mxu0 0.0
  %1649 = vmatprep.subr.mxu0 0.0
  %1650 = vmatpush1.msra.mxu0 0.0
  %1651 = vmatprep.subr.mxu0 0.0
  %1652 = vmatpush1.msra.mxu0 0.0
  %1653 = vmatprep.subr.mxu0 0.0
  %1654 = vmatpush1.msra.mxu0 0.0
  %1655 = vmatprep.subr.mxu0 0.0
  %1656 = vmatpush1.msra.mxu0 0.0
  %1657 = vmatprep.subr.mxu0 0.0
  %1658 = vmatpush1.msra.mxu0 0.0
  %1659 = vmatprep.subr.mxu0 0.0
  %1660 = vmatpush1.msra.mxu0 0.0
  %1661 = vmatprep.subr.mxu0 0.0
  %1662 = vmatpush1.msra.mxu0 0.0
  %1663 = vmatprep.subr.mxu0 0.0
  %1664 = vmatpush1.msra.mxu0 0.0
  %1665 = vmatprep.subr.mxu0 0.0
  %1666 = vmatpush1.msra.mxu0 0.0
  %1667 = vmatprep.subr.mxu0 0.0
  %1668 = vmatpush1.msra.mxu0 0.0
  %1669 = vmatprep.subr.mxu0 0.0
  %1670 = vmatpush1.msra.mxu0 0.0
  %1671 = vmatprep.subr.mxu0 0.0
  %1672 = vmatpush1.msra.mxu0 0.0
  %1673 = vmatprep.subr.mxu0 0.0
  %1674 = vmatpush1.msra.mxu0 0.0
  %1675 = vmatprep.subr.mxu0 0.0
  %1676 = vmatpush1.msra.mxu0 0.0
  %1677 = vmatprep.subr.mxu0 0.0
  %1678 = vmatpush1.msra.mxu0 0.0
  %1679 = vmatprep.subr.mxu0 0.0
  %1680 = vmatpush1.msra.mxu0 0.0
  %1681 = vmatprep.subr.mxu0 0.0
  %1682 = vmatpush1.msra.mxu0 0.0
  %1683 = vmatprep.subr.mxu0 0.0
  %1684 = vmatpush1.msra.mxu0 0.0
  %1685 = vmatprep.subr.mxu0 0.0
  %1686 = vmatpush1.msra.mxu0 0.0
  %1687 = vmatprep.mubr.f32.mxu0 0.0
  %1688 = vmatmul.mubr.f32.gmra.mrb[0].mxu0 %v1606
  %v1689 = vpop.f32.mrb[0].mxu0
  %v1690 = vadd.f32 0.0, %v1689
  %v1691 = vpop.f32.mrb[0].mxu0
  %v1692 = vadd.f32 0.0, %v1691
  %1693 = vmatprep.mubr.f32.mxu0 0.0
  %1694 = vmatmul.mubr.f32.gmra.mrb[0].mxu0 %v1609
  %v1695 = vpop.f32.mrb[0].mxu0
  %v1696 = vadd.f32 0.0, %v1695
  %v1697 = vpop.f32.mrb[0].mxu0
  %v1698 = vadd.f32 0.0, %v1697
  %1699 = vdwg.mxu0
  %1700 = vmatprep.subr.mxu0 %v1621
  %1701 = vmatpush1.msra.mxu0 %v1618
  %1702 = vmatprep.subr.mxu0 0.0
  %1703 = vmatpush1.msra.mxu0 0.0
  %1704 = vmatprep.subr.mxu0 0.0
  %1705 = vmatpush1.msra.mxu0 0.0
  %1706 = vmatprep.subr.mxu0 0.0
  %1707 = vmatpush1.msra.mxu0 0.0
  %1708 = vmatprep.subr.mxu0 0.0
  %1709 = vmatpush1.msra.mxu0 0.0
  %1710 = vmatprep.subr.mxu0 0.0
  %1711 = vmatpush1.msra.mxu0 0.0
  %1712 = vmatprep.subr.mxu0 0.0
  %1713 = vmatpush1.msra.mxu0 0.0
  %1714 = vmatprep.subr.mxu0 0.0
  %1715 = vmatpush1.msra.mxu0 0.0
  %1716 = vmatprep.subr.mxu0 0.0
  %1717 = vmatpush1.msra.mxu0 0.0
  %1718 = vmatprep.subr.mxu0 0.0
  %1719 = vmatpush1.msra.mxu0 0.0
  %1720 = vmatprep.subr.mxu0 0.0
  %1721 = vmatpush1.msra.mxu0 0.0
  %1722 = vmatprep.subr.mxu0 0.0
  %1723 = vmatpush1.msra.mxu0 0.0
  %1724 = vmatprep.subr.mxu0 0.0
  %1725 = vmatpush1.msra.mxu0 0.0
  %1726 = vmatprep.subr.mxu0 0.0
  %1727 = vmatpush1.msra.mxu0 0.0
  %1728 = vmatprep.subr.mxu0 0.0
  %1729 = vmatpush1.msra.mxu0 0.0
  %1730 = vmatprep.subr.mxu0 0.0
  %1731 = vmatpush1.msra.mxu0 0.0
  %1732 = vmatprep.subr.mxu0 0.0
  %1733 = vmatpush1.msra.mxu0 0.0
  %1734 = vmatprep.subr.mxu0 0.0
  %1735 = vmatpush1.msra.mxu0 0.0
  %1736 = vmatprep.subr.mxu0 0.0
  %1737 = vmatpush1.msra.mxu0 0.0
  %1738 = vmatprep.subr.mxu0 0.0
  %1739 = vmatpush1.msra.mxu0 0.0
  %1740 = vmatprep.subr.mxu0 0.0
  %1741 = vmatpush1.msra.mxu0 0.0
  %1742 = vmatprep.subr.mxu0 0.0
  %1743 = vmatpush1.msra.mxu0 0.0
  %1744 = vmatprep.subr.mxu0 0.0
  %1745 = vmatpush1.msra.mxu0 0.0
  %1746 = vmatprep.subr.mxu0 0.0
  %1747 = vmatpush1.msra.mxu0 0.0
  %1748 = vmatprep.subr.mxu0 0.0
  %1749 = vmatpush1.msra.mxu0 0.0
  %1750 = vmatprep.subr.mxu0 0.0
  %1751 = vmatpush1.msra.mxu0 0.0
  %1752 = vmatprep.subr.mxu0 0.0
  %1753 = vmatpush1.msra.mxu0 0.0
  %1754 = vmatprep.subr.mxu0 0.0
  %1755 = vmatpush1.msra.mxu0 0.0
  %1756 = vmatprep.subr.mxu0 0.0
  %1757 = vmatpush1.msra.mxu0 0.0
  %1758 = vmatprep.subr.mxu0 0.0
  %1759 = vmatpush1.msra.mxu0 0.0
  %1760 = vmatprep.subr.mxu0 0.0
  %1761 = vmatpush1.msra.mxu0 0.0
  %1762 = vmatprep.subr.mxu0 0.0
  %1763 = vmatpush1.msra.mxu0 0.0
  %1764 = vmatprep.mubr.f32.mxu0 0.0
  %1765 = vmatmul.mubr.f32.gmra.mrb[0].mxu0 %v1606
  %v1766 = vpop.f32.mrb[0].mxu0
  %v1767 = vadd.f32 0.0, %v1766
  %v1768 = vpop.f32.mrb[0].mxu0
  %v1769 = vadd.f32 0.0, %v1768
  %1770 = vmatprep.mubr.f32.mxu0 0.0
  %1771 = vmatmul.mubr.f32.gmra.mrb[0].mxu0 %v1609
  %v1772 = vpop.f32.mrb[0].mxu0
  %v1773 = vadd.f32 0.0, %v1772
  %v1774 = vpop.f32.mrb[0].mxu0
  %v1775 = vadd.f32 0.0, %v1774
  %1776 = vdwg.mxu0
  %v1777 = vadd.f32 %v1553, %v1690
  %v1778 = vadd.f32 %v1554, %v1692
  %v1779 = vadd.f32 %v1555, %v1767
  %v1780 = vadd.f32 %v1556, %v1769
  %v1781 = vadd.f32 %v1557, %v1696
  %v1782 = vadd.f32 %v1558, %v1698
  %v1783 = vadd.f32 %v1559, %v1773
  %v1784 = vadd.f32 %v1560, %v1775
  %1785 = vrot.lane.b32.xlu0 %v37, 111
  %v1786 = vpop.permute.xlu0 %1785
  %1787 = vrot.lane.b32.xlu0 %v41, 111
  %v1788 = vpop.permute.xlu0 %1787
  %1789 = vrot.lane.b32.xlu0 %v38, 111
  %v1790 = vpop.permute.xlu0 %1789
  %1791 = vrot.lane.b32.xlu0 %v42, 111
  %v1792 = vpop.permute.xlu0 %1791
  %vm1793 = vcmp.lt.s32.totalorder %v54, 111
  %v1794 = vsel %vm1793, %v1790, %v1792
  %v1795 = vsel %vm1793, %v1788, %v1790
  %v1796 = vsel %vm1793, %v1786, %v1788
  %v1797 = vsel %vm1793, %v1792, %v1786
  %v1798 = vlaneseq
  %v1799 = vshrl.u32 %v1798, 7
  %v1800 = vsub.s32 0, %v1799
  %v1801 = vrot.slane %v33, %v1800
  %v1802 = vlaneseq
  %v1803 = vshrl.u32 %v1802, 7
  %v1804 = vsub.s32 0, %v1803
  %v1805 = vrot.slane %v34, %v1804
  %v1806 = vlaneseq
  %v1807 = vshrl.u32 %v1806, 7
  %v1808 = vsub.s32 0, %v1807
  %v1809 = vrot.slane %v35, %v1808
  %v1810 = vlaneseq
  %v1811 = vshrl.u32 %v1810, 7
  %v1812 = vsub.s32 0, %v1811
  %v1813 = vrot.slane %v36, %v1812
  %v1814 = vmul.f32 %v1796, %v1801
  %v1815 = vmul.f32 %v1795, %v1805
  %v1816 = vmul.f32 %v1794, %v1809
  %v1817 = vmul.f32 %v1797, %v1813
  %v1818 = vadd.f32 %v1594, %v1814
  %v1819 = vadd.f32 %v1595, %v1815
  %v1820 = vadd.f32 %v1596, %v1816
  %v1821 = vadd.f32 %v1597, %v1817
  %v1822 = vmax.f32 %v1814, 0.0
  %v1823 = vmax.f32 %v1815, 0.0
  %v1824 = vmax.f32 %v1816, 0.0
  %v1825 = vmax.f32 %v1817, 0.0
  %s1826 = scalar_lea.vmem %s2, 128
  %v1827 = vld [vmem:[%s1826] sm:$0xff]
  %v1828 = vld [vmem:[%s1826 + $0x8] sm:$0xf]
  %v1830 = vsel %vm130, %v1827, 0
  %v1833 = vsel %vm130, %v1828, 0
  %v1836 = vsel %vm137, %v1822, 0
  %v1839 = vsel %vm137, %v1823, 0
  %v1842 = vsel %vm137, %v1824, 0
  %v1845 = vsel %vm137, %v1825, 0
  %1847 = vmatprep.subr.mxu0 %v1839
  %1848 = vmatpush1.msra.mxu0 %v1836
  %1849 = vmatprep.subr.mxu0 0.0
  %1850 = vmatpush1.msra.mxu0 0.0
  %1851 = vmatprep.subr.mxu0 0.0
  %1852 = vmatpush1.msra.mxu0 0.0
  %1853 = vmatprep.subr.mxu0 0.0
  %1854 = vmatpush1.msra.mxu0 0.0
  %1855 = vmatprep.subr.mxu0 0.0
  %1856 = vmatpush1.msra.mxu0 0.0
  %1857 = vmatprep.subr.mxu0 0.0
  %1858 = vmatpush1.msra.mxu0 0.0
  %1859 = vmatprep.subr.mxu0 0.0
  %1860 = vmatpush1.msra.mxu0 0.0
  %1861 = vmatprep.subr.mxu0 0.0
  %1862 = vmatpush1.msra.mxu0 0.0
  %1863 = vmatprep.subr.mxu0 0.0
  %1864 = vmatpush1.msra.mxu0 0.0
  %1865 = vmatprep.subr.mxu0 0.0
  %1866 = vmatpush1.msra.mxu0 0.0
  %1867 = vmatprep.subr.mxu0 0.0
  %1868 = vmatpush1.msra.mxu0 0.0
  %1869 = vmatprep.subr.mxu0 0.0
  %1870 = vmatpush1.msra.mxu0 0.0
  %1871 = vmatprep.subr.mxu0 0.0
  %1872 = vmatpush1.msra.mxu0 0.0
  %1873 = vmatprep.subr.mxu0 0.0
  %1874 = vmatpush1.msra.mxu0 0.0
  %1875 = vmatprep.subr.mxu0 0.0
  %1876 = vmatpush1.msra.mxu0 0.0
  %1877 = vmatprep.subr.mxu0 0.0
  %1878 = vmatpush1.msra.mxu0 0.0
  %1879 = vmatprep.subr.mxu0 0.0
  %1880 = vmatpush1.msra.mxu0 0.0
  %1881 = vmatprep.subr.mxu0 0.0
  %1882 = vmatpush1.msra.mxu0 0.0
  %1883 = vmatprep.subr.mxu0 0.0
  %1884 = vmatpush1.msra.mxu0 0.0
  %1885 = vmatprep.subr.mxu0 0.0
  %1886 = vmatpush1.msra.mxu0 0.0
  %1887 = vmatprep.subr.mxu0 0.0
  %1888 = vmatpush1.msra.mxu0 0.0
  %1889 = vmatprep.subr.mxu0 0.0
  %1890 = vmatpush1.msra.mxu0 0.0
  %1891 = vmatprep.subr.mxu0 0.0
  %1892 = vmatpush1.msra.mxu0 0.0
  %1893 = vmatprep.subr.mxu0 0.0
  %1894 = vmatpush1.msra.mxu0 0.0
  %1895 = vmatprep.subr.mxu0 0.0
  %1896 = vmatpush1.msra.mxu0 0.0
  %1897 = vmatprep.subr.mxu0 0.0
  %1898 = vmatpush1.msra.mxu0 0.0
  %1899 = vmatprep.subr.mxu0 0.0
  %1900 = vmatpush1.msra.mxu0 0.0
  %1901 = vmatprep.subr.mxu0 0.0
  %1902 = vmatpush1.msra.mxu0 0.0
  %1903 = vmatprep.subr.mxu0 0.0
  %1904 = vmatpush1.msra.mxu0 0.0
  %1905 = vmatprep.subr.mxu0 0.0
  %1906 = vmatpush1.msra.mxu0 0.0
  %1907 = vmatprep.subr.mxu0 0.0
  %1908 = vmatpush1.msra.mxu0 0.0
  %1909 = vmatprep.subr.mxu0 0.0
  %1910 = vmatpush1.msra.mxu0 0.0
  %1911 = vmatprep.mubr.f32.mxu0 0.0
  %1912 = vmatmul.mubr.f32.gmra.mrb[0].mxu0 %v1830
  %v1913 = vpop.f32.mrb[0].mxu0
  %v1914 = vadd.f32 0.0, %v1913
  %v1915 = vpop.f32.mrb[0].mxu0
  %v1916 = vadd.f32 0.0, %v1915
  %1917 = vmatprep.mubr.f32.mxu0 0.0
  %1918 = vmatmul.mubr.f32.gmra.mrb[0].mxu0 %v1833
  %v1919 = vpop.f32.mrb[0].mxu0
  %v1920 = vadd.f32 0.0, %v1919
  %v1921 = vpop.f32.mrb[0].mxu0
  %v1922 = vadd.f32 0.0, %v1921
  %1923 = vdwg.mxu0
  %1924 = vmatprep.subr.mxu0 %v1845
  %1925 = vmatpush1.msra.mxu0 %v1842
  %1926 = vmatprep.subr.mxu0 0.0
  %1927 = vmatpush1.msra.mxu0 0.0
  %1928 = vmatprep.subr.mxu0 0.0
  %1929 = vmatpush1.msra.mxu0 0.0
  %1930 = vmatprep.subr.mxu0 0.0
  %1931 = vmatpush1.msra.mxu0 0.0
  %1932 = vmatprep.subr.mxu0 0.0
  %1933 = vmatpush1.msra.mxu0 0.0
  %1934 = vmatprep.subr.mxu0 0.0
  %1935 = vmatpush1.msra.mxu0 0.0
  %1936 = vmatprep.subr.mxu0 0.0
  %1937 = vmatpush1.msra.mxu0 0.0
  %1938 = vmatprep.subr.mxu0 0.0
  %1939 = vmatpush1.msra.mxu0 0.0
  %1940 = vmatprep.subr.mxu0 0.0
  %1941 = vmatpush1.msra.mxu0 0.0
  %1942 = vmatprep.subr.mxu0 0.0
  %1943 = vmatpush1.msra.mxu0 0.0
  %1944 = vmatprep.subr.mxu0 0.0
  %1945 = vmatpush1.msra.mxu0 0.0
  %1946 = vmatprep.subr.mxu0 0.0
  %1947 = vmatpush1.msra.mxu0 0.0
  %1948 = vmatprep.subr.mxu0 0.0
  %1949 = vmatpush1.msra.mxu0 0.0
  %1950 = vmatprep.subr.mxu0 0.0
  %1951 = vmatpush1.msra.mxu0 0.0
  %1952 = vmatprep.subr.mxu0 0.0
  %1953 = vmatpush1.msra.mxu0 0.0
  %1954 = vmatprep.subr.mxu0 0.0
  %1955 = vmatpush1.msra.mxu0 0.0
  %1956 = vmatprep.subr.mxu0 0.0
  %1957 = vmatpush1.msra.mxu0 0.0
  %1958 = vmatprep.subr.mxu0 0.0
  %1959 = vmatpush1.msra.mxu0 0.0
  %1960 = vmatprep.subr.mxu0 0.0
  %1961 = vmatpush1.msra.mxu0 0.0
  %1962 = vmatprep.subr.mxu0 0.0
  %1963 = vmatpush1.msra.mxu0 0.0
  %1964 = vmatprep.subr.mxu0 0.0
  %1965 = vmatpush1.msra.mxu0 0.0
  %1966 = vmatprep.subr.mxu0 0.0
  %1967 = vmatpush1.msra.mxu0 0.0
  %1968 = vmatprep.subr.mxu0 0.0
  %1969 = vmatpush1.msra.mxu0 0.0
  %1970 = vmatprep.subr.mxu0 0.0
  %1971 = vmatpush1.msra.mxu0 0.0
  %1972 = vmatprep.subr.mxu0 0.0
  %1973 = vmatpush1.msra.mxu0 0.0
  %1974 = vmatprep.subr.mxu0 0.0
  %1975 = vmatpush1.msra.mxu0 0.0
  %1976 = vmatprep.subr.mxu0 0.0
  %1977 = vmatpush1.msra.mxu0 0.0
  %1978 = vmatprep.subr.mxu0 0.0
  %1979 = vmatpush1.msra.mxu0 0.0
  %1980 = vmatprep.subr.mxu0 0.0
  %1981 = vmatpush1.msra.mxu0 0.0
  %1982 = vmatprep.subr.mxu0 0.0
  %1983 = vmatpush1.msra.mxu0 0.0
  %1984 = vmatprep.subr.mxu0 0.0
  %1985 = vmatpush1.msra.mxu0 0.0
  %1986 = vmatprep.subr.mxu0 0.0
  %1987 = vmatpush1.msra.mxu0 0.0
  %1988 = vmatprep.mubr.f32.mxu0 0.0
  %1989 = vmatmul.mubr.f32.gmra.mrb[0].mxu0 %v1830
  %v1990 = vpop.f32.mrb[0].mxu0
  %v1991 = vadd.f32 0.0, %v1990
  %v1992 = vpop.f32.mrb[0].mxu0
  %v1993 = vadd.f32 0.0, %v1992
  %1994 = vmatprep.mubr.f32.mxu0 0.0
  %1995 = vmatmul.mubr.f32.gmra.mrb[0].mxu0 %v1833
  %v1996 = vpop.f32.mrb[0].mxu0
  %v1997 = vadd.f32 0.0, %v1996
  %v1998 = vpop.f32.mrb[0].mxu0
  %v1999 = vadd.f32 0.0, %v1998
  %2000 = vdwg.mxu0
  %v2001 = vadd.f32 %v1777, %v1914
  %v2002 = vadd.f32 %v1778, %v1916
  %v2003 = vadd.f32 %v1779, %v1991
  %v2004 = vadd.f32 %v1780, %v1993
  %v2005 = vadd.f32 %v1781, %v1920
  %v2006 = vadd.f32 %v1782, %v1922
  %v2007 = vadd.f32 %v1783, %v1997
  %v2008 = vadd.f32 %v1784, %v1999
  %v2009 = vld [vmem:[%s3] sm:$0xff]
  %v2010 = vld [vmem:[%s3 + $0x8] sm:$0xf]
  %2012 = vset.pattern.permute.xlu0 0
  %2013 = vperm.xlu0 %2012, %v2009
  %v2014 = vpop.permute.xlu0 %2013
  %2017 = vset.pattern.permute.xlu0 0
  %2018 = vperm.xlu0 %2017, %v2010
  %v2019 = vpop.permute.xlu0 %2018
  %v2021 = vadd.f32 %v2001, %v2014
  %v2022 = vadd.f32 %v2002, %v2014
  %v2023 = vadd.f32 %v2003, %v2014
  %v2024 = vadd.f32 %v2004, %v2014
  %v2025 = vadd.f32 %v2005, %v2019
  %v2026 = vadd.f32 %v2006, %v2019
  %v2027 = vadd.f32 %v2007, %v2019
  %v2028 = vadd.f32 %v2008, %v2019
  %v2029 = vlaneseq
  %v2030 = vshrl.u32 %v2029, 7
  %v2031 = vsub.s32 1, %v2030
  %v2032 = vrot.slane %v33, %v2031
  %v2033 = vlaneseq
  %v2034 = vshrl.u32 %v2033, 7
  %v2035 = vsub.s32 1, %v2034
  %v2036 = vrot.slane %v34, %v2035
  %v2037 = vlaneseq
  %v2038 = vshrl.u32 %v2037, 7
  %v2039 = vsub.s32 1, %v2038
  %v2040 = vrot.slane %v35, %v2039
  %v2041 = vlaneseq
  %v2042 = vshrl.u32 %v2041, 7
  %v2043 = vsub.s32 1, %v2042
  %v2044 = vrot.slane %v36, %v2043
  %v2045 = vmul.f32 %v1818, %v2032
  %v2046 = vmul.f32 %v1819, %v2036
  %v2047 = vmul.f32 %v1820, %v2040
  %v2048 = vmul.f32 %v1821, %v2044
  %v2053 = vcombine.low %v2045, %v2046
  %v2054 = vcombine.low %v2047, %v2048
  %v2057 = vadd.f32 %v37, %v2053
  %v2058 = vadd.f32 %v38, %v2054
  %v2063 = vcombine.low %v2021, %v2022
  %v2064 = vcombine.low %v2023, %v2024
  %v2067 = vadd.f32 %v2057, %v2063
  %v2068 = vadd.f32 %v2058, %v2064
  %v2069 = vcombine.high %v2021, %v2022
  %v2070 = vcombine.high %v2023, %v2024
  %v2073 = vadd.f32 %v2057, %v2069
  %v2074 = vadd.f32 %v2058, %v2070
  %v2079 = vcombine.low %v2025, %v2026
  %v2080 = vcombine.low %v2027, %v2028
  %v2083 = vadd.f32 %v2057, %v2079
  %v2084 = vadd.f32 %v2058, %v2080
  %v2087 = vcombine.high %v2067, %v2067
  %v2088 = vcombine.high %v2068, %v2068
  %2091 = vrot.lane.b32.xlu0 %v2067, 17
  %v2092 = vpop.permute.xlu0 %2091
  %2093 = vrot.lane.b32.xlu0 %v2087, 17
  %v2094 = vpop.permute.xlu0 %2093
  %2095 = vrot.lane.b32.xlu0 %v2068, 17
  %v2096 = vpop.permute.xlu0 %2095
  %2097 = vrot.lane.b32.xlu0 %v2088, 17
  %v2098 = vpop.permute.xlu0 %2097
  %v2099 = vsel %vm55, %v2096, %v2098
  %v2100 = vsel %vm55, %v2094, %v2096
  %v2101 = vsel %vm55, %v2092, %v2094
  %v2102 = vsel %vm55, %v2098, %v2092
  %v2103 = vmul.f32 %v2102, %v63
  %v2104 = vmul.f32 %v2101, %v67
  %v2105 = vmul.f32 %v2100, %v71
  %v2106 = vmul.f32 %v2099, %v75
  %v2107 = vmax.f32 %v2103, 0.0
  %v2108 = vmax.f32 %v2104, 0.0
  %v2109 = vmax.f32 %v2105, 0.0
  %v2110 = vmax.f32 %v2106, 0.0
  %v2111 = vld [vmem:[%s4] sm:$0xff]
  %2112 = vrot.lane.b32.xlu0 %v2067, 16
  %v2113 = vpop.permute.xlu0 %2112
  %2114 = vrot.lane.b32.xlu0 %v2087, 16
  %v2115 = vpop.permute.xlu0 %2114
  %2116 = vrot.lane.b32.xlu0 %v2068, 16
  %v2117 = vpop.permute.xlu0 %2116
  %2118 = vrot.lane.b32.xlu0 %v2088, 16
  %v2119 = vpop.permute.xlu0 %2118
  %v2120 = vsel %vm94, %v2117, %v2119
  %v2121 = vsel %vm94, %v2115, %v2117
  %v2122 = vsel %vm94, %v2113, %v2115
  %v2123 = vsel %vm94, %v2119, %v2113
  %v2124 = vmul.f32 %v2123, %v102
  %v2125 = vmul.f32 %v2122, %v106
  %v2126 = vmul.f32 %v2121, %v110
  %v2127 = vmul.f32 %v2120, %v114
  %v2128 = vadd.f32 %v2103, %v2124
  %v2129 = vadd.f32 %v2104, %v2125
  %v2130 = vadd.f32 %v2105, %v2126
  %v2131 = vadd.f32 %v2106, %v2127
  %v2132 = vmax.f32 %v2124, 0.0
  %v2133 = vmax.f32 %v2125, 0.0
  %v2134 = vmax.f32 %v2126, 0.0
  %v2135 = vmax.f32 %v2127, 0.0
  %s2136 = scalar_lea.vmem %s4, 8
  %v2137 = vld [vmem:[%s2136] sm:$0xff]
  %v2139 = vsel %vm130, %v2137, 0
  %v2142 = vsel %vm137, %v2132, 0
  %v2145 = vsel %vm137, %v2133, 0
  %v2148 = vsel %vm137, %v2134, 0
  %v2151 = vsel %vm137, %v2135, 0
  %2153 = vmatprep.subr.mxu0 %v2145
  %2154 = vmatpush1.msra.mxu0 %v2142
  %2155 = vmatprep.subr.mxu0 0.0
  %2156 = vmatpush1.msra.mxu0 0.0
  %2157 = vmatprep.subr.mxu0 0.0
  %2158 = vmatpush1.msra.mxu0 0.0
  %2159 = vmatprep.subr.mxu0 0.0
  %2160 = vmatpush1.msra.mxu0 0.0
  %2161 = vmatprep.subr.mxu0 0.0
  %2162 = vmatpush1.msra.mxu0 0.0
  %2163 = vmatprep.subr.mxu0 0.0
  %2164 = vmatpush1.msra.mxu0 0.0
  %2165 = vmatprep.subr.mxu0 0.0
  %2166 = vmatpush1.msra.mxu0 0.0
  %2167 = vmatprep.subr.mxu0 0.0
  %2168 = vmatpush1.msra.mxu0 0.0
  %2169 = vmatprep.subr.mxu0 0.0
  %2170 = vmatpush1.msra.mxu0 0.0
  %2171 = vmatprep.subr.mxu0 0.0
  %2172 = vmatpush1.msra.mxu0 0.0
  %2173 = vmatprep.subr.mxu0 0.0
  %2174 = vmatpush1.msra.mxu0 0.0
  %2175 = vmatprep.subr.mxu0 0.0
  %2176 = vmatpush1.msra.mxu0 0.0
  %2177 = vmatprep.subr.mxu0 0.0
  %2178 = vmatpush1.msra.mxu0 0.0
  %2179 = vmatprep.subr.mxu0 0.0
  %2180 = vmatpush1.msra.mxu0 0.0
  %2181 = vmatprep.subr.mxu0 0.0
  %2182 = vmatpush1.msra.mxu0 0.0
  %2183 = vmatprep.subr.mxu0 0.0
  %2184 = vmatpush1.msra.mxu0 0.0
  %2185 = vmatprep.subr.mxu0 0.0
  %2186 = vmatpush1.msra.mxu0 0.0
  %2187 = vmatprep.subr.mxu0 0.0
  %2188 = vmatpush1.msra.mxu0 0.0
  %2189 = vmatprep.subr.mxu0 0.0
  %2190 = vmatpush1.msra.mxu0 0.0
  %2191 = vmatprep.subr.mxu0 0.0
  %2192 = vmatpush1.msra.mxu0 0.0
  %2193 = vmatprep.subr.mxu0 0.0
  %2194 = vmatpush1.msra.mxu0 0.0
  %2195 = vmatprep.subr.mxu0 0.0
  %2196 = vmatpush1.msra.mxu0 0.0
  %2197 = vmatprep.subr.mxu0 0.0
  %2198 = vmatpush1.msra.mxu0 0.0
  %2199 = vmatprep.subr.mxu0 0.0
  %2200 = vmatpush1.msra.mxu0 0.0
  %2201 = vmatprep.subr.mxu0 0.0
  %2202 = vmatpush1.msra.mxu0 0.0
  %2203 = vmatprep.subr.mxu0 0.0
  %2204 = vmatpush1.msra.mxu0 0.0
  %2205 = vmatprep.subr.mxu0 0.0
  %2206 = vmatpush1.msra.mxu0 0.0
  %2207 = vmatprep.subr.mxu0 0.0
  %2208 = vmatpush1.msra.mxu0 0.0
  %2209 = vmatprep.subr.mxu0 0.0
  %2210 = vmatpush1.msra.mxu0 0.0
  %2211 = vmatprep.subr.mxu0 0.0
  %2212 = vmatpush1.msra.mxu0 0.0
  %2213 = vmatprep.subr.mxu0 0.0
  %2214 = vmatpush1.msra.mxu0 0.0
  %2215 = vmatprep.subr.mxu0 0.0
  %2216 = vmatpush1.msra.mxu0 0.0
  %2217 = vmatprep.mubr.f32.mxu0 0.0
  %2218 = vmatmul.mubr.f32.gmra.mrb[0].mxu0 %v2139
  %v2219 = vpop.f32.mrb[0].mxu0
  %v2220 = vadd.f32 0.0, %v2219
  %v2221 = vpop.f32.mrb[0].mxu0
  %v2222 = vadd.f32 0.0, %v2221
  %2223 = vdwg.mxu0
  %2224 = vmatprep.subr.mxu0 %v2151
  %2225 = vmatpush1.msra.mxu0 %v2148
  %2226 = vmatprep.subr.mxu0 0.0
  %2227 = vmatpush1.msra.mxu0 0.0
  %2228 = vmatprep.subr.mxu0 0.0
  %2229 = vmatpush1.msra.mxu0 0.0
  %2230 = vmatprep.subr.mxu0 0.0
  %2231 = vmatpush1.msra.mxu0 0.0
  %2232 = vmatprep.subr.mxu0 0.0
  %2233 = vmatpush1.msra.mxu0 0.0
  %2234 = vmatprep.subr.mxu0 0.0
  %2235 = vmatpush1.msra.mxu0 0.0
  %2236 = vmatprep.subr.mxu0 0.0
  %2237 = vmatpush1.msra.mxu0 0.0
  %2238 = vmatprep.subr.mxu0 0.0
  %2239 = vmatpush1.msra.mxu0 0.0
  %2240 = vmatprep.subr.mxu0 0.0
  %2241 = vmatpush1.msra.mxu0 0.0
  %2242 = vmatprep.subr.mxu0 0.0
  %2243 = vmatpush1.msra.mxu0 0.0
  %2244 = vmatprep.subr.mxu0 0.0
  %2245 = vmatpush1.msra.mxu0 0.0
  %2246 = vmatprep.subr.mxu0 0.0
  %2247 = vmatpush1.msra.mxu0 0.0
  %2248 = vmatprep.subr.mxu0 0.0
  %2249 = vmatpush1.msra.mxu0 0.0
  %2250 = vmatprep.subr.mxu0 0.0
  %2251 = vmatpush1.msra.mxu0 0.0
  %2252 = vmatprep.subr.mxu0 0.0
  %2253 = vmatpush1.msra.mxu0 0.0
  %2254 = vmatprep.subr.mxu0 0.0
  %2255 = vmatpush1.msra.mxu0 0.0
  %2256 = vmatprep.subr.mxu0 0.0
  %2257 = vmatpush1.msra.mxu0 0.0
  %2258 = vmatprep.subr.mxu0 0.0
  %2259 = vmatpush1.msra.mxu0 0.0
  %2260 = vmatprep.subr.mxu0 0.0
  %2261 = vmatpush1.msra.mxu0 0.0
  %2262 = vmatprep.subr.mxu0 0.0
  %2263 = vmatpush1.msra.mxu0 0.0
  %2264 = vmatprep.subr.mxu0 0.0
  %2265 = vmatpush1.msra.mxu0 0.0
  %2266 = vmatprep.subr.mxu0 0.0
  %2267 = vmatpush1.msra.mxu0 0.0
  %2268 = vmatprep.subr.mxu0 0.0
  %2269 = vmatpush1.msra.mxu0 0.0
  %2270 = vmatprep.subr.mxu0 0.0
  %2271 = vmatpush1.msra.mxu0 0.0
  %2272 = vmatprep.subr.mxu0 0.0
  %2273 = vmatpush1.msra.mxu0 0.0
  %2274 = vmatprep.subr.mxu0 0.0
  %2275 = vmatpush1.msra.mxu0 0.0
  %2276 = vmatprep.subr.mxu0 0.0
  %2277 = vmatpush1.msra.mxu0 0.0
  %2278 = vmatprep.subr.mxu0 0.0
  %2279 = vmatpush1.msra.mxu0 0.0
  %2280 = vmatprep.subr.mxu0 0.0
  %2281 = vmatpush1.msra.mxu0 0.0
  %2282 = vmatprep.subr.mxu0 0.0
  %2283 = vmatpush1.msra.mxu0 0.0
  %2284 = vmatprep.subr.mxu0 0.0
  %2285 = vmatpush1.msra.mxu0 0.0
  %2286 = vmatprep.subr.mxu0 0.0
  %2287 = vmatpush1.msra.mxu0 0.0
  %2288 = vmatprep.mubr.f32.mxu0 0.0
  %2289 = vmatmul.mubr.f32.gmra.mrb[0].mxu0 %v2139
  %v2290 = vpop.f32.mrb[0].mxu0
  %v2291 = vadd.f32 0.0, %v2290
  %v2292 = vpop.f32.mrb[0].mxu0
  %v2293 = vadd.f32 0.0, %v2292
  %2294 = vdwg.mxu0
  %v2296 = vsel %vm130, %v2111, 0
  %v2299 = vsel %vm137, %v2107, 0
  %v2302 = vsel %vm137, %v2108, 0
  %v2305 = vsel %vm137, %v2109, 0
  %v2308 = vsel %vm137, %v2110, 0
  %2310 = vmatprep.subr.mxu0 %v2302
  %2311 = vmatpush1.msra.mxu0 %v2299
  %2312 = vmatprep.subr.mxu0 0.0
  %2313 = vmatpush1.msra.mxu0 0.0
  %2314 = vmatprep.subr.mxu0 0.0
  %2315 = vmatpush1.msra.mxu0 0.0
  %2316 = vmatprep.subr.mxu0 0.0
  %2317 = vmatpush1.msra.mxu0 0.0
  %2318 = vmatprep.subr.mxu0 0.0
  %2319 = vmatpush1.msra.mxu0 0.0
  %2320 = vmatprep.subr.mxu0 0.0
  %2321 = vmatpush1.msra.mxu0 0.0
  %2322 = vmatprep.subr.mxu0 0.0
  %2323 = vmatpush1.msra.mxu0 0.0
  %2324 = vmatprep.subr.mxu0 0.0
  %2325 = vmatpush1.msra.mxu0 0.0
  %2326 = vmatprep.subr.mxu0 0.0
  %2327 = vmatpush1.msra.mxu0 0.0
  %2328 = vmatprep.subr.mxu0 0.0
  %2329 = vmatpush1.msra.mxu0 0.0
  %2330 = vmatprep.subr.mxu0 0.0
  %2331 = vmatpush1.msra.mxu0 0.0
  %2332 = vmatprep.subr.mxu0 0.0
  %2333 = vmatpush1.msra.mxu0 0.0
  %2334 = vmatprep.subr.mxu0 0.0
  %2335 = vmatpush1.msra.mxu0 0.0
  %2336 = vmatprep.subr.mxu0 0.0
  %2337 = vmatpush1.msra.mxu0 0.0
  %2338 = vmatprep.subr.mxu0 0.0
  %2339 = vmatpush1.msra.mxu0 0.0
  %2340 = vmatprep.subr.mxu0 0.0
  %2341 = vmatpush1.msra.mxu0 0.0
  %2342 = vmatprep.subr.mxu0 0.0
  %2343 = vmatpush1.msra.mxu0 0.0
  %2344 = vmatprep.subr.mxu0 0.0
  %2345 = vmatpush1.msra.mxu0 0.0
  %2346 = vmatprep.subr.mxu0 0.0
  %2347 = vmatpush1.msra.mxu0 0.0
  %2348 = vmatprep.subr.mxu0 0.0
  %2349 = vmatpush1.msra.mxu0 0.0
  %2350 = vmatprep.subr.mxu0 0.0
  %2351 = vmatpush1.msra.mxu0 0.0
  %2352 = vmatprep.subr.mxu0 0.0
  %2353 = vmatpush1.msra.mxu0 0.0
  %2354 = vmatprep.subr.mxu0 0.0
  %2355 = vmatpush1.msra.mxu0 0.0
  %2356 = vmatprep.subr.mxu0 0.0
  %2357 = vmatpush1.msra.mxu0 0.0
  %2358 = vmatprep.subr.mxu0 0.0
  %2359 = vmatpush1.msra.mxu0 0.0
  %2360 = vmatprep.subr.mxu0 0.0
  %2361 = vmatpush1.msra.mxu0 0.0
  %2362 = vmatprep.subr.mxu0 0.0
  %2363 = vmatpush1.msra.mxu0 0.0
  %2364 = vmatprep.subr.mxu0 0.0
  %2365 = vmatpush1.msra.mxu0 0.0
  %2366 = vmatprep.subr.mxu0 0.0
  %2367 = vmatpush1.msra.mxu0 0.0
  %2368 = vmatprep.subr.mxu0 0.0
  %2369 = vmatpush1.msra.mxu0 0.0
  %2370 = vmatprep.subr.mxu0 0.0
  %2371 = vmatpush1.msra.mxu0 0.0
  %2372 = vmatprep.subr.mxu0 0.0
  %2373 = vmatpush1.msra.mxu0 0.0
  %2374 = vmatprep.mubr.f32.mxu0 0.0
  %2375 = vmatmul.mubr.f32.gmra.mrb[0].mxu0 %v2296
  %v2376 = vpop.f32.mrb[0].mxu0
  %v2377 = vadd.f32 %v2220, %v2376
  %v2378 = vpop.f32.mrb[0].mxu0
  %v2379 = vadd.f32 %v2222, %v2378
  %2380 = vdwg.mxu0
  %2381 = vmatprep.subr.mxu0 %v2308
  %2382 = vmatpush1.msra.mxu0 %v2305
  %2383 = vmatprep.subr.mxu0 0.0
  %2384 = vmatpush1.msra.mxu0 0.0
  %2385 = vmatprep.subr.mxu0 0.0
  %2386 = vmatpush1.msra.mxu0 0.0
  %2387 = vmatprep.subr.mxu0 0.0
  %2388 = vmatpush1.msra.mxu0 0.0
  %2389 = vmatprep.subr.mxu0 0.0
  %2390 = vmatpush1.msra.mxu0 0.0
  %2391 = vmatprep.subr.mxu0 0.0
  %2392 = vmatpush1.msra.mxu0 0.0
  %2393 = vmatprep.subr.mxu0 0.0
  %2394 = vmatpush1.msra.mxu0 0.0
  %2395 = vmatprep.subr.mxu0 0.0
  %2396 = vmatpush1.msra.mxu0 0.0
  %2397 = vmatprep.subr.mxu0 0.0
  %2398 = vmatpush1.msra.mxu0 0.0
  %2399 = vmatprep.subr.mxu0 0.0
  %2400 = vmatpush1.msra.mxu0 0.0
  %2401 = vmatprep.subr.mxu0 0.0
  %2402 = vmatpush1.msra.mxu0 0.0
  %2403 = vmatprep.subr.mxu0 0.0
  %2404 = vmatpush1.msra.mxu0 0.0
  %2405 = vmatprep.subr.mxu0 0.0
  %2406 = vmatpush1.msra.mxu0 0.0
  %2407 = vmatprep.subr.mxu0 0.0
  %2408 = vmatpush1.msra.mxu0 0.0
  %2409 = vmatprep.subr.mxu0 0.0
  %2410 = vmatpush1.msra.mxu0 0.0
  %2411 = vmatprep.subr.mxu0 0.0
  %2412 = vmatpush1.msra.mxu0 0.0
  %2413 = vmatprep.subr.mxu0 0.0
  %2414 = vmatpush1.msra.mxu0 0.0
  %2415 = vmatprep.subr.mxu0 0.0
  %2416 = vmatpush1.msra.mxu0 0.0
  %2417 = vmatprep.subr.mxu0 0.0
  %2418 = vmatpush1.msra.mxu0 0.0
  %2419 = vmatprep.subr.mxu0 0.0
  %2420 = vmatpush1.msra.mxu0 0.0
  %2421 = vmatprep.subr.mxu0 0.0
  %2422 = vmatpush1.msra.mxu0 0.0
  %2423 = vmatprep.subr.mxu0 0.0
  %2424 = vmatpush1.msra.mxu0 0.0
  %2425 = vmatprep.subr.mxu0 0.0
  %2426 = vmatpush1.msra.mxu0 0.0
  %2427 = vmatprep.subr.mxu0 0.0
  %2428 = vmatpush1.msra.mxu0 0.0
  %2429 = vmatprep.subr.mxu0 0.0
  %2430 = vmatpush1.msra.mxu0 0.0
  %2431 = vmatprep.subr.mxu0 0.0
  %2432 = vmatpush1.msra.mxu0 0.0
  %2433 = vmatprep.subr.mxu0 0.0
  %2434 = vmatpush1.msra.mxu0 0.0
  %2435 = vmatprep.subr.mxu0 0.0
  %2436 = vmatpush1.msra.mxu0 0.0
  %2437 = vmatprep.subr.mxu0 0.0
  %2438 = vmatpush1.msra.mxu0 0.0
  %2439 = vmatprep.subr.mxu0 0.0
  %2440 = vmatpush1.msra.mxu0 0.0
  %2441 = vmatprep.subr.mxu0 0.0
  %2442 = vmatpush1.msra.mxu0 0.0
  %2443 = vmatprep.subr.mxu0 0.0
  %2444 = vmatpush1.msra.mxu0 0.0
  %2445 = vmatprep.mubr.f32.mxu0 0.0
  %2446 = vmatmul.mubr.f32.gmra.mrb[0].mxu0 %v2296
  %v2447 = vpop.f32.mrb[0].mxu0
  %v2448 = vadd.f32 %v2291, %v2447
  %v2449 = vpop.f32.mrb[0].mxu0
  %v2450 = vadd.f32 %v2293, %v2449
  %2451 = vdwg.mxu0
  %2452 = vrot.lane.b32.xlu0 %v2067, 15
  %v2453 = vpop.permute.xlu0 %2452
  %2454 = vrot.lane.b32.xlu0 %v2087, 15
  %v2455 = vpop.permute.xlu0 %2454
  %2456 = vrot.lane.b32.xlu0 %v2068, 15
  %v2457 = vpop.permute.xlu0 %2456
  %2458 = vrot.lane.b32.xlu0 %v2088, 15
  %v2459 = vpop.permute.xlu0 %2458
  %v2460 = vsel %vm484, %v2457, %v2459
  %v2461 = vsel %vm484, %v2455, %v2457
  %v2462 = vsel %vm484, %v2453, %v2455
  %v2463 = vsel %vm484, %v2459, %v2453
  %v2464 = vmul.f32 %v2463, %v492
  %v2465 = vmul.f32 %v2462, %v496
  %v2466 = vmul.f32 %v2461, %v500
  %v2467 = vmul.f32 %v2460, %v504
  %v2468 = vadd.f32 %v2128, %v2464
  %v2469 = vadd.f32 %v2129, %v2465
  %v2470 = vadd.f32 %v2130, %v2466
  %v2471 = vadd.f32 %v2131, %v2467
  %v2472 = vmax.f32 %v2464, 0.0
  %v2473 = vmax.f32 %v2465, 0.0
  %v2474 = vmax.f32 %v2466, 0.0
  %v2475 = vmax.f32 %v2467, 0.0
  %s2476 = scalar_lea.vmem %s4, 16
  %v2477 = vld [vmem:[%s2476] sm:$0xff]
  %v2479 = vsel %vm130, %v2477, 0
  %v2482 = vsel %vm137, %v2472, 0
  %v2485 = vsel %vm137, %v2473, 0
  %v2488 = vsel %vm137, %v2474, 0
  %v2491 = vsel %vm137, %v2475, 0
  %2493 = vmatprep.subr.mxu0 %v2485
  %2494 = vmatpush1.msra.mxu0 %v2482
  %2495 = vmatprep.subr.mxu0 0.0
  %2496 = vmatpush1.msra.mxu0 0.0
  %2497 = vmatprep.subr.mxu0 0.0
  %2498 = vmatpush1.msra.mxu0 0.0
  %2499 = vmatprep.subr.mxu0 0.0
  %2500 = vmatpush1.msra.mxu0 0.0
  %2501 = vmatprep.subr.mxu0 0.0
  %2502 = vmatpush1.msra.mxu0 0.0
  %2503 = vmatprep.subr.mxu0 0.0
  %2504 = vmatpush1.msra.mxu0 0.0
  %2505 = vmatprep.subr.mxu0 0.0
  %2506 = vmatpush1.msra.mxu0 0.0
  %2507 = vmatprep.subr.mxu0 0.0
  %2508 = vmatpush1.msra.mxu0 0.0
  %2509 = vmatprep.subr.mxu0 0.0
  %2510 = vmatpush1.msra.mxu0 0.0
  %2511 = vmatprep.subr.mxu0 0.0
  %2512 = vmatpush1.msra.mxu0 0.0
  %2513 = vmatprep.subr.mxu0 0.0
  %2514 = vmatpush1.msra.mxu0 0.0
  %2515 = vmatprep.subr.mxu0 0.0
  %2516 = vmatpush1.msra.mxu0 0.0
  %2517 = vmatprep.subr.mxu0 0.0
  %2518 = vmatpush1.msra.mxu0 0.0
  %2519 = vmatprep.subr.mxu0 0.0
  %2520 = vmatpush1.msra.mxu0 0.0
  %2521 = vmatprep.subr.mxu0 0.0
  %2522 = vmatpush1.msra.mxu0 0.0
  %2523 = vmatprep.subr.mxu0 0.0
  %2524 = vmatpush1.msra.mxu0 0.0
  %2525 = vmatprep.subr.mxu0 0.0
  %2526 = vmatpush1.msra.mxu0 0.0
  %2527 = vmatprep.subr.mxu0 0.0
  %2528 = vmatpush1.msra.mxu0 0.0
  %2529 = vmatprep.subr.mxu0 0.0
  %2530 = vmatpush1.msra.mxu0 0.0
  %2531 = vmatprep.subr.mxu0 0.0
  %2532 = vmatpush1.msra.mxu0 0.0
  %2533 = vmatprep.subr.mxu0 0.0
  %2534 = vmatpush1.msra.mxu0 0.0
  %2535 = vmatprep.subr.mxu0 0.0
  %2536 = vmatpush1.msra.mxu0 0.0
  %2537 = vmatprep.subr.mxu0 0.0
  %2538 = vmatpush1.msra.mxu0 0.0
  %2539 = vmatprep.subr.mxu0 0.0
  %2540 = vmatpush1.msra.mxu0 0.0
  %2541 = vmatprep.subr.mxu0 0.0
  %2542 = vmatpush1.msra.mxu0 0.0
  %2543 = vmatprep.subr.mxu0 0.0
  %2544 = vmatpush1.msra.mxu0 0.0
  %2545 = vmatprep.subr.mxu0 0.0
  %2546 = vmatpush1.msra.mxu0 0.0
  %2547 = vmatprep.subr.mxu0 0.0
  %2548 = vmatpush1.msra.mxu0 0.0
  %2549 = vmatprep.subr.mxu0 0.0
  %2550 = vmatpush1.msra.mxu0 0.0
  %2551 = vmatprep.subr.mxu0 0.0
  %2552 = vmatpush1.msra.mxu0 0.0
  %2553 = vmatprep.subr.mxu0 0.0
  %2554 = vmatpush1.msra.mxu0 0.0
  %2555 = vmatprep.subr.mxu0 0.0
  %2556 = vmatpush1.msra.mxu0 0.0
  %2557 = vmatprep.mubr.f32.mxu0 0.0
  %2558 = vmatmul.mubr.f32.gmra.mrb[0].mxu0 %v2479
  %v2559 = vpop.f32.mrb[0].mxu0
  %v2560 = vadd.f32 0.0, %v2559
  %v2561 = vpop.f32.mrb[0].mxu0
  %v2562 = vadd.f32 0.0, %v2561
  %2563 = vdwg.mxu0
  %2564 = vmatprep.subr.mxu0 %v2491
  %2565 = vmatpush1.msra.mxu0 %v2488
  %2566 = vmatprep.subr.mxu0 0.0
  %2567 = vmatpush1.msra.mxu0 0.0
  %2568 = vmatprep.subr.mxu0 0.0
  %2569 = vmatpush1.msra.mxu0 0.0
  %2570 = vmatprep.subr.mxu0 0.0
  %2571 = vmatpush1.msra.mxu0 0.0
  %2572 = vmatprep.subr.mxu0 0.0
  %2573 = vmatpush1.msra.mxu0 0.0
  %2574 = vmatprep.subr.mxu0 0.0
  %2575 = vmatpush1.msra.mxu0 0.0
  %2576 = vmatprep.subr.mxu0 0.0
  %2577 = vmatpush1.msra.mxu0 0.0
  %2578 = vmatprep.subr.mxu0 0.0
  %2579 = vmatpush1.msra.mxu0 0.0
  %2580 = vmatprep.subr.mxu0 0.0
  %2581 = vmatpush1.msra.mxu0 0.0
  %2582 = vmatprep.subr.mxu0 0.0
  %2583 = vmatpush1.msra.mxu0 0.0
  %2584 = vmatprep.subr.mxu0 0.0
  %2585 = vmatpush1.msra.mxu0 0.0
  %2586 = vmatprep.subr.mxu0 0.0
  %2587 = vmatpush1.msra.mxu0 0.0
  %2588 = vmatprep.subr.mxu0 0.0
  %2589 = vmatpush1.msra.mxu0 0.0
  %2590 = vmatprep.subr.mxu0 0.0
  %2591 = vmatpush1.msra.mxu0 0.0
  %2592 = vmatprep.subr.mxu0 0.0
  %2593 = vmatpush1.msra.mxu0 0.0
  %2594 = vmatprep.subr.mxu0 0.0
  %2595 = vmatpush1.msra.mxu0 0.0
  %2596 = vmatprep.subr.mxu0 0.0
  %2597 = vmatpush1.msra.mxu0 0.0
  %2598 = vmatprep.subr.mxu0 0.0
  %2599 = vmatpush1.msra.mxu0 0.0
  %2600 = vmatprep.subr.mxu0 0.0
  %2601 = vmatpush1.msra.mxu0 0.0
  %2602 = vmatprep.subr.mxu0 0.0
  %2603 = vmatpush1.msra.mxu0 0.0
  %2604 = vmatprep.subr.mxu0 0.0
  %2605 = vmatpush1.msra.mxu0 0.0
  %2606 = vmatprep.subr.mxu0 0.0
  %2607 = vmatpush1.msra.mxu0 0.0
  %2608 = vmatprep.subr.mxu0 0.0
  %2609 = vmatpush1.msra.mxu0 0.0
  %2610 = vmatprep.subr.mxu0 0.0
  %2611 = vmatpush1.msra.mxu0 0.0
  %2612 = vmatprep.subr.mxu0 0.0
  %2613 = vmatpush1.msra.mxu0 0.0
  %2614 = vmatprep.subr.mxu0 0.0
  %2615 = vmatpush1.msra.mxu0 0.0
  %2616 = vmatprep.subr.mxu0 0.0
  %2617 = vmatpush1.msra.mxu0 0.0
  %2618 = vmatprep.subr.mxu0 0.0
  %2619 = vmatpush1.msra.mxu0 0.0
  %2620 = vmatprep.subr.mxu0 0.0
  %2621 = vmatpush1.msra.mxu0 0.0
  %2622 = vmatprep.subr.mxu0 0.0
  %2623 = vmatpush1.msra.mxu0 0.0
  %2624 = vmatprep.subr.mxu0 0.0
  %2625 = vmatpush1.msra.mxu0 0.0
  %2626 = vmatprep.subr.mxu0 0.0
  %2627 = vmatpush1.msra.mxu0 0.0
  %2628 = vmatprep.mubr.f32.mxu0 0.0
  %2629 = vmatmul.mubr.f32.gmra.mrb[0].mxu0 %v2479
  %v2630 = vpop.f32.mrb[0].mxu0
  %v2631 = vadd.f32 0.0, %v2630
  %v2632 = vpop.f32.mrb[0].mxu0
  %v2633 = vadd.f32 0.0, %v2632
  %2634 = vdwg.mxu0
  %v2635 = vadd.f32 %v2377, %v2560
  %v2636 = vadd.f32 %v2379, %v2562
  %v2637 = vadd.f32 %v2448, %v2631
  %v2638 = vadd.f32 %v2450, %v2633
  %2639 = vrot.lane.b32.xlu0 %v2067, 1
  %v2640 = vpop.permute.xlu0 %2639
  %2641 = vrot.lane.b32.xlu0 %v2087, 1
  %v2642 = vpop.permute.xlu0 %2641
  %2643 = vrot.lane.b32.xlu0 %v2068, 1
  %v2644 = vpop.permute.xlu0 %2643
  %2645 = vrot.lane.b32.xlu0 %v2088, 1
  %v2646 = vpop.permute.xlu0 %2645
  %v2647 = vsel %vm708, %v2644, %v2646
  %v2648 = vsel %vm708, %v2642, %v2644
  %v2649 = vsel %vm708, %v2640, %v2642
  %v2650 = vsel %vm708, %v2646, %v2640
  %v2651 = vmul.f32 %v2650, %v716
  %v2652 = vmul.f32 %v2649, %v720
  %v2653 = vmul.f32 %v2648, %v724
  %v2654 = vmul.f32 %v2647, %v728
  %v2655 = vadd.f32 %v2468, %v2651
  %v2656 = vadd.f32 %v2469, %v2652
  %v2657 = vadd.f32 %v2470, %v2653
  %v2658 = vadd.f32 %v2471, %v2654
  %v2659 = vmax.f32 %v2651, 0.0
  %v2660 = vmax.f32 %v2652, 0.0
  %v2661 = vmax.f32 %v2653, 0.0
  %v2662 = vmax.f32 %v2654, 0.0
  %s2663 = scalar_lea.vmem %s4, 24
  %v2664 = vld [vmem:[%s2663] sm:$0xff]
  %v2666 = vsel %vm130, %v2664, 0
  %v2669 = vsel %vm137, %v2659, 0
  %v2672 = vsel %vm137, %v2660, 0
  %v2675 = vsel %vm137, %v2661, 0
  %v2678 = vsel %vm137, %v2662, 0
  %2680 = vmatprep.subr.mxu0 %v2672
  %2681 = vmatpush1.msra.mxu0 %v2669
  %2682 = vmatprep.subr.mxu0 0.0
  %2683 = vmatpush1.msra.mxu0 0.0
  %2684 = vmatprep.subr.mxu0 0.0
  %2685 = vmatpush1.msra.mxu0 0.0
  %2686 = vmatprep.subr.mxu0 0.0
  %2687 = vmatpush1.msra.mxu0 0.0
  %2688 = vmatprep.subr.mxu0 0.0
  %2689 = vmatpush1.msra.mxu0 0.0
  %2690 = vmatprep.subr.mxu0 0.0
  %2691 = vmatpush1.msra.mxu0 0.0
  %2692 = vmatprep.subr.mxu0 0.0
  %2693 = vmatpush1.msra.mxu0 0.0
  %2694 = vmatprep.subr.mxu0 0.0
  %2695 = vmatpush1.msra.mxu0 0.0
  %2696 = vmatprep.subr.mxu0 0.0
  %2697 = vmatpush1.msra.mxu0 0.0
  %2698 = vmatprep.subr.mxu0 0.0
  %2699 = vmatpush1.msra.mxu0 0.0
  %2700 = vmatprep.subr.mxu0 0.0
  %2701 = vmatpush1.msra.mxu0 0.0
  %2702 = vmatprep.subr.mxu0 0.0
  %2703 = vmatpush1.msra.mxu0 0.0
  %2704 = vmatprep.subr.mxu0 0.0
  %2705 = vmatpush1.msra.mxu0 0.0
  %2706 = vmatprep.subr.mxu0 0.0
  %2707 = vmatpush1.msra.mxu0 0.0
  %2708 = vmatprep.subr.mxu0 0.0
  %2709 = vmatpush1.msra.mxu0 0.0
  %2710 = vmatprep.subr.mxu0 0.0
  %2711 = vmatpush1.msra.mxu0 0.0
  %2712 = vmatprep.subr.mxu0 0.0
  %2713 = vmatpush1.msra.mxu0 0.0
  %2714 = vmatprep.subr.mxu0 0.0
  %2715 = vmatpush1.msra.mxu0 0.0
  %2716 = vmatprep.subr.mxu0 0.0
  %2717 = vmatpush1.msra.mxu0 0.0
  %2718 = vmatprep.subr.mxu0 0.0
  %2719 = vmatpush1.msra.mxu0 0.0
  %2720 = vmatprep.subr.mxu0 0.0
  %2721 = vmatpush1.msra.mxu0 0.0
  %2722 = vmatprep.subr.mxu0 0.0
  %2723 = vmatpush1.msra.mxu0 0.0
  %2724 = vmatprep.subr.mxu0 0.0
  %2725 = vmatpush1.msra.mxu0 0.0
  %2726 = vmatprep.subr.mxu0 0.0
  %2727 = vmatpush1.msra.mxu0 0.0
  %2728 = vmatprep.subr.mxu0 0.0
  %2729 = vmatpush1.msra.mxu0 0.0
  %2730 = vmatprep.subr.mxu0 0.0
  %2731 = vmatpush1.msra.mxu0 0.0
  %2732 = vmatprep.subr.mxu0 0.0
  %2733 = vmatpush1.msra.mxu0 0.0
  %2734 = vmatprep.subr.mxu0 0.0
  %2735 = vmatpush1.msra.mxu0 0.0
  %2736 = vmatprep.subr.mxu0 0.0
  %2737 = vmatpush1.msra.mxu0 0.0
  %2738 = vmatprep.subr.mxu0 0.0
  %2739 = vmatpush1.msra.mxu0 0.0
  %2740 = vmatprep.subr.mxu0 0.0
  %2741 = vmatpush1.msra.mxu0 0.0
  %2742 = vmatprep.subr.mxu0 0.0
  %2743 = vmatpush1.msra.mxu0 0.0
  %2744 = vmatprep.mubr.f32.mxu0 0.0
  %2745 = vmatmul.mubr.f32.gmra.mrb[0].mxu0 %v2666
  %v2746 = vpop.f32.mrb[0].mxu0
  %v2747 = vadd.f32 0.0, %v2746
  %v2748 = vpop.f32.mrb[0].mxu0
  %v2749 = vadd.f32 0.0, %v2748
  %2750 = vdwg.mxu0
  %2751 = vmatprep.subr.mxu0 %v2678
  %2752 = vmatpush1.msra.mxu0 %v2675
  %2753 = vmatprep.subr.mxu0 0.0
  %2754 = vmatpush1.msra.mxu0 0.0
  %2755 = vmatprep.subr.mxu0 0.0
  %2756 = vmatpush1.msra.mxu0 0.0
  %2757 = vmatprep.subr.mxu0 0.0
  %2758 = vmatpush1.msra.mxu0 0.0
  %2759 = vmatprep.subr.mxu0 0.0
  %2760 = vmatpush1.msra.mxu0 0.0
  %2761 = vmatprep.subr.mxu0 0.0
  %2762 = vmatpush1.msra.mxu0 0.0
  %2763 = vmatprep.subr.mxu0 0.0
  %2764 = vmatpush1.msra.mxu0 0.0
  %2765 = vmatprep.subr.mxu0 0.0
  %2766 = vmatpush1.msra.mxu0 0.0
  %2767 = vmatprep.subr.mxu0 0.0
  %2768 = vmatpush1.msra.mxu0 0.0
  %2769 = vmatprep.subr.mxu0 0.0
  %2770 = vmatpush1.msra.mxu0 0.0
  %2771 = vmatprep.subr.mxu0 0.0
  %2772 = vmatpush1.msra.mxu0 0.0
  %2773 = vmatprep.subr.mxu0 0.0
  %2774 = vmatpush1.msra.mxu0 0.0
  %2775 = vmatprep.subr.mxu0 0.0
  %2776 = vmatpush1.msra.mxu0 0.0
  %2777 = vmatprep.subr.mxu0 0.0
  %2778 = vmatpush1.msra.mxu0 0.0
  %2779 = vmatprep.subr.mxu0 0.0
  %2780 = vmatpush1.msra.mxu0 0.0
  %2781 = vmatprep.subr.mxu0 0.0
  %2782 = vmatpush1.msra.mxu0 0.0
  %2783 = vmatprep.subr.mxu0 0.0
  %2784 = vmatpush1.msra.mxu0 0.0
  %2785 = vmatprep.subr.mxu0 0.0
  %2786 = vmatpush1.msra.mxu0 0.0
  %2787 = vmatprep.subr.mxu0 0.0
  %2788 = vmatpush1.msra.mxu0 0.0
  %2789 = vmatprep.subr.mxu0 0.0
  %2790 = vmatpush1.msra.mxu0 0.0
  %2791 = vmatprep.subr.mxu0 0.0
  %2792 = vmatpush1.msra.mxu0 0.0
  %2793 = vmatprep.subr.mxu0 0.0
  %2794 = vmatpush1.msra.mxu0 0.0
  %2795 = vmatprep.subr.mxu0 0.0
  %2796 = vmatpush1.msra.mxu0 0.0
  %2797 = vmatprep.subr.mxu0 0.0
  %2798 = vmatpush1.msra.mxu0 0.0
  %2799 = vmatprep.subr.mxu0 0.0
  %2800 = vmatpush1.msra.mxu0 0.0
  %2801 = vmatprep.subr.mxu0 0.0
  %2802 = vmatpush1.msra.mxu0 0.0
  %2803 = vmatprep.subr.mxu0 0.0
  %2804 = vmatpush1.msra.mxu0 0.0
  %2805 = vmatprep.subr.mxu0 0.0
  %2806 = vmatpush1.msra.mxu0 0.0
  %2807 = vmatprep.subr.mxu0 0.0
  %2808 = vmatpush1.msra.mxu0 0.0
  %2809 = vmatprep.subr.mxu0 0.0
  %2810 = vmatpush1.msra.mxu0 0.0
  %2811 = vmatprep.subr.mxu0 0.0
  %2812 = vmatpush1.msra.mxu0 0.0
  %2813 = vmatprep.subr.mxu0 0.0
  %2814 = vmatpush1.msra.mxu0 0.0
  %2815 = vmatprep.mubr.f32.mxu0 0.0
  %2816 = vmatmul.mubr.f32.gmra.mrb[0].mxu0 %v2666
  %v2817 = vpop.f32.mrb[0].mxu0
  %v2818 = vadd.f32 0.0, %v2817
  %v2819 = vpop.f32.mrb[0].mxu0
  %v2820 = vadd.f32 0.0, %v2819
  %2821 = vdwg.mxu0
  %v2822 = vadd.f32 %v2635, %v2747
  %v2823 = vadd.f32 %v2636, %v2749
  %v2824 = vadd.f32 %v2637, %v2818
  %v2825 = vadd.f32 %v2638, %v2820
  %v2826 = vadd.f32 %v2655, %v2067
  %v2827 = vadd.f32 %v2656, %v2087
  %v2828 = vadd.f32 %v2657, %v2068
  %v2829 = vadd.f32 %v2658, %v2088
  %v2830 = vmax.f32 %v2067, 0.0
  %v2831 = vmax.f32 %v2068, 0.0
  %s2832 = scalar_lea.vmem %s4, 32
  %v2833 = vld [vmem:[%s2832] sm:$0xff]
  %v2836 = vcombine.high %v2830, %v2830
  %v2837 = vcombine.high %v2831, %v2831
  %v2839 = vsel %vm130, %v2833, 0
  %v2841 = vsel %vm137, %v2830, 0
  %v2843 = vsel %vm137, %v2836, 0
  %v2845 = vsel %vm137, %v2831, 0
  %v2847 = vsel %vm137, %v2837, 0
  %2849 = vmatprep.subr.mxu0 %v2843
  %2850 = vmatpush1.msra.mxu0 %v2841
  %2851 = vmatprep.subr.mxu0 0.0
  %2852 = vmatpush1.msra.mxu0 0.0
  %2853 = vmatprep.subr.mxu0 0.0
  %2854 = vmatpush1.msra.mxu0 0.0
  %2855 = vmatprep.subr.mxu0 0.0
  %2856 = vmatpush1.msra.mxu0 0.0
  %2857 = vmatprep.subr.mxu0 0.0
  %2858 = vmatpush1.msra.mxu0 0.0
  %2859 = vmatprep.subr.mxu0 0.0
  %2860 = vmatpush1.msra.mxu0 0.0
  %2861 = vmatprep.subr.mxu0 0.0
  %2862 = vmatpush1.msra.mxu0 0.0
  %2863 = vmatprep.subr.mxu0 0.0
  %2864 = vmatpush1.msra.mxu0 0.0
  %2865 = vmatprep.subr.mxu0 0.0
  %2866 = vmatpush1.msra.mxu0 0.0
  %2867 = vmatprep.subr.mxu0 0.0
  %2868 = vmatpush1.msra.mxu0 0.0
  %2869 = vmatprep.subr.mxu0 0.0
  %2870 = vmatpush1.msra.mxu0 0.0
  %2871 = vmatprep.subr.mxu0 0.0
  %2872 = vmatpush1.msra.mxu0 0.0
  %2873 = vmatprep.subr.mxu0 0.0
  %2874 = vmatpush1.msra.mxu0 0.0
  %2875 = vmatprep.subr.mxu0 0.0
  %2876 = vmatpush1.msra.mxu0 0.0
  %2877 = vmatprep.subr.mxu0 0.0
  %2878 = vmatpush1.msra.mxu0 0.0
  %2879 = vmatprep.subr.mxu0 0.0
  %2880 = vmatpush1.msra.mxu0 0.0
  %2881 = vmatprep.subr.mxu0 0.0
  %2882 = vmatpush1.msra.mxu0 0.0
  %2883 = vmatprep.subr.mxu0 0.0
  %2884 = vmatpush1.msra.mxu0 0.0
  %2885 = vmatprep.subr.mxu0 0.0
  %2886 = vmatpush1.msra.mxu0 0.0
  %2887 = vmatprep.subr.mxu0 0.0
  %2888 = vmatpush1.msra.mxu0 0.0
  %2889 = vmatprep.subr.mxu0 0.0
  %2890 = vmatpush1.msra.mxu0 0.0
  %2891 = vmatprep.subr.mxu0 0.0
  %2892 = vmatpush1.msra.mxu0 0.0
  %2893 = vmatprep.subr.mxu0 0.0
  %2894 = vmatpush1.msra.mxu0 0.0
  %2895 = vmatprep.subr.mxu0 0.0
  %2896 = vmatpush1.msra.mxu0 0.0
  %2897 = vmatprep.subr.mxu0 0.0
  %2898 = vmatpush1.msra.mxu0 0.0
  %2899 = vmatprep.subr.mxu0 0.0
  %2900 = vmatpush1.msra.mxu0 0.0
  %2901 = vmatprep.subr.mxu0 0.0
  %2902 = vmatpush1.msra.mxu0 0.0
  %2903 = vmatprep.subr.mxu0 0.0
  %2904 = vmatpush1.msra.mxu0 0.0
  %2905 = vmatprep.subr.mxu0 0.0
  %2906 = vmatpush1.msra.mxu0 0.0
  %2907 = vmatprep.subr.mxu0 0.0
  %2908 = vmatpush1.msra.mxu0 0.0
  %2909 = vmatprep.subr.mxu0 0.0
  %2910 = vmatpush1.msra.mxu0 0.0
  %2911 = vmatprep.subr.mxu0 0.0
  %2912 = vmatpush1.msra.mxu0 0.0
  %2913 = vmatprep.mubr.f32.mxu0 0.0
  %2914 = vmatmul.mubr.f32.gmra.mrb[0].mxu0 %v2839
  %v2915 = vpop.f32.mrb[0].mxu0
  %v2916 = vadd.f32 0.0, %v2915
  %v2917 = vpop.f32.mrb[0].mxu0
  %v2918 = vadd.f32 0.0, %v2917
  %2919 = vdwg.mxu0
  %2920 = vmatprep.subr.mxu0 %v2847
  %2921 = vmatpush1.msra.mxu0 %v2845
  %2922 = vmatprep.subr.mxu0 0.0
  %2923 = vmatpush1.msra.mxu0 0.0
  %2924 = vmatprep.subr.mxu0 0.0
  %2925 = vmatpush1.msra.mxu0 0.0
  %2926 = vmatprep.subr.mxu0 0.0
  %2927 = vmatpush1.msra.mxu0 0.0
  %2928 = vmatprep.subr.mxu0 0.0
  %2929 = vmatpush1.msra.mxu0 0.0
  %2930 = vmatprep.subr.mxu0 0.0
  %2931 = vmatpush1.msra.mxu0 0.0
  %2932 = vmatprep.subr.mxu0 0.0
  %2933 = vmatpush1.msra.mxu0 0.0
  %2934 = vmatprep.subr.mxu0 0.0
  %2935 = vmatpush1.msra.mxu0 0.0
  %2936 = vmatprep.subr.mxu0 0.0
  %2937 = vmatpush1.msra.mxu0 0.0
  %2938 = vmatprep.subr.mxu0 0.0
  %2939 = vmatpush1.msra.mxu0 0.0
  %2940 = vmatprep.subr.mxu0 0.0
  %2941 = vmatpush1.msra.mxu0 0.0
  %2942 = vmatprep.subr.mxu0 0.0
  %2943 = vmatpush1.msra.mxu0 0.0
  %2944 = vmatprep.subr.mxu0 0.0
  %2945 = vmatpush1.msra.mxu0 0.0
  %2946 = vmatprep.subr.mxu0 0.0
  %2947 = vmatpush1.msra.mxu0 0.0
  %2948 = vmatprep.subr.mxu0 0.0
  %2949 = vmatpush1.msra.mxu0 0.0
  %2950 = vmatprep.subr.mxu0 0.0
  %2951 = vmatpush1.msra.mxu0 0.0
  %2952 = vmatprep.subr.mxu0 0.0
  %2953 = vmatpush1.msra.mxu0 0.0
  %2954 = vmatprep.subr.mxu0 0.0
  %2955 = vmatpush1.msra.mxu0 0.0
  %2956 = vmatprep.subr.mxu0 0.0
  %2957 = vmatpush1.msra.mxu0 0.0
  %2958 = vmatprep.subr.mxu0 0.0
  %2959 = vmatpush1.msra.mxu0 0.0
  %2960 = vmatprep.subr.mxu0 0.0
  %2961 = vmatpush1.msra.mxu0 0.0
  %2962 = vmatprep.subr.mxu0 0.0
  %2963 = vmatpush1.msra.mxu0 0.0
  %2964 = vmatprep.subr.mxu0 0.0
  %2965 = vmatpush1.msra.mxu0 0.0
  %2966 = vmatprep.subr.mxu0 0.0
  %2967 = vmatpush1.msra.mxu0 0.0
  %2968 = vmatprep.subr.mxu0 0.0
  %2969 = vmatpush1.msra.mxu0 0.0
  %2970 = vmatprep.subr.mxu0 0.0
  %2971 = vmatpush1.msra.mxu0 0.0
  %2972 = vmatprep.subr.mxu0 0.0
  %2973 = vmatpush1.msra.mxu0 0.0
  %2974 = vmatprep.subr.mxu0 0.0
  %2975 = vmatpush1.msra.mxu0 0.0
  %2976 = vmatprep.subr.mxu0 0.0
  %2977 = vmatpush1.msra.mxu0 0.0
  %2978 = vmatprep.subr.mxu0 0.0
  %2979 = vmatpush1.msra.mxu0 0.0
  %2980 = vmatprep.subr.mxu0 0.0
  %2981 = vmatpush1.msra.mxu0 0.0
  %2982 = vmatprep.subr.mxu0 0.0
  %2983 = vmatpush1.msra.mxu0 0.0
  %2984 = vmatprep.mubr.f32.mxu0 0.0
  %2985 = vmatmul.mubr.f32.gmra.mrb[0].mxu0 %v2839
  %v2986 = vpop.f32.mrb[0].mxu0
  %v2987 = vadd.f32 0.0, %v2986
  %v2988 = vpop.f32.mrb[0].mxu0
  %v2989 = vadd.f32 0.0, %v2988
  %2990 = vdwg.mxu0
  %v2991 = vadd.f32 %v2822, %v2916
  %v2992 = vadd.f32 %v2823, %v2918
  %v2993 = vadd.f32 %v2824, %v2987
  %v2994 = vadd.f32 %v2825, %v2989
  %2995 = vrot.lane.b32.xlu0 %v2067, 127
  %v2996 = vpop.permute.xlu0 %2995
  %2997 = vrot.lane.b32.xlu0 %v2087, 127
  %v2998 = vpop.permute.xlu0 %2997
  %2999 = vrot.lane.b32.xlu0 %v2068, 127
  %v3000 = vpop.permute.xlu0 %2999
  %3001 = vrot.lane.b32.xlu0 %v2088, 127
  %v3002 = vpop.permute.xlu0 %3001
  %v3003 = vsel %vm1121, %v3000, %v3002
  %v3004 = vsel %vm1121, %v2998, %v3000
  %v3005 = vsel %vm1121, %v2996, %v2998
  %v3006 = vsel %vm1121, %v3002, %v2996
  %v3007 = vmul.f32 %v3005, %v1129
  %v3008 = vmul.f32 %v3004, %v1133
  %v3009 = vmul.f32 %v3003, %v1137
  %v3010 = vmul.f32 %v3006, %v1141
  %v3011 = vadd.f32 %v2826, %v3007
  %v3012 = vadd.f32 %v2827, %v3008
  %v3013 = vadd.f32 %v2828, %v3009
  %v3014 = vadd.f32 %v2829, %v3010
  %v3015 = vmax.f32 %v3007, 0.0
  %v3016 = vmax.f32 %v3008, 0.0
  %v3017 = vmax.f32 %v3009, 0.0
  %v3018 = vmax.f32 %v3010, 0.0
  %s3019 = scalar_lea.vmem %s4, 40
  %v3020 = vld [vmem:[%s3019] sm:$0xff]
  %v3022 = vsel %vm130, %v3020, 0
  %v3025 = vsel %vm137, %v3015, 0
  %v3028 = vsel %vm137, %v3016, 0
  %v3031 = vsel %vm137, %v3017, 0
  %v3034 = vsel %vm137, %v3018, 0
  %3036 = vmatprep.subr.mxu0 %v3028
  %3037 = vmatpush1.msra.mxu0 %v3025
  %3038 = vmatprep.subr.mxu0 0.0
  %3039 = vmatpush1.msra.mxu0 0.0
  %3040 = vmatprep.subr.mxu0 0.0
  %3041 = vmatpush1.msra.mxu0 0.0
  %3042 = vmatprep.subr.mxu0 0.0
  %3043 = vmatpush1.msra.mxu0 0.0
  %3044 = vmatprep.subr.mxu0 0.0
  %3045 = vmatpush1.msra.mxu0 0.0
  %3046 = vmatprep.subr.mxu0 0.0
  %3047 = vmatpush1.msra.mxu0 0.0
  %3048 = vmatprep.subr.mxu0 0.0
  %3049 = vmatpush1.msra.mxu0 0.0
  %3050 = vmatprep.subr.mxu0 0.0
  %3051 = vmatpush1.msra.mxu0 0.0
  %3052 = vmatprep.subr.mxu0 0.0
  %3053 = vmatpush1.msra.mxu0 0.0
  %3054 = vmatprep.subr.mxu0 0.0
  %3055 = vmatpush1.msra.mxu0 0.0
  %3056 = vmatprep.subr.mxu0 0.0
  %3057 = vmatpush1.msra.mxu0 0.0
  %3058 = vmatprep.subr.mxu0 0.0
  %3059 = vmatpush1.msra.mxu0 0.0
  %3060 = vmatprep.subr.mxu0 0.0
  %3061 = vmatpush1.msra.mxu0 0.0
  %3062 = vmatprep.subr.mxu0 0.0
  %3063 = vmatpush1.msra.mxu0 0.0
  %3064 = vmatprep.subr.mxu0 0.0
  %3065 = vmatpush1.msra.mxu0 0.0
  %3066 = vmatprep.subr.mxu0 0.0
  %3067 = vmatpush1.msra.mxu0 0.0
  %3068 = vmatprep.subr.mxu0 0.0
  %3069 = vmatpush1.msra.mxu0 0.0
  %3070 = vmatprep.subr.mxu0 0.0
  %3071 = vmatpush1.msra.mxu0 0.0
  %3072 = vmatprep.subr.mxu0 0.0
  %3073 = vmatpush1.msra.mxu0 0.0
  %3074 = vmatprep.subr.mxu0 0.0
  %3075 = vmatpush1.msra.mxu0 0.0
  %3076 = vmatprep.subr.mxu0 0.0
  %3077 = vmatpush1.msra.mxu0 0.0
  %3078 = vmatprep.subr.mxu0 0.0
  %3079 = vmatpush1.msra.mxu0 0.0
  %3080 = vmatprep.subr.mxu0 0.0
  %3081 = vmatpush1.msra.mxu0 0.0
  %3082 = vmatprep.subr.mxu0 0.0
  %3083 = vmatpush1.msra.mxu0 0.0
  %3084 = vmatprep.subr.mxu0 0.0
  %3085 = vmatpush1.msra.mxu0 0.0
  %3086 = vmatprep.subr.mxu0 0.0
  %3087 = vmatpush1.msra.mxu0 0.0
  %3088 = vmatprep.subr.mxu0 0.0
  %3089 = vmatpush1.msra.mxu0 0.0
  %3090 = vmatprep.subr.mxu0 0.0
  %3091 = vmatpush1.msra.mxu0 0.0
  %3092 = vmatprep.subr.mxu0 0.0
  %3093 = vmatpush1.msra.mxu0 0.0
  %3094 = vmatprep.subr.mxu0 0.0
  %3095 = vmatpush1.msra.mxu0 0.0
  %3096 = vmatprep.subr.mxu0 0.0
  %3097 = vmatpush1.msra.mxu0 0.0
  %3098 = vmatprep.subr.mxu0 0.0
  %3099 = vmatpush1.msra.mxu0 0.0
  %3100 = vmatprep.mubr.f32.mxu0 0.0
  %3101 = vmatmul.mubr.f32.gmra.mrb[0].mxu0 %v3022
  %v3102 = vpop.f32.mrb[0].mxu0
  %v3103 = vadd.f32 0.0, %v3102
  %v3104 = vpop.f32.mrb[0].mxu0
  %v3105 = vadd.f32 0.0, %v3104
  %3106 = vdwg.mxu0
  %3107 = vmatprep.subr.mxu0 %v3034
  %3108 = vmatpush1.msra.mxu0 %v3031
  %3109 = vmatprep.subr.mxu0 0.0
  %3110 = vmatpush1.msra.mxu0 0.0
  %3111 = vmatprep.subr.mxu0 0.0
  %3112 = vmatpush1.msra.mxu0 0.0
  %3113 = vmatprep.subr.mxu0 0.0
  %3114 = vmatpush1.msra.mxu0 0.0
  %3115 = vmatprep.subr.mxu0 0.0
  %3116 = vmatpush1.msra.mxu0 0.0
  %3117 = vmatprep.subr.mxu0 0.0
  %3118 = vmatpush1.msra.mxu0 0.0
  %3119 = vmatprep.subr.mxu0 0.0
  %3120 = vmatpush1.msra.mxu0 0.0
  %3121 = vmatprep.subr.mxu0 0.0
  %3122 = vmatpush1.msra.mxu0 0.0
  %3123 = vmatprep.subr.mxu0 0.0
  %3124 = vmatpush1.msra.mxu0 0.0
  %3125 = vmatprep.subr.mxu0 0.0
  %3126 = vmatpush1.msra.mxu0 0.0
  %3127 = vmatprep.subr.mxu0 0.0
  %3128 = vmatpush1.msra.mxu0 0.0
  %3129 = vmatprep.subr.mxu0 0.0
  %3130 = vmatpush1.msra.mxu0 0.0
  %3131 = vmatprep.subr.mxu0 0.0
  %3132 = vmatpush1.msra.mxu0 0.0
  %3133 = vmatprep.subr.mxu0 0.0
  %3134 = vmatpush1.msra.mxu0 0.0
  %3135 = vmatprep.subr.mxu0 0.0
  %3136 = vmatpush1.msra.mxu0 0.0
  %3137 = vmatprep.subr.mxu0 0.0
  %3138 = vmatpush1.msra.mxu0 0.0
  %3139 = vmatprep.subr.mxu0 0.0
  %3140 = vmatpush1.msra.mxu0 0.0
  %3141 = vmatprep.subr.mxu0 0.0
  %3142 = vmatpush1.msra.mxu0 0.0
  %3143 = vmatprep.subr.mxu0 0.0
  %3144 = vmatpush1.msra.mxu0 0.0
  %3145 = vmatprep.subr.mxu0 0.0
  %3146 = vmatpush1.msra.mxu0 0.0
  %3147 = vmatprep.subr.mxu0 0.0
  %3148 = vmatpush1.msra.mxu0 0.0
  %3149 = vmatprep.subr.mxu0 0.0
  %3150 = vmatpush1.msra.mxu0 0.0
  %3151 = vmatprep.subr.mxu0 0.0
  %3152 = vmatpush1.msra.mxu0 0.0
  %3153 = vmatprep.subr.mxu0 0.0
  %3154 = vmatpush1.msra.mxu0 0.0
  %3155 = vmatprep.subr.mxu0 0.0
  %3156 = vmatpush1.msra.mxu0 0.0
  %3157 = vmatprep.subr.mxu0 0.0
  %3158 = vmatpush1.msra.mxu0 0.0
  %3159 = vmatprep.subr.mxu0 0.0
  %3160 = vmatpush1.msra.mxu0 0.0
  %3161 = vmatprep.subr.mxu0 0.0
  %3162 = vmatpush1.msra.mxu0 0.0
  %3163 = vmatprep.subr.mxu0 0.0
  %3164 = vmatpush1.msra.mxu0 0.0
  %3165 = vmatprep.subr.mxu0 0.0
  %3166 = vmatpush1.msra.mxu0 0.0
  %3167 = vmatprep.subr.mxu0 0.0
  %3168 = vmatpush1.msra.mxu0 0.0
  %3169 = vmatprep.subr.mxu0 0.0
  %3170 = vmatpush1.msra.mxu0 0.0
  %3171 = vmatprep.mubr.f32.mxu0 0.0
  %3172 = vmatmul.mubr.f32.gmra.mrb[0].mxu0 %v3022
  %v3173 = vpop.f32.mrb[0].mxu0
  %v3174 = vadd.f32 0.0, %v3173
  %v3175 = vpop.f32.mrb[0].mxu0
  %v3176 = vadd.f32 0.0, %v3175
  %3177 = vdwg.mxu0
  %v3178 = vadd.f32 %v2991, %v3103
  %v3179 = vadd.f32 %v2992, %v3105
  %v3180 = vadd.f32 %v2993, %v3174
  %v3181 = vadd.f32 %v2994, %v3176
  %3182 = vrot.lane.b32.xlu0 %v2067, 113
  %v3183 = vpop.permute.xlu0 %3182
  %3184 = vrot.lane.b32.xlu0 %v2087, 113
  %v3185 = vpop.permute.xlu0 %3184
  %3186 = vrot.lane.b32.xlu0 %v2068, 113
  %v3187 = vpop.permute.xlu0 %3186
  %3188 = vrot.lane.b32.xlu0 %v2088, 113
  %v3189 = vpop.permute.xlu0 %3188
  %v3190 = vsel %vm1345, %v3187, %v3189
  %v3191 = vsel %vm1345, %v3185, %v3187
  %v3192 = vsel %vm1345, %v3183, %v3185
  %v3193 = vsel %vm1345, %v3189, %v3183
  %v3194 = vmul.f32 %v3192, %v1353
  %v3195 = vmul.f32 %v3191, %v1357
  %v3196 = vmul.f32 %v3190, %v1361
  %v3197 = vmul.f32 %v3193, %v1365
  %v3198 = vadd.f32 %v3011, %v3194
  %v3199 = vadd.f32 %v3012, %v3195
  %v3200 = vadd.f32 %v3013, %v3196
  %v3201 = vadd.f32 %v3014, %v3197
  %v3202 = vmax.f32 %v3194, 0.0
  %v3203 = vmax.f32 %v3195, 0.0
  %v3204 = vmax.f32 %v3196, 0.0
  %v3205 = vmax.f32 %v3197, 0.0
  %s3206 = scalar_lea.vmem %s4, 48
  %v3207 = vld [vmem:[%s3206] sm:$0xff]
  %v3209 = vsel %vm130, %v3207, 0
  %v3212 = vsel %vm137, %v3202, 0
  %v3215 = vsel %vm137, %v3203, 0
  %v3218 = vsel %vm137, %v3204, 0
  %v3221 = vsel %vm137, %v3205, 0
  %3223 = vmatprep.subr.mxu0 %v3215
  %3224 = vmatpush1.msra.mxu0 %v3212
  %3225 = vmatprep.subr.mxu0 0.0
  %3226 = vmatpush1.msra.mxu0 0.0
  %3227 = vmatprep.subr.mxu0 0.0
  %3228 = vmatpush1.msra.mxu0 0.0
  %3229 = vmatprep.subr.mxu0 0.0
  %3230 = vmatpush1.msra.mxu0 0.0
  %3231 = vmatprep.subr.mxu0 0.0
  %3232 = vmatpush1.msra.mxu0 0.0
  %3233 = vmatprep.subr.mxu0 0.0
  %3234 = vmatpush1.msra.mxu0 0.0
  %3235 = vmatprep.subr.mxu0 0.0
  %3236 = vmatpush1.msra.mxu0 0.0
  %3237 = vmatprep.subr.mxu0 0.0
  %3238 = vmatpush1.msra.mxu0 0.0
  %3239 = vmatprep.subr.mxu0 0.0
  %3240 = vmatpush1.msra.mxu0 0.0
  %3241 = vmatprep.subr.mxu0 0.0
  %3242 = vmatpush1.msra.mxu0 0.0
  %3243 = vmatprep.subr.mxu0 0.0
  %3244 = vmatpush1.msra.mxu0 0.0
  %3245 = vmatprep.subr.mxu0 0.0
  %3246 = vmatpush1.msra.mxu0 0.0
  %3247 = vmatprep.subr.mxu0 0.0
  %3248 = vmatpush1.msra.mxu0 0.0
  %3249 = vmatprep.subr.mxu0 0.0
  %3250 = vmatpush1.msra.mxu0 0.0
  %3251 = vmatprep.subr.mxu0 0.0
  %3252 = vmatpush1.msra.mxu0 0.0
  %3253 = vmatprep.subr.mxu0 0.0
  %3254 = vmatpush1.msra.mxu0 0.0
  %3255 = vmatprep.subr.mxu0 0.0
  %3256 = vmatpush1.msra.mxu0 0.0
  %3257 = vmatprep.subr.mxu0 0.0
  %3258 = vmatpush1.msra.mxu0 0.0
  %3259 = vmatprep.subr.mxu0 0.0
  %3260 = vmatpush1.msra.mxu0 0.0
  %3261 = vmatprep.subr.mxu0 0.0
  %3262 = vmatpush1.msra.mxu0 0.0
  %3263 = vmatprep.subr.mxu0 0.0
  %3264 = vmatpush1.msra.mxu0 0.0
  %3265 = vmatprep.subr.mxu0 0.0
  %3266 = vmatpush1.msra.mxu0 0.0
  %3267 = vmatprep.subr.mxu0 0.0
  %3268 = vmatpush1.msra.mxu0 0.0
  %3269 = vmatprep.subr.mxu0 0.0
  %3270 = vmatpush1.msra.mxu0 0.0
  %3271 = vmatprep.subr.mxu0 0.0
  %3272 = vmatpush1.msra.mxu0 0.0
  %3273 = vmatprep.subr.mxu0 0.0
  %3274 = vmatpush1.msra.mxu0 0.0
  %3275 = vmatprep.subr.mxu0 0.0
  %3276 = vmatpush1.msra.mxu0 0.0
  %3277 = vmatprep.subr.mxu0 0.0
  %3278 = vmatpush1.msra.mxu0 0.0
  %3279 = vmatprep.subr.mxu0 0.0
  %3280 = vmatpush1.msra.mxu0 0.0
  %3281 = vmatprep.subr.mxu0 0.0
  %3282 = vmatpush1.msra.mxu0 0.0
  %3283 = vmatprep.subr.mxu0 0.0
  %3284 = vmatpush1.msra.mxu0 0.0
  %3285 = vmatprep.subr.mxu0 0.0
  %3286 = vmatpush1.msra.mxu0 0.0
  %3287 = vmatprep.mubr.f32.mxu0 0.0
  %3288 = vmatmul.mubr.f32.gmra.mrb[0].mxu0 %v3209
  %v3289 = vpop.f32.mrb[0].mxu0
  %v3290 = vadd.f32 0.0, %v3289
  %v3291 = vpop.f32.mrb[0].mxu0
  %v3292 = vadd.f32 0.0, %v3291
  %3293 = vdwg.mxu0
  %3294 = vmatprep.subr.mxu0 %v3221
  %3295 = vmatpush1.msra.mxu0 %v3218
  %3296 = vmatprep.subr.mxu0 0.0
  %3297 = vmatpush1.msra.mxu0 0.0
  %3298 = vmatprep.subr.mxu0 0.0
  %3299 = vmatpush1.msra.mxu0 0.0
  %3300 = vmatprep.subr.mxu0 0.0
  %3301 = vmatpush1.msra.mxu0 0.0
  %3302 = vmatprep.subr.mxu0 0.0
  %3303 = vmatpush1.msra.mxu0 0.0
  %3304 = vmatprep.subr.mxu0 0.0
  %3305 = vmatpush1.msra.mxu0 0.0
  %3306 = vmatprep.subr.mxu0 0.0
  %3307 = vmatpush1.msra.mxu0 0.0
  %3308 = vmatprep.subr.mxu0 0.0
  %3309 = vmatpush1.msra.mxu0 0.0
  %3310 = vmatprep.subr.mxu0 0.0
  %3311 = vmatpush1.msra.mxu0 0.0
  %3312 = vmatprep.subr.mxu0 0.0
  %3313 = vmatpush1.msra.mxu0 0.0
  %3314 = vmatprep.subr.mxu0 0.0
  %3315 = vmatpush1.msra.mxu0 0.0
  %3316 = vmatprep.subr.mxu0 0.0
  %3317 = vmatpush1.msra.mxu0 0.0
  %3318 = vmatprep.subr.mxu0 0.0
  %3319 = vmatpush1.msra.mxu0 0.0
  %3320 = vmatprep.subr.mxu0 0.0
  %3321 = vmatpush1.msra.mxu0 0.0
  %3322 = vmatprep.subr.mxu0 0.0
  %3323 = vmatpush1.msra.mxu0 0.0
  %3324 = vmatprep.subr.mxu0 0.0
  %3325 = vmatpush1.msra.mxu0 0.0
  %3326 = vmatprep.subr.mxu0 0.0
  %3327 = vmatpush1.msra.mxu0 0.0
  %3328 = vmatprep.subr.mxu0 0.0
  %3329 = vmatpush1.msra.mxu0 0.0
  %3330 = vmatprep.subr.mxu0 0.0
  %3331 = vmatpush1.msra.mxu0 0.0
  %3332 = vmatprep.subr.mxu0 0.0
  %3333 = vmatpush1.msra.mxu0 0.0
  %3334 = vmatprep.subr.mxu0 0.0
  %3335 = vmatpush1.msra.mxu0 0.0
  %3336 = vmatprep.subr.mxu0 0.0
  %3337 = vmatpush1.msra.mxu0 0.0
  %3338 = vmatprep.subr.mxu0 0.0
  %3339 = vmatpush1.msra.mxu0 0.0
  %3340 = vmatprep.subr.mxu0 0.0
  %3341 = vmatpush1.msra.mxu0 0.0
  %3342 = vmatprep.subr.mxu0 0.0
  %3343 = vmatpush1.msra.mxu0 0.0
  %3344 = vmatprep.subr.mxu0 0.0
  %3345 = vmatpush1.msra.mxu0 0.0
  %3346 = vmatprep.subr.mxu0 0.0
  %3347 = vmatpush1.msra.mxu0 0.0
  %3348 = vmatprep.subr.mxu0 0.0
  %3349 = vmatpush1.msra.mxu0 0.0
  %3350 = vmatprep.subr.mxu0 0.0
  %3351 = vmatpush1.msra.mxu0 0.0
  %3352 = vmatprep.subr.mxu0 0.0
  %3353 = vmatpush1.msra.mxu0 0.0
  %3354 = vmatprep.subr.mxu0 0.0
  %3355 = vmatpush1.msra.mxu0 0.0
  %3356 = vmatprep.subr.mxu0 0.0
  %3357 = vmatpush1.msra.mxu0 0.0
  %3358 = vmatprep.mubr.f32.mxu0 0.0
  %3359 = vmatmul.mubr.f32.gmra.mrb[0].mxu0 %v3209
  %v3360 = vpop.f32.mrb[0].mxu0
  %v3361 = vadd.f32 0.0, %v3360
  %v3362 = vpop.f32.mrb[0].mxu0
  %v3363 = vadd.f32 0.0, %v3362
  %3364 = vdwg.mxu0
  %v3365 = vadd.f32 %v3178, %v3290
  %v3366 = vadd.f32 %v3179, %v3292
  %v3367 = vadd.f32 %v3180, %v3361
  %v3368 = vadd.f32 %v3181, %v3363
  %3369 = vrot.lane.b32.xlu0 %v2067, 112
  %v3370 = vpop.permute.xlu0 %3369
  %3371 = vrot.lane.b32.xlu0 %v2087, 112
  %v3372 = vpop.permute.xlu0 %3371
  %3373 = vrot.lane.b32.xlu0 %v2068, 112
  %v3374 = vpop.permute.xlu0 %3373
  %3375 = vrot.lane.b32.xlu0 %v2088, 112
  %v3376 = vpop.permute.xlu0 %3375
  %v3377 = vsel %vm1569, %v3374, %v3376
  %v3378 = vsel %vm1569, %v3372, %v3374
  %v3379 = vsel %vm1569, %v3370, %v3372
  %v3380 = vsel %vm1569, %v3376, %v3370
  %v3381 = vmul.f32 %v3379, %v1577
  %v3382 = vmul.f32 %v3378, %v1581
  %v3383 = vmul.f32 %v3377, %v1585
  %v3384 = vmul.f32 %v3380, %v1589
  %v3385 = vadd.f32 %v3198, %v3381
  %v3386 = vadd.f32 %v3199, %v3382
  %v3387 = vadd.f32 %v3200, %v3383
  %v3388 = vadd.f32 %v3201, %v3384
  %v3389 = vmax.f32 %v3381, 0.0
  %v3390 = vmax.f32 %v3382, 0.0
  %v3391 = vmax.f32 %v3383, 0.0
  %v3392 = vmax.f32 %v3384, 0.0
  %s3393 = scalar_lea.vmem %s4, 56
  %v3394 = vld [vmem:[%s3393] sm:$0xff]
  %v3396 = vsel %vm130, %v3394, 0
  %v3399 = vsel %vm137, %v3389, 0
  %v3402 = vsel %vm137, %v3390, 0
  %v3405 = vsel %vm137, %v3391, 0
  %v3408 = vsel %vm137, %v3392, 0
  %3410 = vmatprep.subr.mxu0 %v3402
  %3411 = vmatpush1.msra.mxu0 %v3399
  %3412 = vmatprep.subr.mxu0 0.0
  %3413 = vmatpush1.msra.mxu0 0.0
  %3414 = vmatprep.subr.mxu0 0.0
  %3415 = vmatpush1.msra.mxu0 0.0
  %3416 = vmatprep.subr.mxu0 0.0
  %3417 = vmatpush1.msra.mxu0 0.0
  %3418 = vmatprep.subr.mxu0 0.0
  %3419 = vmatpush1.msra.mxu0 0.0
  %3420 = vmatprep.subr.mxu0 0.0
  %3421 = vmatpush1.msra.mxu0 0.0
  %3422 = vmatprep.subr.mxu0 0.0
  %3423 = vmatpush1.msra.mxu0 0.0
  %3424 = vmatprep.subr.mxu0 0.0
  %3425 = vmatpush1.msra.mxu0 0.0
  %3426 = vmatprep.subr.mxu0 0.0
  %3427 = vmatpush1.msra.mxu0 0.0
  %3428 = vmatprep.subr.mxu0 0.0
  %3429 = vmatpush1.msra.mxu0 0.0
  %3430 = vmatprep.subr.mxu0 0.0
  %3431 = vmatpush1.msra.mxu0 0.0
  %3432 = vmatprep.subr.mxu0 0.0
  %3433 = vmatpush1.msra.mxu0 0.0
  %3434 = vmatprep.subr.mxu0 0.0
  %3435 = vmatpush1.msra.mxu0 0.0
  %3436 = vmatprep.subr.mxu0 0.0
  %3437 = vmatpush1.msra.mxu0 0.0
  %3438 = vmatprep.subr.mxu0 0.0
  %3439 = vmatpush1.msra.mxu0 0.0
  %3440 = vmatprep.subr.mxu0 0.0
  %3441 = vmatpush1.msra.mxu0 0.0
  %3442 = vmatprep.subr.mxu0 0.0
  %3443 = vmatpush1.msra.mxu0 0.0
  %3444 = vmatprep.subr.mxu0 0.0
  %3445 = vmatpush1.msra.mxu0 0.0
  %3446 = vmatprep.subr.mxu0 0.0
  %3447 = vmatpush1.msra.mxu0 0.0
  %3448 = vmatprep.subr.mxu0 0.0
  %3449 = vmatpush1.msra.mxu0 0.0
  %3450 = vmatprep.subr.mxu0 0.0
  %3451 = vmatpush1.msra.mxu0 0.0
  %3452 = vmatprep.subr.mxu0 0.0
  %3453 = vmatpush1.msra.mxu0 0.0
  %3454 = vmatprep.subr.mxu0 0.0
  %3455 = vmatpush1.msra.mxu0 0.0
  %3456 = vmatprep.subr.mxu0 0.0
  %3457 = vmatpush1.msra.mxu0 0.0
  %3458 = vmatprep.subr.mxu0 0.0
  %3459 = vmatpush1.msra.mxu0 0.0
  %3460 = vmatprep.subr.mxu0 0.0
  %3461 = vmatpush1.msra.mxu0 0.0
  %3462 = vmatprep.subr.mxu0 0.0
  %3463 = vmatpush1.msra.mxu0 0.0
  %3464 = vmatprep.subr.mxu0 0.0
  %3465 = vmatpush1.msra.mxu0 0.0
  %3466 = vmatprep.subr.mxu0 0.0
  %3467 = vmatpush1.msra.mxu0 0.0
  %3468 = vmatprep.subr.mxu0 0.0
  %3469 = vmatpush1.msra.mxu0 0.0
  %3470 = vmatprep.subr.mxu0 0.0
  %3471 = vmatpush1.msra.mxu0 0.0
  %3472 = vmatprep.subr.mxu0 0.0
  %3473 = vmatpush1.msra.mxu0 0.0
  %3474 = vmatprep.mubr.f32.mxu0 0.0
  %3475 = vmatmul.mubr.f32.gmra.mrb[0].mxu0 %v3396
  %v3476 = vpop.f32.mrb[0].mxu0
  %v3477 = vadd.f32 0.0, %v3476
  %v3478 = vpop.f32.mrb[0].mxu0
  %v3479 = vadd.f32 0.0, %v3478
  %3480 = vdwg.mxu0
  %3481 = vmatprep.subr.mxu0 %v3408
  %3482 = vmatpush1.msra.mxu0 %v3405
  %3483 = vmatprep.subr.mxu0 0.0
  %3484 = vmatpush1.msra.mxu0 0.0
  %3485 = vmatprep.subr.mxu0 0.0
  %3486 = vmatpush1.msra.mxu0 0.0
  %3487 = vmatprep.subr.mxu0 0.0
  %3488 = vmatpush1.msra.mxu0 0.0
  %3489 = vmatprep.subr.mxu0 0.0
  %3490 = vmatpush1.msra.mxu0 0.0
  %3491 = vmatprep.subr.mxu0 0.0
  %3492 = vmatpush1.msra.mxu0 0.0
  %3493 = vmatprep.subr.mxu0 0.0
  %3494 = vmatpush1.msra.mxu0 0.0
  %3495 = vmatprep.subr.mxu0 0.0
  %3496 = vmatpush1.msra.mxu0 0.0
  %3497 = vmatprep.subr.mxu0 0.0
  %3498 = vmatpush1.msra.mxu0 0.0
  %3499 = vmatprep.subr.mxu0 0.0
  %3500 = vmatpush1.msra.mxu0 0.0
  %3501 = vmatprep.subr.mxu0 0.0
  %3502 = vmatpush1.msra.mxu0 0.0
  %3503 = vmatprep.subr.mxu0 0.0
  %3504 = vmatpush1.msra.mxu0 0.0
  %3505 = vmatprep.subr.mxu0 0.0
  %3506 = vmatpush1.msra.mxu0 0.0
  %3507 = vmatprep.subr.mxu0 0.0
  %3508 = vmatpush1.msra.mxu0 0.0
  %3509 = vmatprep.subr.mxu0 0.0
  %3510 = vmatpush1.msra.mxu0 0.0
  %3511 = vmatprep.subr.mxu0 0.0
  %3512 = vmatpush1.msra.mxu0 0.0
  %3513 = vmatprep.subr.mxu0 0.0
  %3514 = vmatpush1.msra.mxu0 0.0
  %3515 = vmatprep.subr.mxu0 0.0
  %3516 = vmatpush1.msra.mxu0 0.0
  %3517 = vmatprep.subr.mxu0 0.0
  %3518 = vmatpush1.msra.mxu0 0.0
  %3519 = vmatprep.subr.mxu0 0.0
  %3520 = vmatpush1.msra.mxu0 0.0
  %3521 = vmatprep.subr.mxu0 0.0
  %3522 = vmatpush1.msra.mxu0 0.0
  %3523 = vmatprep.subr.mxu0 0.0
  %3524 = vmatpush1.msra.mxu0 0.0
  %3525 = vmatprep.subr.mxu0 0.0
  %3526 = vmatpush1.msra.mxu0 0.0
  %3527 = vmatprep.subr.mxu0 0.0
  %3528 = vmatpush1.msra.mxu0 0.0
  %3529 = vmatprep.subr.mxu0 0.0
  %3530 = vmatpush1.msra.mxu0 0.0
  %3531 = vmatprep.subr.mxu0 0.0
  %3532 = vmatpush1.msra.mxu0 0.0
  %3533 = vmatprep.subr.mxu0 0.0
  %3534 = vmatpush1.msra.mxu0 0.0
  %3535 = vmatprep.subr.mxu0 0.0
  %3536 = vmatpush1.msra.mxu0 0.0
  %3537 = vmatprep.subr.mxu0 0.0
  %3538 = vmatpush1.msra.mxu0 0.0
  %3539 = vmatprep.subr.mxu0 0.0
  %3540 = vmatpush1.msra.mxu0 0.0
  %3541 = vmatprep.subr.mxu0 0.0
  %3542 = vmatpush1.msra.mxu0 0.0
  %3543 = vmatprep.subr.mxu0 0.0
  %3544 = vmatpush1.msra.mxu0 0.0
  %3545 = vmatprep.mubr.f32.mxu0 0.0
  %3546 = vmatmul.mubr.f32.gmra.mrb[0].mxu0 %v3396
  %v3547 = vpop.f32.mrb[0].mxu0
  %v3548 = vadd.f32 0.0, %v3547
  %v3549 = vpop.f32.mrb[0].mxu0
  %v3550 = vadd.f32 0.0, %v3549
  %3551 = vdwg.mxu0
  %v3552 = vadd.f32 %v3365, %v3477
  %v3553 = vadd.f32 %v3366, %v3479
  %v3554 = vadd.f32 %v3367, %v3548
  %v3555 = vadd.f32 %v3368, %v3550
  %3556 = vrot.lane.b32.xlu0 %v2067, 111
  %v3557 = vpop.permute.xlu0 %3556
  %3558 = vrot.lane.b32.xlu0 %v2087, 111
  %v3559 = vpop.permute.xlu0 %3558
  %3560 = vrot.lane.b32.xlu0 %v2068, 111
  %v3561 = vpop.permute.xlu0 %3560
  %3562 = vrot.lane.b32.xlu0 %v2088, 111
  %v3563 = vpop.permute.xlu0 %3562
  %v3564 = vsel %vm1793, %v3561, %v3563
  %v3565 = vsel %vm1793, %v3559, %v3561
  %v3566 = vsel %vm1793, %v3557, %v3559
  %v3567 = vsel %vm1793, %v3563, %v3557
  %v3568 = vmul.f32 %v3566, %v1801
  %v3569 = vmul.f32 %v3565, %v1805
  %v3570 = vmul.f32 %v3564, %v1809
  %v3571 = vmul.f32 %v3567, %v1813
  %v3572 = vadd.f32 %v3385, %v3568
  %v3573 = vadd.f32 %v3386, %v3569
  %v3574 = vadd.f32 %v3387, %v3570
  %v3575 = vadd.f32 %v3388, %v3571
  %v3576 = vmax.f32 %v3568, 0.0
  %v3577 = vmax.f32 %v3569, 0.0
  %v3578 = vmax.f32 %v3570, 0.0
  %v3579 = vmax.f32 %v3571, 0.0
  %s3580 = scalar_lea.vmem %s4, 64
  %v3581 = vld [vmem:[%s3580] sm:$0xff]
  %v3583 = vsel %vm130, %v3581, 0
  %v3586 = vsel %vm137, %v3576, 0
  %v3589 = vsel %vm137, %v3577, 0
  %v3592 = vsel %vm137, %v3578, 0
  %v3595 = vsel %vm137, %v3579, 0
  %3597 = vmatprep.subr.mxu0 %v3589
  %3598 = vmatpush1.msra.mxu0 %v3586
  %3599 = vmatprep.subr.mxu0 0.0
  %3600 = vmatpush1.msra.mxu0 0.0
  %3601 = vmatprep.subr.mxu0 0.0
  %3602 = vmatpush1.msra.mxu0 0.0
  %3603 = vmatprep.subr.mxu0 0.0
  %3604 = vmatpush1.msra.mxu0 0.0
  %3605 = vmatprep.subr.mxu0 0.0
  %3606 = vmatpush1.msra.mxu0 0.0
  %3607 = vmatprep.subr.mxu0 0.0
  %3608 = vmatpush1.msra.mxu0 0.0
  %3609 = vmatprep.subr.mxu0 0.0
  %3610 = vmatpush1.msra.mxu0 0.0
  %3611 = vmatprep.subr.mxu0 0.0
  %3612 = vmatpush1.msra.mxu0 0.0
  %3613 = vmatprep.subr.mxu0 0.0
  %3614 = vmatpush1.msra.mxu0 0.0
  %3615 = vmatprep.subr.mxu0 0.0
  %3616 = vmatpush1.msra.mxu0 0.0
  %3617 = vmatprep.subr.mxu0 0.0
  %3618 = vmatpush1.msra.mxu0 0.0
  %3619 = vmatprep.subr.mxu0 0.0
  %3620 = vmatpush1.msra.mxu0 0.0
  %3621 = vmatprep.subr.mxu0 0.0
  %3622 = vmatpush1.msra.mxu0 0.0
  %3623 = vmatprep.subr.mxu0 0.0
  %3624 = vmatpush1.msra.mxu0 0.0
  %3625 = vmatprep.subr.mxu0 0.0
  %3626 = vmatpush1.msra.mxu0 0.0
  %3627 = vmatprep.subr.mxu0 0.0
  %3628 = vmatpush1.msra.mxu0 0.0
  %3629 = vmatprep.subr.mxu0 0.0
  %3630 = vmatpush1.msra.mxu0 0.0
  %3631 = vmatprep.subr.mxu0 0.0
  %3632 = vmatpush1.msra.mxu0 0.0
  %3633 = vmatprep.subr.mxu0 0.0
  %3634 = vmatpush1.msra.mxu0 0.0
  %3635 = vmatprep.subr.mxu0 0.0
  %3636 = vmatpush1.msra.mxu0 0.0
  %3637 = vmatprep.subr.mxu0 0.0
  %3638 = vmatpush1.msra.mxu0 0.0
  %3639 = vmatprep.subr.mxu0 0.0
  %3640 = vmatpush1.msra.mxu0 0.0
  %3641 = vmatprep.subr.mxu0 0.0
  %3642 = vmatpush1.msra.mxu0 0.0
  %3643 = vmatprep.subr.mxu0 0.0
  %3644 = vmatpush1.msra.mxu0 0.0
  %3645 = vmatprep.subr.mxu0 0.0
  %3646 = vmatpush1.msra.mxu0 0.0
  %3647 = vmatprep.subr.mxu0 0.0
  %3648 = vmatpush1.msra.mxu0 0.0
  %3649 = vmatprep.subr.mxu0 0.0
  %3650 = vmatpush1.msra.mxu0 0.0
  %3651 = vmatprep.subr.mxu0 0.0
  %3652 = vmatpush1.msra.mxu0 0.0
  %3653 = vmatprep.subr.mxu0 0.0
  %3654 = vmatpush1.msra.mxu0 0.0
  %3655 = vmatprep.subr.mxu0 0.0
  %3656 = vmatpush1.msra.mxu0 0.0
  %3657 = vmatprep.subr.mxu0 0.0
  %3658 = vmatpush1.msra.mxu0 0.0
  %3659 = vmatprep.subr.mxu0 0.0
  %3660 = vmatpush1.msra.mxu0 0.0
  %3661 = vmatprep.mubr.f32.mxu0 0.0
  %3662 = vmatmul.mubr.f32.gmra.mrb[0].mxu0 %v3583
  %v3663 = vpop.f32.mrb[0].mxu0
  %v3664 = vadd.f32 0.0, %v3663
  %v3665 = vpop.f32.mrb[0].mxu0
  %v3666 = vadd.f32 0.0, %v3665
  %3667 = vdwg.mxu0
  %3668 = vmatprep.subr.mxu0 %v3595
  %3669 = vmatpush1.msra.mxu0 %v3592
  %3670 = vmatprep.subr.mxu0 0.0
  %3671 = vmatpush1.msra.mxu0 0.0
  %3672 = vmatprep.subr.mxu0 0.0
  %3673 = vmatpush1.msra.mxu0 0.0
  %3674 = vmatprep.subr.mxu0 0.0
  %3675 = vmatpush1.msra.mxu0 0.0
  %3676 = vmatprep.subr.mxu0 0.0
  %3677 = vmatpush1.msra.mxu0 0.0
  %3678 = vmatprep.subr.mxu0 0.0
  %3679 = vmatpush1.msra.mxu0 0.0
  %3680 = vmatprep.subr.mxu0 0.0
  %3681 = vmatpush1.msra.mxu0 0.0
  %3682 = vmatprep.subr.mxu0 0.0
  %3683 = vmatpush1.msra.mxu0 0.0
  %3684 = vmatprep.subr.mxu0 0.0
  %3685 = vmatpush1.msra.mxu0 0.0
  %3686 = vmatprep.subr.mxu0 0.0
  %3687 = vmatpush1.msra.mxu0 0.0
  %3688 = vmatprep.subr.mxu0 0.0
  %3689 = vmatpush1.msra.mxu0 0.0
  %3690 = vmatprep.subr.mxu0 0.0
  %3691 = vmatpush1.msra.mxu0 0.0
  %3692 = vmatprep.subr.mxu0 0.0
  %3693 = vmatpush1.msra.mxu0 0.0
  %3694 = vmatprep.subr.mxu0 0.0
  %3695 = vmatpush1.msra.mxu0 0.0
  %3696 = vmatprep.subr.mxu0 0.0
  %3697 = vmatpush1.msra.mxu0 0.0
  %3698 = vmatprep.subr.mxu0 0.0
  %3699 = vmatpush1.msra.mxu0 0.0
  %3700 = vmatprep.subr.mxu0 0.0
  %3701 = vmatpush1.msra.mxu0 0.0
  %3702 = vmatprep.subr.mxu0 0.0
  %3703 = vmatpush1.msra.mxu0 0.0
  %3704 = vmatprep.subr.mxu0 0.0
  %3705 = vmatpush1.msra.mxu0 0.0
  %3706 = vmatprep.subr.mxu0 0.0
  %3707 = vmatpush1.msra.mxu0 0.0
  %3708 = vmatprep.subr.mxu0 0.0
  %3709 = vmatpush1.msra.mxu0 0.0
  %3710 = vmatprep.subr.mxu0 0.0
  %3711 = vmatpush1.msra.mxu0 0.0
  %3712 = vmatprep.subr.mxu0 0.0
  %3713 = vmatpush1.msra.mxu0 0.0
  %3714 = vmatprep.subr.mxu0 0.0
  %3715 = vmatpush1.msra.mxu0 0.0
  %3716 = vmatprep.subr.mxu0 0.0
  %3717 = vmatpush1.msra.mxu0 0.0
  %3718 = vmatprep.subr.mxu0 0.0
  %3719 = vmatpush1.msra.mxu0 0.0
  %3720 = vmatprep.subr.mxu0 0.0
  %3721 = vmatpush1.msra.mxu0 0.0
  %3722 = vmatprep.subr.mxu0 0.0
  %3723 = vmatpush1.msra.mxu0 0.0
  %3724 = vmatprep.subr.mxu0 0.0
  %3725 = vmatpush1.msra.mxu0 0.0
  %3726 = vmatprep.subr.mxu0 0.0
  %3727 = vmatpush1.msra.mxu0 0.0
  %3728 = vmatprep.subr.mxu0 0.0
  %3729 = vmatpush1.msra.mxu0 0.0
  %3730 = vmatprep.subr.mxu0 0.0
  %3731 = vmatpush1.msra.mxu0 0.0
  %3732 = vmatprep.mubr.f32.mxu0 0.0
  %3733 = vmatmul.mubr.f32.gmra.mrb[0].mxu0 %v3583
  %v3734 = vpop.f32.mrb[0].mxu0
  %v3735 = vadd.f32 0.0, %v3734
  %v3736 = vpop.f32.mrb[0].mxu0
  %v3737 = vadd.f32 0.0, %v3736
  %3738 = vdwg.mxu0
  %v3739 = vadd.f32 %v3552, %v3664
  %v3740 = vadd.f32 %v3553, %v3666
  %v3741 = vadd.f32 %v3554, %v3735
  %v3742 = vadd.f32 %v3555, %v3737
  %v3743 = vld [vmem:[%s5] sm:$0xff]
  %3745 = vset.pattern.permute.xlu0 0
  %3746 = vperm.xlu0 %3745, %v3743
  %v3747 = vpop.permute.xlu0 %3746
  %v3749 = vadd.f32 %v3739, %v3747
  %v3750 = vadd.f32 %v3740, %v3747
  %v3751 = vadd.f32 %v3741, %v3747
  %v3752 = vadd.f32 %v3742, %v3747
  %v3753 = vmul.f32 %v3572, %v2032
  %v3754 = vmul.f32 %v3573, %v2036
  %v3755 = vmul.f32 %v3574, %v2040
  %v3756 = vmul.f32 %v3575, %v2044
  %v3761 = vcombine.low %v3753, %v3754
  %v3762 = vcombine.low %v3755, %v3756
  %v3765 = vadd.f32 %v2067, %v3761
  %v3766 = vadd.f32 %v2068, %v3762
  %v3771 = vcombine.low %v3749, %v3750
  %v3772 = vcombine.low %v3751, %v3752
  %v3775 = vadd.f32 %v3765, %v3771
  %v3776 = vadd.f32 %v3766, %v3772
  %v3777 = vcombine.high %v3749, %v3750
  %v3778 = vcombine.high %v3751, %v3752
  %v3781 = vadd.f32 %v3765, %v3777
  %v3782 = vadd.f32 %v3766, %v3778
  %v3783 = vadd.f32 %v2073, %v3775
  %v3784 = vadd.f32 %v2074, %v3776
  %v3785 = vadd.f32 %v2083, %v3781
  %v3786 = vadd.f32 %v2084, %v3782
  %v3789 = vcombine.high %v3783, %v3783
  %v3790 = vcombine.high %v3784, %v3784
  %3793 = vrot.lane.b32.xlu0 %v3783, 17
  %v3794 = vpop.permute.xlu0 %3793
  %3795 = vrot.lane.b32.xlu0 %v3789, 17
  %v3796 = vpop.permute.xlu0 %3795
  %3797 = vrot.lane.b32.xlu0 %v3784, 17
  %v3798 = vpop.permute.xlu0 %3797
  %3799 = vrot.lane.b32.xlu0 %v3790, 17
  %v3800 = vpop.permute.xlu0 %3799
  %v3801 = vsel %vm55, %v3798, %v3800
  %v3802 = vsel %vm55, %v3796, %v3798
  %v3803 = vsel %vm55, %v3794, %v3796
  %v3804 = vsel %vm55, %v3800, %v3794
  %v3805 = vmul.f32 %v3804, %v63
  %v3806 = vmul.f32 %v3803, %v67
  %v3807 = vmul.f32 %v3802, %v71
  %v3808 = vmul.f32 %v3801, %v75
  %v3809 = vmax.f32 %v3805, 0.0
  %v3810 = vmax.f32 %v3806, 0.0
  %v3811 = vmax.f32 %v3807, 0.0
  %v3812 = vmax.f32 %v3808, 0.0
  %v3813 = vld [vmem:[%s6] sm:$0xf]
  %3814 = vrot.lane.b32.xlu0 %v3783, 16
  %v3815 = vpop.permute.xlu0 %3814
  %3816 = vrot.lane.b32.xlu0 %v3789, 16
  %v3817 = vpop.permute.xlu0 %3816
  %3818 = vrot.lane.b32.xlu0 %v3784, 16
  %v3819 = vpop.permute.xlu0 %3818
  %3820 = vrot.lane.b32.xlu0 %v3790, 16
  %v3821 = vpop.permute.xlu0 %3820
  %v3822 = vsel %vm94, %v3819, %v3821
  %v3823 = vsel %vm94, %v3817, %v3819
  %v3824 = vsel %vm94, %v3815, %v3817
  %v3825 = vsel %vm94, %v3821, %v3815
  %v3826 = vmul.f32 %v3825, %v102
  %v3827 = vmul.f32 %v3824, %v106
  %v3828 = vmul.f32 %v3823, %v110
  %v3829 = vmul.f32 %v3822, %v114
  %v3830 = vadd.f32 %v3805, %v3826
  %v3831 = vadd.f32 %v3806, %v3827
  %v3832 = vadd.f32 %v3807, %v3828
  %v3833 = vadd.f32 %v3808, %v3829
  %v3834 = vmax.f32 %v3826, 0.0
  %v3835 = vmax.f32 %v3827, 0.0
  %v3836 = vmax.f32 %v3828, 0.0
  %v3837 = vmax.f32 %v3829, 0.0
  %s3838 = scalar_lea.vmem %s6, 4
  %v3839 = vld [vmem:[%s3838] sm:$0xf]
  %v3841 = vsel %vm130, %v3839, 0
  %v3844 = vsel %vm137, %v3834, 0
  %v3847 = vsel %vm137, %v3835, 0
  %v3850 = vsel %vm137, %v3836, 0
  %v3853 = vsel %vm137, %v3837, 0
  %3855 = vmatprep.subr.mxu0 %v3847
  %3856 = vmatpush1.msra.mxu0 %v3844
  %3857 = vmatprep.subr.mxu0 0.0
  %3858 = vmatpush1.msra.mxu0 0.0
  %3859 = vmatprep.subr.mxu0 0.0
  %3860 = vmatpush1.msra.mxu0 0.0
  %3861 = vmatprep.subr.mxu0 0.0
  %3862 = vmatpush1.msra.mxu0 0.0
  %3863 = vmatprep.subr.mxu0 0.0
  %3864 = vmatpush1.msra.mxu0 0.0
  %3865 = vmatprep.subr.mxu0 0.0
  %3866 = vmatpush1.msra.mxu0 0.0
  %3867 = vmatprep.subr.mxu0 0.0
  %3868 = vmatpush1.msra.mxu0 0.0
  %3869 = vmatprep.subr.mxu0 0.0
  %3870 = vmatpush1.msra.mxu0 0.0
  %3871 = vmatprep.subr.mxu0 0.0
  %3872 = vmatpush1.msra.mxu0 0.0
  %3873 = vmatprep.subr.mxu0 0.0
  %3874 = vmatpush1.msra.mxu0 0.0
  %3875 = vmatprep.subr.mxu0 0.0
  %3876 = vmatpush1.msra.mxu0 0.0
  %3877 = vmatprep.subr.mxu0 0.0
  %3878 = vmatpush1.msra.mxu0 0.0
  %3879 = vmatprep.subr.mxu0 0.0
  %3880 = vmatpush1.msra.mxu0 0.0
  %3881 = vmatprep.subr.mxu0 0.0
  %3882 = vmatpush1.msra.mxu0 0.0
  %3883 = vmatprep.subr.mxu0 0.0
  %3884 = vmatpush1.msra.mxu0 0.0
  %3885 = vmatprep.subr.mxu0 0.0
  %3886 = vmatpush1.msra.mxu0 0.0
  %3887 = vmatprep.subr.mxu0 0.0
  %3888 = vmatpush1.msra.mxu0 0.0
  %3889 = vmatprep.subr.mxu0 0.0
  %3890 = vmatpush1.msra.mxu0 0.0
  %3891 = vmatprep.subr.mxu0 0.0
  %3892 = vmatpush1.msra.mxu0 0.0
  %3893 = vmatprep.subr.mxu0 0.0
  %3894 = vmatpush1.msra.mxu0 0.0
  %3895 = vmatprep.subr.mxu0 0.0
  %3896 = vmatpush1.msra.mxu0 0.0
  %3897 = vmatprep.subr.mxu0 0.0
  %3898 = vmatpush1.msra.mxu0 0.0
  %3899 = vmatprep.subr.mxu0 0.0
  %3900 = vmatpush1.msra.mxu0 0.0
  %3901 = vmatprep.subr.mxu0 0.0
  %3902 = vmatpush1.msra.mxu0 0.0
  %3903 = vmatprep.subr.mxu0 0.0
  %3904 = vmatpush1.msra.mxu0 0.0
  %3905 = vmatprep.subr.mxu0 0.0
  %3906 = vmatpush1.msra.mxu0 0.0
  %3907 = vmatprep.subr.mxu0 0.0
  %3908 = vmatpush1.msra.mxu0 0.0
  %3909 = vmatprep.subr.mxu0 0.0
  %3910 = vmatpush1.msra.mxu0 0.0
  %3911 = vmatprep.subr.mxu0 0.0
  %3912 = vmatpush1.msra.mxu0 0.0
  %3913 = vmatprep.subr.mxu0 0.0
  %3914 = vmatpush1.msra.mxu0 0.0
  %3915 = vmatprep.subr.mxu0 0.0
  %3916 = vmatpush1.msra.mxu0 0.0
  %3917 = vmatprep.subr.mxu0 0.0
  %3918 = vmatpush1.msra.mxu0 0.0
  %3919 = vmatprep.mubr.f32.mxu0 0.0
  %3920 = vmatmul.mubr.f32.gmra.mrb[0].mxu0 %v3841
  %v3921 = vpop.f32.mrb[0].mxu0
  %v3922 = vadd.f32 0.0, %v3921
  %v3923 = vpop.f32.mrb[0].mxu0
  %v3924 = vadd.f32 0.0, %v3923
  %3925 = vdwg.mxu0
  %3926 = vmatprep.subr.mxu0 %v3853
  %3927 = vmatpush1.msra.mxu0 %v3850
  %3928 = vmatprep.subr.mxu0 0.0
  %3929 = vmatpush1.msra.mxu0 0.0
  %3930 = vmatprep.subr.mxu0 0.0
  %3931 = vmatpush1.msra.mxu0 0.0
  %3932 = vmatprep.subr.mxu0 0.0
  %3933 = vmatpush1.msra.mxu0 0.0
  %3934 = vmatprep.subr.mxu0 0.0
  %3935 = vmatpush1.msra.mxu0 0.0
  %3936 = vmatprep.subr.mxu0 0.0
  %3937 = vmatpush1.msra.mxu0 0.0
  %3938 = vmatprep.subr.mxu0 0.0
  %3939 = vmatpush1.msra.mxu0 0.0
  %3940 = vmatprep.subr.mxu0 0.0
  %3941 = vmatpush1.msra.mxu0 0.0
  %3942 = vmatprep.subr.mxu0 0.0
  %3943 = vmatpush1.msra.mxu0 0.0
  %3944 = vmatprep.subr.mxu0 0.0
  %3945 = vmatpush1.msra.mxu0 0.0
  %3946 = vmatprep.subr.mxu0 0.0
  %3947 = vmatpush1.msra.mxu0 0.0
  %3948 = vmatprep.subr.mxu0 0.0
  %3949 = vmatpush1.msra.mxu0 0.0
  %3950 = vmatprep.subr.mxu0 0.0
  %3951 = vmatpush1.msra.mxu0 0.0
  %3952 = vmatprep.subr.mxu0 0.0
  %3953 = vmatpush1.msra.mxu0 0.0
  %3954 = vmatprep.subr.mxu0 0.0
  %3955 = vmatpush1.msra.mxu0 0.0
  %3956 = vmatprep.subr.mxu0 0.0
  %3957 = vmatpush1.msra.mxu0 0.0
  %3958 = vmatprep.subr.mxu0 0.0
  %3959 = vmatpush1.msra.mxu0 0.0
  %3960 = vmatprep.subr.mxu0 0.0
  %3961 = vmatpush1.msra.mxu0 0.0
  %3962 = vmatprep.subr.mxu0 0.0
  %3963 = vmatpush1.msra.mxu0 0.0
  %3964 = vmatprep.subr.mxu0 0.0
  %3965 = vmatpush1.msra.mxu0 0.0
  %3966 = vmatprep.subr.mxu0 0.0
  %3967 = vmatpush1.msra.mxu0 0.0
  %3968 = vmatprep.subr.mxu0 0.0
  %3969 = vmatpush1.msra.mxu0 0.0
  %3970 = vmatprep.subr.mxu0 0.0
  %3971 = vmatpush1.msra.mxu0 0.0
  %3972 = vmatprep.subr.mxu0 0.0
  %3973 = vmatpush1.msra.mxu0 0.0
  %3974 = vmatprep.subr.mxu0 0.0
  %3975 = vmatpush1.msra.mxu0 0.0
  %3976 = vmatprep.subr.mxu0 0.0
  %3977 = vmatpush1.msra.mxu0 0.0
  %3978 = vmatprep.subr.mxu0 0.0
  %3979 = vmatpush1.msra.mxu0 0.0
  %3980 = vmatprep.subr.mxu0 0.0
  %3981 = vmatpush1.msra.mxu0 0.0
  %3982 = vmatprep.subr.mxu0 0.0
  %3983 = vmatpush1.msra.mxu0 0.0
  %3984 = vmatprep.subr.mxu0 0.0
  %3985 = vmatpush1.msra.mxu0 0.0
  %3986 = vmatprep.subr.mxu0 0.0
  %3987 = vmatpush1.msra.mxu0 0.0
  %3988 = vmatprep.subr.mxu0 0.0
  %3989 = vmatpush1.msra.mxu0 0.0
  %3990 = vmatprep.mubr.f32.mxu0 0.0
  %3991 = vmatmul.mubr.f32.gmra.mrb[0].mxu0 %v3841
  %v3992 = vpop.f32.mrb[0].mxu0
  %v3993 = vadd.f32 0.0, %v3992
  %v3994 = vpop.f32.mrb[0].mxu0
  %v3995 = vadd.f32 0.0, %v3994
  %3996 = vdwg.mxu0
  %v3998 = vsel %vm130, %v3813, 0
  %v4001 = vsel %vm137, %v3809, 0
  %v4004 = vsel %vm137, %v3810, 0
  %v4007 = vsel %vm137, %v3811, 0
  %v4010 = vsel %vm137, %v3812, 0
  %4012 = vmatprep.subr.mxu0 %v4004
  %4013 = vmatpush1.msra.mxu0 %v4001
  %4014 = vmatprep.subr.mxu0 0.0
  %4015 = vmatpush1.msra.mxu0 0.0
  %4016 = vmatprep.subr.mxu0 0.0
  %4017 = vmatpush1.msra.mxu0 0.0
  %4018 = vmatprep.subr.mxu0 0.0
  %4019 = vmatpush1.msra.mxu0 0.0
  %4020 = vmatprep.subr.mxu0 0.0
  %4021 = vmatpush1.msra.mxu0 0.0
  %4022 = vmatprep.subr.mxu0 0.0
  %4023 = vmatpush1.msra.mxu0 0.0
  %4024 = vmatprep.subr.mxu0 0.0
  %4025 = vmatpush1.msra.mxu0 0.0
  %4026 = vmatprep.subr.mxu0 0.0
  %4027 = vmatpush1.msra.mxu0 0.0
  %4028 = vmatprep.subr.mxu0 0.0
  %4029 = vmatpush1.msra.mxu0 0.0
  %4030 = vmatprep.subr.mxu0 0.0
  %4031 = vmatpush1.msra.mxu0 0.0
  %4032 = vmatprep.subr.mxu0 0.0
  %4033 = vmatpush1.msra.mxu0 0.0
  %4034 = vmatprep.subr.mxu0 0.0
  %4035 = vmatpush1.msra.mxu0 0.0
  %4036 = vmatprep.subr.mxu0 0.0
  %4037 = vmatpush1.msra.mxu0 0.0
  %4038 = vmatprep.subr.mxu0 0.0
  %4039 = vmatpush1.msra.mxu0 0.0
  %4040 = vmatprep.subr.mxu0 0.0
  %4041 = vmatpush1.msra.mxu0 0.0
  %4042 = vmatprep.subr.mxu0 0.0
  %4043 = vmatpush1.msra.mxu0 0.0
  %4044 = vmatprep.subr.mxu0 0.0
  %4045 = vmatpush1.msra.mxu0 0.0
  %4046 = vmatprep.subr.mxu0 0.0
  %4047 = vmatpush1.msra.mxu0 0.0
  %4048 = vmatprep.subr.mxu0 0.0
  %4049 = vmatpush1.msra.mxu0 0.0
  %4050 = vmatprep.subr.mxu0 0.0
  %4051 = vmatpush1.msra.mxu0 0.0
  %4052 = vmatprep.subr.mxu0 0.0
  %4053 = vmatpush1.msra.mxu0 0.0
  %4054 = vmatprep.subr.mxu0 0.0
  %4055 = vmatpush1.msra.mxu0 0.0
  %4056 = vmatprep.subr.mxu0 0.0
  %4057 = vmatpush1.msra.mxu0 0.0
  %4058 = vmatprep.subr.mxu0 0.0
  %4059 = vmatpush1.msra.mxu0 0.0
  %4060 = vmatprep.subr.mxu0 0.0
  %4061 = vmatpush1.msra.mxu0 0.0
  %4062 = vmatprep.subr.mxu0 0.0
  %4063 = vmatpush1.msra.mxu0 0.0
  %4064 = vmatprep.subr.mxu0 0.0
  %4065 = vmatpush1.msra.mxu0 0.0
  %4066 = vmatprep.subr.mxu0 0.0
  %4067 = vmatpush1.msra.mxu0 0.0
  %4068 = vmatprep.subr.mxu0 0.0
  %4069 = vmatpush1.msra.mxu0 0.0
  %4070 = vmatprep.subr.mxu0 0.0
  %4071 = vmatpush1.msra.mxu0 0.0
  %4072 = vmatprep.subr.mxu0 0.0
  %4073 = vmatpush1.msra.mxu0 0.0
  %4074 = vmatprep.subr.mxu0 0.0
  %4075 = vmatpush1.msra.mxu0 0.0
  %4076 = vmatprep.mubr.f32.mxu0 0.0
  %4077 = vmatmul.mubr.f32.gmra.mrb[0].mxu0 %v3998
  %v4078 = vpop.f32.mrb[0].mxu0
  %v4079 = vadd.f32 %v3922, %v4078
  %v4080 = vpop.f32.mrb[0].mxu0
  %v4081 = vadd.f32 %v3924, %v4080
  %4082 = vdwg.mxu0
  %4083 = vmatprep.subr.mxu0 %v4010
  %4084 = vmatpush1.msra.mxu0 %v4007
  %4085 = vmatprep.subr.mxu0 0.0
  %4086 = vmatpush1.msra.mxu0 0.0
  %4087 = vmatprep.subr.mxu0 0.0
  %4088 = vmatpush1.msra.mxu0 0.0
  %4089 = vmatprep.subr.mxu0 0.0
  %4090 = vmatpush1.msra.mxu0 0.0
  %4091 = vmatprep.subr.mxu0 0.0
  %4092 = vmatpush1.msra.mxu0 0.0
  %4093 = vmatprep.subr.mxu0 0.0
  %4094 = vmatpush1.msra.mxu0 0.0
  %4095 = vmatprep.subr.mxu0 0.0
  %4096 = vmatpush1.msra.mxu0 0.0
  %4097 = vmatprep.subr.mxu0 0.0
  %4098 = vmatpush1.msra.mxu0 0.0
  %4099 = vmatprep.subr.mxu0 0.0
  %4100 = vmatpush1.msra.mxu0 0.0
  %4101 = vmatprep.subr.mxu0 0.0
  %4102 = vmatpush1.msra.mxu0 0.0
  %4103 = vmatprep.subr.mxu0 0.0
  %4104 = vmatpush1.msra.mxu0 0.0
  %4105 = vmatprep.subr.mxu0 0.0
  %4106 = vmatpush1.msra.mxu0 0.0
  %4107 = vmatprep.subr.mxu0 0.0
  %4108 = vmatpush1.msra.mxu0 0.0
  %4109 = vmatprep.subr.mxu0 0.0
  %4110 = vmatpush1.msra.mxu0 0.0
  %4111 = vmatprep.subr.mxu0 0.0
  %4112 = vmatpush1.msra.mxu0 0.0
  %4113 = vmatprep.subr.mxu0 0.0
  %4114 = vmatpush1.msra.mxu0 0.0
  %4115 = vmatprep.subr.mxu0 0.0
  %4116 = vmatpush1.msra.mxu0 0.0
  %4117 = vmatprep.subr.mxu0 0.0
  %4118 = vmatpush1.msra.mxu0 0.0
  %4119 = vmatprep.subr.mxu0 0.0
  %4120 = vmatpush1.msra.mxu0 0.0
  %4121 = vmatprep.subr.mxu0 0.0
  %4122 = vmatpush1.msra.mxu0 0.0
  %4123 = vmatprep.subr.mxu0 0.0
  %4124 = vmatpush1.msra.mxu0 0.0
  %4125 = vmatprep.subr.mxu0 0.0
  %4126 = vmatpush1.msra.mxu0 0.0
  %4127 = vmatprep.subr.mxu0 0.0
  %4128 = vmatpush1.msra.mxu0 0.0
  %4129 = vmatprep.subr.mxu0 0.0
  %4130 = vmatpush1.msra.mxu0 0.0
  %4131 = vmatprep.subr.mxu0 0.0
  %4132 = vmatpush1.msra.mxu0 0.0
  %4133 = vmatprep.subr.mxu0 0.0
  %4134 = vmatpush1.msra.mxu0 0.0
  %4135 = vmatprep.subr.mxu0 0.0
  %4136 = vmatpush1.msra.mxu0 0.0
  %4137 = vmatprep.subr.mxu0 0.0
  %4138 = vmatpush1.msra.mxu0 0.0
  %4139 = vmatprep.subr.mxu0 0.0
  %4140 = vmatpush1.msra.mxu0 0.0
  %4141 = vmatprep.subr.mxu0 0.0
  %4142 = vmatpush1.msra.mxu0 0.0
  %4143 = vmatprep.subr.mxu0 0.0
  %4144 = vmatpush1.msra.mxu0 0.0
  %4145 = vmatprep.subr.mxu0 0.0
  %4146 = vmatpush1.msra.mxu0 0.0
  %4147 = vmatprep.mubr.f32.mxu0 0.0
  %4148 = vmatmul.mubr.f32.gmra.mrb[0].mxu0 %v3998
  %v4149 = vpop.f32.mrb[0].mxu0
  %v4150 = vadd.f32 %v3993, %v4149
  %v4151 = vpop.f32.mrb[0].mxu0
  %v4152 = vadd.f32 %v3995, %v4151
  %4153 = vdwg.mxu0
  %4154 = vrot.lane.b32.xlu0 %v3783, 15
  %v4155 = vpop.permute.xlu0 %4154
  %4156 = vrot.lane.b32.xlu0 %v3789, 15
  %v4157 = vpop.permute.xlu0 %4156
  %4158 = vrot.lane.b32.xlu0 %v3784, 15
  %v4159 = vpop.permute.xlu0 %4158
  %4160 = vrot.lane.b32.xlu0 %v3790, 15
  %v4161 = vpop.permute.xlu0 %4160
  %v4162 = vsel %vm484, %v4159, %v4161
  %v4163 = vsel %vm484, %v4157, %v4159
  %v4164 = vsel %vm484, %v4155, %v4157
  %v4165 = vsel %vm484, %v4161, %v4155
  %v4166 = vmul.f32 %v4165, %v492
  %v4167 = vmul.f32 %v4164, %v496
  %v4168 = vmul.f32 %v4163, %v500
  %v4169 = vmul.f32 %v4162, %v504
  %v4170 = vadd.f32 %v3830, %v4166
  %v4171 = vadd.f32 %v3831, %v4167
  %v4172 = vadd.f32 %v3832, %v4168
  %v4173 = vadd.f32 %v3833, %v4169
  %v4174 = vmax.f32 %v4166, 0.0
  %v4175 = vmax.f32 %v4167, 0.0
  %v4176 = vmax.f32 %v4168, 0.0
  %v4177 = vmax.f32 %v4169, 0.0
  %s4178 = scalar_lea.vmem %s6, 8
  %v4179 = vld [vmem:[%s4178] sm:$0xf]
  %v4181 = vsel %vm130, %v4179, 0
  %v4184 = vsel %vm137, %v4174, 0
  %v4187 = vsel %vm137, %v4175, 0
  %v4190 = vsel %vm137, %v4176, 0
  %v4193 = vsel %vm137, %v4177, 0
  %4195 = vmatprep.subr.mxu0 %v4187
  %4196 = vmatpush1.msra.mxu0 %v4184
  %4197 = vmatprep.subr.mxu0 0.0
  %4198 = vmatpush1.msra.mxu0 0.0
  %4199 = vmatprep.subr.mxu0 0.0
  %4200 = vmatpush1.msra.mxu0 0.0
  %4201 = vmatprep.subr.mxu0 0.0
  %4202 = vmatpush1.msra.mxu0 0.0
  %4203 = vmatprep.subr.mxu0 0.0
  %4204 = vmatpush1.msra.mxu0 0.0
  %4205 = vmatprep.subr.mxu0 0.0
  %4206 = vmatpush1.msra.mxu0 0.0
  %4207 = vmatprep.subr.mxu0 0.0
  %4208 = vmatpush1.msra.mxu0 0.0
  %4209 = vmatprep.subr.mxu0 0.0
  %4210 = vmatpush1.msra.mxu0 0.0
  %4211 = vmatprep.subr.mxu0 0.0
  %4212 = vmatpush1.msra.mxu0 0.0
  %4213 = vmatprep.subr.mxu0 0.0
  %4214 = vmatpush1.msra.mxu0 0.0
  %4215 = vmatprep.subr.mxu0 0.0
  %4216 = vmatpush1.msra.mxu0 0.0
  %4217 = vmatprep.subr.mxu0 0.0
  %4218 = vmatpush1.msra.mxu0 0.0
  %4219 = vmatprep.subr.mxu0 0.0
  %4220 = vmatpush1.msra.mxu0 0.0
  %4221 = vmatprep.subr.mxu0 0.0
  %4222 = vmatpush1.msra.mxu0 0.0
  %4223 = vmatprep.subr.mxu0 0.0
  %4224 = vmatpush1.msra.mxu0 0.0
  %4225 = vmatprep.subr.mxu0 0.0
  %4226 = vmatpush1.msra.mxu0 0.0
  %4227 = vmatprep.subr.mxu0 0.0
  %4228 = vmatpush1.msra.mxu0 0.0
  %4229 = vmatprep.subr.mxu0 0.0
  %4230 = vmatpush1.msra.mxu0 0.0
  %4231 = vmatprep.subr.mxu0 0.0
  %4232 = vmatpush1.msra.mxu0 0.0
  %4233 = vmatprep.subr.mxu0 0.0
  %4234 = vmatpush1.msra.mxu0 0.0
  %4235 = vmatprep.subr.mxu0 0.0
  %4236 = vmatpush1.msra.mxu0 0.0
  %4237 = vmatprep.subr.mxu0 0.0
  %4238 = vmatpush1.msra.mxu0 0.0
  %4239 = vmatprep.subr.mxu0 0.0
  %4240 = vmatpush1.msra.mxu0 0.0
  %4241 = vmatprep.subr.mxu0 0.0
  %4242 = vmatpush1.msra.mxu0 0.0
  %4243 = vmatprep.subr.mxu0 0.0
  %4244 = vmatpush1.msra.mxu0 0.0
  %4245 = vmatprep.subr.mxu0 0.0
  %4246 = vmatpush1.msra.mxu0 0.0
  %4247 = vmatprep.subr.mxu0 0.0
  %4248 = vmatpush1.msra.mxu0 0.0
  %4249 = vmatprep.subr.mxu0 0.0
  %4250 = vmatpush1.msra.mxu0 0.0
  %4251 = vmatprep.subr.mxu0 0.0
  %4252 = vmatpush1.msra.mxu0 0.0
  %4253 = vmatprep.subr.mxu0 0.0
  %4254 = vmatpush1.msra.mxu0 0.0
  %4255 = vmatprep.subr.mxu0 0.0
  %4256 = vmatpush1.msra.mxu0 0.0
  %4257 = vmatprep.subr.mxu0 0.0
  %4258 = vmatpush1.msra.mxu0 0.0
  %4259 = vmatprep.mubr.f32.mxu0 0.0
  %4260 = vmatmul.mubr.f32.gmra.mrb[0].mxu0 %v4181
  %v4261 = vpop.f32.mrb[0].mxu0
  %v4262 = vadd.f32 0.0, %v4261
  %v4263 = vpop.f32.mrb[0].mxu0
  %v4264 = vadd.f32 0.0, %v4263
  %4265 = vdwg.mxu0
  %4266 = vmatprep.subr.mxu0 %v4193
  %4267 = vmatpush1.msra.mxu0 %v4190
  %4268 = vmatprep.subr.mxu0 0.0
  %4269 = vmatpush1.msra.mxu0 0.0
  %4270 = vmatprep.subr.mxu0 0.0
  %4271 = vmatpush1.msra.mxu0 0.0
  %4272 = vmatprep.subr.mxu0 0.0
  %4273 = vmatpush1.msra.mxu0 0.0
  %4274 = vmatprep.subr.mxu0 0.0
  %4275 = vmatpush1.msra.mxu0 0.0
  %4276 = vmatprep.subr.mxu0 0.0
  %4277 = vmatpush1.msra.mxu0 0.0
  %4278 = vmatprep.subr.mxu0 0.0
  %4279 = vmatpush1.msra.mxu0 0.0
  %4280 = vmatprep.subr.mxu0 0.0
  %4281 = vmatpush1.msra.mxu0 0.0
  %4282 = vmatprep.subr.mxu0 0.0
  %4283 = vmatpush1.msra.mxu0 0.0
  %4284 = vmatprep.subr.mxu0 0.0
  %4285 = vmatpush1.msra.mxu0 0.0
  %4286 = vmatprep.subr.mxu0 0.0
  %4287 = vmatpush1.msra.mxu0 0.0
  %4288 = vmatprep.subr.mxu0 0.0
  %4289 = vmatpush1.msra.mxu0 0.0
  %4290 = vmatprep.subr.mxu0 0.0
  %4291 = vmatpush1.msra.mxu0 0.0
  %4292 = vmatprep.subr.mxu0 0.0
  %4293 = vmatpush1.msra.mxu0 0.0
  %4294 = vmatprep.subr.mxu0 0.0
  %4295 = vmatpush1.msra.mxu0 0.0
  %4296 = vmatprep.subr.mxu0 0.0
  %4297 = vmatpush1.msra.mxu0 0.0
  %4298 = vmatprep.subr.mxu0 0.0
  %4299 = vmatpush1.msra.mxu0 0.0
  %4300 = vmatprep.subr.mxu0 0.0
  %4301 = vmatpush1.msra.mxu0 0.0
  %4302 = vmatprep.subr.mxu0 0.0
  %4303 = vmatpush1.msra.mxu0 0.0
  %4304 = vmatprep.subr.mxu0 0.0
  %4305 = vmatpush1.msra.mxu0 0.0
  %4306 = vmatprep.subr.mxu0 0.0
  %4307 = vmatpush1.msra.mxu0 0.0
  %4308 = vmatprep.subr.mxu0 0.0
  %4309 = vmatpush1.msra.mxu0 0.0
  %4310 = vmatprep.subr.mxu0 0.0
  %4311 = vmatpush1.msra.mxu0 0.0
  %4312 = vmatprep.subr.mxu0 0.0
  %4313 = vmatpush1.msra.mxu0 0.0
  %4314 = vmatprep.subr.mxu0 0.0
  %4315 = vmatpush1.msra.mxu0 0.0
  %4316 = vmatprep.subr.mxu0 0.0
  %4317 = vmatpush1.msra.mxu0 0.0
  %4318 = vmatprep.subr.mxu0 0.0
  %4319 = vmatpush1.msra.mxu0 0.0
  %4320 = vmatprep.subr.mxu0 0.0
  %4321 = vmatpush1.msra.mxu0 0.0
  %4322 = vmatprep.subr.mxu0 0.0
  %4323 = vmatpush1.msra.mxu0 0.0
  %4324 = vmatprep.subr.mxu0 0.0
  %4325 = vmatpush1.msra.mxu0 0.0
  %4326 = vmatprep.subr.mxu0 0.0
  %4327 = vmatpush1.msra.mxu0 0.0
  %4328 = vmatprep.subr.mxu0 0.0
  %4329 = vmatpush1.msra.mxu0 0.0
  %4330 = vmatprep.mubr.f32.mxu0 0.0
  %4331 = vmatmul.mubr.f32.gmra.mrb[0].mxu0 %v4181
  %v4332 = vpop.f32.mrb[0].mxu0
  %v4333 = vadd.f32 0.0, %v4332
  %v4334 = vpop.f32.mrb[0].mxu0
  %v4335 = vadd.f32 0.0, %v4334
  %4336 = vdwg.mxu0
  %v4337 = vadd.f32 %v4079, %v4262
  %v4338 = vadd.f32 %v4081, %v4264
  %v4339 = vadd.f32 %v4150, %v4333
  %v4340 = vadd.f32 %v4152, %v4335
  %4341 = vrot.lane.b32.xlu0 %v3783, 1
  %v4342 = vpop.permute.xlu0 %4341
  %4343 = vrot.lane.b32.xlu0 %v3789, 1
  %v4344 = vpop.permute.xlu0 %4343
  %4345 = vrot.lane.b32.xlu0 %v3784, 1
  %v4346 = vpop.permute.xlu0 %4345
  %4347 = vrot.lane.b32.xlu0 %v3790, 1
  %v4348 = vpop.permute.xlu0 %4347
  %v4349 = vsel %vm708, %v4346, %v4348
  %v4350 = vsel %vm708, %v4344, %v4346
  %v4351 = vsel %vm708, %v4342, %v4344
  %v4352 = vsel %vm708, %v4348, %v4342
  %v4353 = vmul.f32 %v4352, %v716
  %v4354 = vmul.f32 %v4351, %v720
  %v4355 = vmul.f32 %v4350, %v724
  %v4356 = vmul.f32 %v4349, %v728
  %v4357 = vadd.f32 %v4170, %v4353
  %v4358 = vadd.f32 %v4171, %v4354
  %v4359 = vadd.f32 %v4172, %v4355
  %v4360 = vadd.f32 %v4173, %v4356
  %v4361 = vmax.f32 %v4353, 0.0
  %v4362 = vmax.f32 %v4354, 0.0
  %v4363 = vmax.f32 %v4355, 0.0
  %v4364 = vmax.f32 %v4356, 0.0
  %s4365 = scalar_lea.vmem %s6, 12
  %v4366 = vld [vmem:[%s4365] sm:$0xf]
  %v4368 = vsel %vm130, %v4366, 0
  %v4371 = vsel %vm137, %v4361, 0
  %v4374 = vsel %vm137, %v4362, 0
  %v4377 = vsel %vm137, %v4363, 0
  %v4380 = vsel %vm137, %v4364, 0
  %4382 = vmatprep.subr.mxu0 %v4374
  %4383 = vmatpush1.msra.mxu0 %v4371
  %4384 = vmatprep.subr.mxu0 0.0
  %4385 = vmatpush1.msra.mxu0 0.0
  %4386 = vmatprep.subr.mxu0 0.0
  %4387 = vmatpush1.msra.mxu0 0.0
  %4388 = vmatprep.subr.mxu0 0.0
  %4389 = vmatpush1.msra.mxu0 0.0
  %4390 = vmatprep.subr.mxu0 0.0
  %4391 = vmatpush1.msra.mxu0 0.0
  %4392 = vmatprep.subr.mxu0 0.0
  %4393 = vmatpush1.msra.mxu0 0.0
  %4394 = vmatprep.subr.mxu0 0.0
  %4395 = vmatpush1.msra.mxu0 0.0
  %4396 = vmatprep.subr.mxu0 0.0
  %4397 = vmatpush1.msra.mxu0 0.0
  %4398 = vmatprep.subr.mxu0 0.0
  %4399 = vmatpush1.msra.mxu0 0.0
  %4400 = vmatprep.subr.mxu0 0.0
  %4401 = vmatpush1.msra.mxu0 0.0
  %4402 = vmatprep.subr.mxu0 0.0
  %4403 = vmatpush1.msra.mxu0 0.0
  %4404 = vmatprep.subr.mxu0 0.0
  %4405 = vmatpush1.msra.mxu0 0.0
  %4406 = vmatprep.subr.mxu0 0.0
  %4407 = vmatpush1.msra.mxu0 0.0
  %4408 = vmatprep.subr.mxu0 0.0
  %4409 = vmatpush1.msra.mxu0 0.0
  %4410 = vmatprep.subr.mxu0 0.0
  %4411 = vmatpush1.msra.mxu0 0.0
  %4412 = vmatprep.subr.mxu0 0.0
  %4413 = vmatpush1.msra.mxu0 0.0
  %4414 = vmatprep.subr.mxu0 0.0
  %4415 = vmatpush1.msra.mxu0 0.0
  %4416 = vmatprep.subr.mxu0 0.0
  %4417 = vmatpush1.msra.mxu0 0.0
  %4418 = vmatprep.subr.mxu0 0.0
  %4419 = vmatpush1.msra.mxu0 0.0
  %4420 = vmatprep.subr.mxu0 0.0
  %4421 = vmatpush1.msra.mxu0 0.0
  %4422 = vmatprep.subr.mxu0 0.0
  %4423 = vmatpush1.msra.mxu0 0.0
  %4424 = vmatprep.subr.mxu0 0.0
  %4425 = vmatpush1.msra.mxu0 0.0
  %4426 = vmatprep.subr.mxu0 0.0
  %4427 = vmatpush1.msra.mxu0 0.0
  %4428 = vmatprep.subr.mxu0 0.0
  %4429 = vmatpush1.msra.mxu0 0.0
  %4430 = vmatprep.subr.mxu0 0.0
  %4431 = vmatpush1.msra.mxu0 0.0
  %4432 = vmatprep.subr.mxu0 0.0
  %4433 = vmatpush1.msra.mxu0 0.0
  %4434 = vmatprep.subr.mxu0 0.0
  %4435 = vmatpush1.msra.mxu0 0.0
  %4436 = vmatprep.subr.mxu0 0.0
  %4437 = vmatpush1.msra.mxu0 0.0
  %4438 = vmatprep.subr.mxu0 0.0
  %4439 = vmatpush1.msra.mxu0 0.0
  %4440 = vmatprep.subr.mxu0 0.0
  %4441 = vmatpush1.msra.mxu0 0.0
  %4442 = vmatprep.subr.mxu0 0.0
  %4443 = vmatpush1.msra.mxu0 0.0
  %4444 = vmatprep.subr.mxu0 0.0
  %4445 = vmatpush1.msra.mxu0 0.0
  %4446 = vmatprep.mubr.f32.mxu0 0.0
  %4447 = vmatmul.mubr.f32.gmra.mrb[0].mxu0 %v4368
  %v4448 = vpop.f32.mrb[0].mxu0
  %v4449 = vadd.f32 0.0, %v4448
  %v4450 = vpop.f32.mrb[0].mxu0
  %v4451 = vadd.f32 0.0, %v4450
  %4452 = vdwg.mxu0
  %4453 = vmatprep.subr.mxu0 %v4380
  %4454 = vmatpush1.msra.mxu0 %v4377
  %4455 = vmatprep.subr.mxu0 0.0
  %4456 = vmatpush1.msra.mxu0 0.0
  %4457 = vmatprep.subr.mxu0 0.0
  %4458 = vmatpush1.msra.mxu0 0.0
  %4459 = vmatprep.subr.mxu0 0.0
  %4460 = vmatpush1.msra.mxu0 0.0
  %4461 = vmatprep.subr.mxu0 0.0
  %4462 = vmatpush1.msra.mxu0 0.0
  %4463 = vmatprep.subr.mxu0 0.0
  %4464 = vmatpush1.msra.mxu0 0.0
  %4465 = vmatprep.subr.mxu0 0.0
  %4466 = vmatpush1.msra.mxu0 0.0
  %4467 = vmatprep.subr.mxu0 0.0
  %4468 = vmatpush1.msra.mxu0 0.0
  %4469 = vmatprep.subr.mxu0 0.0
  %4470 = vmatpush1.msra.mxu0 0.0
  %4471 = vmatprep.subr.mxu0 0.0
  %4472 = vmatpush1.msra.mxu0 0.0
  %4473 = vmatprep.subr.mxu0 0.0
  %4474 = vmatpush1.msra.mxu0 0.0
  %4475 = vmatprep.subr.mxu0 0.0
  %4476 = vmatpush1.msra.mxu0 0.0
  %4477 = vmatprep.subr.mxu0 0.0
  %4478 = vmatpush1.msra.mxu0 0.0
  %4479 = vmatprep.subr.mxu0 0.0
  %4480 = vmatpush1.msra.mxu0 0.0
  %4481 = vmatprep.subr.mxu0 0.0
  %4482 = vmatpush1.msra.mxu0 0.0
  %4483 = vmatprep.subr.mxu0 0.0
  %4484 = vmatpush1.msra.mxu0 0.0
  %4485 = vmatprep.subr.mxu0 0.0
  %4486 = vmatpush1.msra.mxu0 0.0
  %4487 = vmatprep.subr.mxu0 0.0
  %4488 = vmatpush1.msra.mxu0 0.0
  %4489 = vmatprep.subr.mxu0 0.0
  %4490 = vmatpush1.msra.mxu0 0.0
  %4491 = vmatprep.subr.mxu0 0.0
  %4492 = vmatpush1.msra.mxu0 0.0
  %4493 = vmatprep.subr.mxu0 0.0
  %4494 = vmatpush1.msra.mxu0 0.0
  %4495 = vmatprep.subr.mxu0 0.0
  %4496 = vmatpush1.msra.mxu0 0.0
  %4497 = vmatprep.subr.mxu0 0.0
  %4498 = vmatpush1.msra.mxu0 0.0
  %4499 = vmatprep.subr.mxu0 0.0
  %4500 = vmatpush1.msra.mxu0 0.0
  %4501 = vmatprep.subr.mxu0 0.0
  %4502 = vmatpush1.msra.mxu0 0.0
  %4503 = vmatprep.subr.mxu0 0.0
  %4504 = vmatpush1.msra.mxu0 0.0
  %4505 = vmatprep.subr.mxu0 0.0
  %4506 = vmatpush1.msra.mxu0 0.0
  %4507 = vmatprep.subr.mxu0 0.0
  %4508 = vmatpush1.msra.mxu0 0.0
  %4509 = vmatprep.subr.mxu0 0.0
  %4510 = vmatpush1.msra.mxu0 0.0
  %4511 = vmatprep.subr.mxu0 0.0
  %4512 = vmatpush1.msra.mxu0 0.0
  %4513 = vmatprep.subr.mxu0 0.0
  %4514 = vmatpush1.msra.mxu0 0.0
  %4515 = vmatprep.subr.mxu0 0.0
  %4516 = vmatpush1.msra.mxu0 0.0
  %4517 = vmatprep.mubr.f32.mxu0 0.0
  %4518 = vmatmul.mubr.f32.gmra.mrb[0].mxu0 %v4368
  %v4519 = vpop.f32.mrb[0].mxu0
  %v4520 = vadd.f32 0.0, %v4519
  %v4521 = vpop.f32.mrb[0].mxu0
  %v4522 = vadd.f32 0.0, %v4521
  %4523 = vdwg.mxu0
  %v4524 = vadd.f32 %v4337, %v4449
  %v4525 = vadd.f32 %v4338, %v4451
  %v4526 = vadd.f32 %v4339, %v4520
  %v4527 = vadd.f32 %v4340, %v4522
  %v4528 = vadd.f32 %v4357, %v3783
  %v4529 = vadd.f32 %v4358, %v3789
  %v4530 = vadd.f32 %v4359, %v3784
  %v4531 = vadd.f32 %v4360, %v3790
  %v4532 = vmax.f32 %v3783, 0.0
  %v4533 = vmax.f32 %v3784, 0.0
  %s4534 = scalar_lea.vmem %s6, 16
  %v4535 = vld [vmem:[%s4534] sm:$0xf]
  %v4538 = vcombine.high %v4532, %v4532
  %v4539 = vcombine.high %v4533, %v4533
  %v4541 = vsel %vm130, %v4535, 0
  %v4543 = vsel %vm137, %v4532, 0
  %v4545 = vsel %vm137, %v4538, 0
  %v4547 = vsel %vm137, %v4533, 0
  %v4549 = vsel %vm137, %v4539, 0
  %4551 = vmatprep.subr.mxu0 %v4545
  %4552 = vmatpush1.msra.mxu0 %v4543
  %4553 = vmatprep.subr.mxu0 0.0
  %4554 = vmatpush1.msra.mxu0 0.0
  %4555 = vmatprep.subr.mxu0 0.0
  %4556 = vmatpush1.msra.mxu0 0.0
  %4557 = vmatprep.subr.mxu0 0.0
  %4558 = vmatpush1.msra.mxu0 0.0
  %4559 = vmatprep.subr.mxu0 0.0
  %4560 = vmatpush1.msra.mxu0 0.0
  %4561 = vmatprep.subr.mxu0 0.0
  %4562 = vmatpush1.msra.mxu0 0.0
  %4563 = vmatprep.subr.mxu0 0.0
  %4564 = vmatpush1.msra.mxu0 0.0
  %4565 = vmatprep.subr.mxu0 0.0
  %4566 = vmatpush1.msra.mxu0 0.0
  %4567 = vmatprep.subr.mxu0 0.0
  %4568 = vmatpush1.msra.mxu0 0.0
  %4569 = vmatprep.subr.mxu0 0.0
  %4570 = vmatpush1.msra.mxu0 0.0
  %4571 = vmatprep.subr.mxu0 0.0
  %4572 = vmatpush1.msra.mxu0 0.0
  %4573 = vmatprep.subr.mxu0 0.0
  %4574 = vmatpush1.msra.mxu0 0.0
  %4575 = vmatprep.subr.mxu0 0.0
  %4576 = vmatpush1.msra.mxu0 0.0
  %4577 = vmatprep.subr.mxu0 0.0
  %4578 = vmatpush1.msra.mxu0 0.0
  %4579 = vmatprep.subr.mxu0 0.0
  %4580 = vmatpush1.msra.mxu0 0.0
  %4581 = vmatprep.subr.mxu0 0.0
  %4582 = vmatpush1.msra.mxu0 0.0
  %4583 = vmatprep.subr.mxu0 0.0
  %4584 = vmatpush1.msra.mxu0 0.0
  %4585 = vmatprep.subr.mxu0 0.0
  %4586 = vmatpush1.msra.mxu0 0.0
  %4587 = vmatprep.subr.mxu0 0.0
  %4588 = vmatpush1.msra.mxu0 0.0
  %4589 = vmatprep.subr.mxu0 0.0
  %4590 = vmatpush1.msra.mxu0 0.0
  %4591 = vmatprep.subr.mxu0 0.0
  %4592 = vmatpush1.msra.mxu0 0.0
  %4593 = vmatprep.subr.mxu0 0.0
  %4594 = vmatpush1.msra.mxu0 0.0
  %4595 = vmatprep.subr.mxu0 0.0
  %4596 = vmatpush1.msra.mxu0 0.0
  %4597 = vmatprep.subr.mxu0 0.0
  %4598 = vmatpush1.msra.mxu0 0.0
  %4599 = vmatprep.subr.mxu0 0.0
  %4600 = vmatpush1.msra.mxu0 0.0
  %4601 = vmatprep.subr.mxu0 0.0
  %4602 = vmatpush1.msra.mxu0 0.0
  %4603 = vmatprep.subr.mxu0 0.0
  %4604 = vmatpush1.msra.mxu0 0.0
  %4605 = vmatprep.subr.mxu0 0.0
  %4606 = vmatpush1.msra.mxu0 0.0
  %4607 = vmatprep.subr.mxu0 0.0
  %4608 = vmatpush1.msra.mxu0 0.0
  %4609 = vmatprep.subr.mxu0 0.0
  %4610 = vmatpush1.msra.mxu0 0.0
  %4611 = vmatprep.subr.mxu0 0.0
  %4612 = vmatpush1.msra.mxu0 0.0
  %4613 = vmatprep.subr.mxu0 0.0
  %4614 = vmatpush1.msra.mxu0 0.0
  %4615 = vmatprep.mubr.f32.mxu0 0.0
  %4616 = vmatmul.mubr.f32.gmra.mrb[0].mxu0 %v4541
  %v4617 = vpop.f32.mrb[0].mxu0
  %v4618 = vadd.f32 0.0, %v4617
  %v4619 = vpop.f32.mrb[0].mxu0
  %v4620 = vadd.f32 0.0, %v4619
  %4621 = vdwg.mxu0
  %4622 = vmatprep.subr.mxu0 %v4549
  %4623 = vmatpush1.msra.mxu0 %v4547
  %4624 = vmatprep.subr.mxu0 0.0
  %4625 = vmatpush1.msra.mxu0 0.0
  %4626 = vmatprep.subr.mxu0 0.0
  %4627 = vmatpush1.msra.mxu0 0.0
  %4628 = vmatprep.subr.mxu0 0.0
  %4629 = vmatpush1.msra.mxu0 0.0
  %4630 = vmatprep.subr.mxu0 0.0
  %4631 = vmatpush1.msra.mxu0 0.0
  %4632 = vmatprep.subr.mxu0 0.0
  %4633 = vmatpush1.msra.mxu0 0.0
  %4634 = vmatprep.subr.mxu0 0.0
  %4635 = vmatpush1.msra.mxu0 0.0
  %4636 = vmatprep.subr.mxu0 0.0
  %4637 = vmatpush1.msra.mxu0 0.0
  %4638 = vmatprep.subr.mxu0 0.0
  %4639 = vmatpush1.msra.mxu0 0.0
  %4640 = vmatprep.subr.mxu0 0.0
  %4641 = vmatpush1.msra.mxu0 0.0
  %4642 = vmatprep.subr.mxu0 0.0
  %4643 = vmatpush1.msra.mxu0 0.0
  %4644 = vmatprep.subr.mxu0 0.0
  %4645 = vmatpush1.msra.mxu0 0.0
  %4646 = vmatprep.subr.mxu0 0.0
  %4647 = vmatpush1.msra.mxu0 0.0
  %4648 = vmatprep.subr.mxu0 0.0
  %4649 = vmatpush1.msra.mxu0 0.0
  %4650 = vmatprep.subr.mxu0 0.0
  %4651 = vmatpush1.msra.mxu0 0.0
  %4652 = vmatprep.subr.mxu0 0.0
  %4653 = vmatpush1.msra.mxu0 0.0
  %4654 = vmatprep.subr.mxu0 0.0
  %4655 = vmatpush1.msra.mxu0 0.0
  %4656 = vmatprep.subr.mxu0 0.0
  %4657 = vmatpush1.msra.mxu0 0.0
  %4658 = vmatprep.subr.mxu0 0.0
  %4659 = vmatpush1.msra.mxu0 0.0
  %4660 = vmatprep.subr.mxu0 0.0
  %4661 = vmatpush1.msra.mxu0 0.0
  %4662 = vmatprep.subr.mxu0 0.0
  %4663 = vmatpush1.msra.mxu0 0.0
  %4664 = vmatprep.subr.mxu0 0.0
  %4665 = vmatpush1.msra.mxu0 0.0
  %4666 = vmatprep.subr.mxu0 0.0
  %4667 = vmatpush1.msra.mxu0 0.0
  %4668 = vmatprep.subr.mxu0 0.0
  %4669 = vmatpush1.msra.mxu0 0.0
  %4670 = vmatprep.subr.mxu0 0.0
  %4671 = vmatpush1.msra.mxu0 0.0
  %4672 = vmatprep.subr.mxu0 0.0
  %4673 = vmatpush1.msra.mxu0 0.0
  %4674 = vmatprep.subr.mxu0 0.0
  %4675 = vmatpush1.msra.mxu0 0.0
  %4676 = vmatprep.subr.mxu0 0.0
  %4677 = vmatpush1.msra.mxu0 0.0
  %4678 = vmatprep.subr.mxu0 0.0
  %4679 = vmatpush1.msra.mxu0 0.0
  %4680 = vmatprep.subr.mxu0 0.0
  %4681 = vmatpush1.msra.mxu0 0.0
  %4682 = vmatprep.subr.mxu0 0.0
  %4683 = vmatpush1.msra.mxu0 0.0
  %4684 = vmatprep.subr.mxu0 0.0
  %4685 = vmatpush1.msra.mxu0 0.0
  %4686 = vmatprep.mubr.f32.mxu0 0.0
  %4687 = vmatmul.mubr.f32.gmra.mrb[0].mxu0 %v4541
  %v4688 = vpop.f32.mrb[0].mxu0
  %v4689 = vadd.f32 0.0, %v4688
  %v4690 = vpop.f32.mrb[0].mxu0
  %v4691 = vadd.f32 0.0, %v4690
  %4692 = vdwg.mxu0
  %v4693 = vadd.f32 %v4524, %v4618
  %v4694 = vadd.f32 %v4525, %v4620
  %v4695 = vadd.f32 %v4526, %v4689
  %v4696 = vadd.f32 %v4527, %v4691
  %4697 = vrot.lane.b32.xlu0 %v3783, 127
  %v4698 = vpop.permute.xlu0 %4697
  %4699 = vrot.lane.b32.xlu0 %v3789, 127
  %v4700 = vpop.permute.xlu0 %4699
  %4701 = vrot.lane.b32.xlu0 %v3784, 127
  %v4702 = vpop.permute.xlu0 %4701
  %4703 = vrot.lane.b32.xlu0 %v3790, 127
  %v4704 = vpop.permute.xlu0 %4703
  %v4705 = vsel %vm1121, %v4702, %v4704
  %v4706 = vsel %vm1121, %v4700, %v4702
  %v4707 = vsel %vm1121, %v4698, %v4700
  %v4708 = vsel %vm1121, %v4704, %v4698
  %v4709 = vmul.f32 %v4707, %v1129
  %v4710 = vmul.f32 %v4706, %v1133
  %v4711 = vmul.f32 %v4705, %v1137
  %v4712 = vmul.f32 %v4708, %v1141
  %v4713 = vadd.f32 %v4528, %v4709
  %v4714 = vadd.f32 %v4529, %v4710
  %v4715 = vadd.f32 %v4530, %v4711
  %v4716 = vadd.f32 %v4531, %v4712
  %v4717 = vmax.f32 %v4709, 0.0
  %v4718 = vmax.f32 %v4710, 0.0
  %v4719 = vmax.f32 %v4711, 0.0
  %v4720 = vmax.f32 %v4712, 0.0
  %s4721 = scalar_lea.vmem %s6, 20
  %v4722 = vld [vmem:[%s4721] sm:$0xf]
  %v4724 = vsel %vm130, %v4722, 0
  %v4727 = vsel %vm137, %v4717, 0
  %v4730 = vsel %vm137, %v4718, 0
  %v4733 = vsel %vm137, %v4719, 0
  %v4736 = vsel %vm137, %v4720, 0
  %4738 = vmatprep.subr.mxu0 %v4730
  %4739 = vmatpush1.msra.mxu0 %v4727
  %4740 = vmatprep.subr.mxu0 0.0
  %4741 = vmatpush1.msra.mxu0 0.0
  %4742 = vmatprep.subr.mxu0 0.0
  %4743 = vmatpush1.msra.mxu0 0.0
  %4744 = vmatprep.subr.mxu0 0.0
  %4745 = vmatpush1.msra.mxu0 0.0
  %4746 = vmatprep.subr.mxu0 0.0
  %4747 = vmatpush1.msra.mxu0 0.0
  %4748 = vmatprep.subr.mxu0 0.0
  %4749 = vmatpush1.msra.mxu0 0.0
  %4750 = vmatprep.subr.mxu0 0.0
  %4751 = vmatpush1.msra.mxu0 0.0
  %4752 = vmatprep.subr.mxu0 0.0
  %4753 = vmatpush1.msra.mxu0 0.0
  %4754 = vmatprep.subr.mxu0 0.0
  %4755 = vmatpush1.msra.mxu0 0.0
  %4756 = vmatprep.subr.mxu0 0.0
  %4757 = vmatpush1.msra.mxu0 0.0
  %4758 = vmatprep.subr.mxu0 0.0
  %4759 = vmatpush1.msra.mxu0 0.0
  %4760 = vmatprep.subr.mxu0 0.0
  %4761 = vmatpush1.msra.mxu0 0.0
  %4762 = vmatprep.subr.mxu0 0.0
  %4763 = vmatpush1.msra.mxu0 0.0
  %4764 = vmatprep.subr.mxu0 0.0
  %4765 = vmatpush1.msra.mxu0 0.0
  %4766 = vmatprep.subr.mxu0 0.0
  %4767 = vmatpush1.msra.mxu0 0.0
  %4768 = vmatprep.subr.mxu0 0.0
  %4769 = vmatpush1.msra.mxu0 0.0
  %4770 = vmatprep.subr.mxu0 0.0
  %4771 = vmatpush1.msra.mxu0 0.0
  %4772 = vmatprep.subr.mxu0 0.0
  %4773 = vmatpush1.msra.mxu0 0.0
  %4774 = vmatprep.subr.mxu0 0.0
  %4775 = vmatpush1.msra.mxu0 0.0
  %4776 = vmatprep.subr.mxu0 0.0
  %4777 = vmatpush1.msra.mxu0 0.0
  %4778 = vmatprep.subr.mxu0 0.0
  %4779 = vmatpush1.msra.mxu0 0.0
  %4780 = vmatprep.subr.mxu0 0.0
  %4781 = vmatpush1.msra.mxu0 0.0
  %4782 = vmatprep.subr.mxu0 0.0
  %4783 = vmatpush1.msra.mxu0 0.0
  %4784 = vmatprep.subr.mxu0 0.0
  %4785 = vmatpush1.msra.mxu0 0.0
  %4786 = vmatprep.subr.mxu0 0.0
  %4787 = vmatpush1.msra.mxu0 0.0
  %4788 = vmatprep.subr.mxu0 0.0
  %4789 = vmatpush1.msra.mxu0 0.0
  %4790 = vmatprep.subr.mxu0 0.0
  %4791 = vmatpush1.msra.mxu0 0.0
  %4792 = vmatprep.subr.mxu0 0.0
  %4793 = vmatpush1.msra.mxu0 0.0
  %4794 = vmatprep.subr.mxu0 0.0
  %4795 = vmatpush1.msra.mxu0 0.0
  %4796 = vmatprep.subr.mxu0 0.0
  %4797 = vmatpush1.msra.mxu0 0.0
  %4798 = vmatprep.subr.mxu0 0.0
  %4799 = vmatpush1.msra.mxu0 0.0
  %4800 = vmatprep.subr.mxu0 0.0
  %4801 = vmatpush1.msra.mxu0 0.0
  %4802 = vmatprep.mubr.f32.mxu0 0.0
  %4803 = vmatmul.mubr.f32.gmra.mrb[0].mxu0 %v4724
  %v4804 = vpop.f32.mrb[0].mxu0
  %v4805 = vadd.f32 0.0, %v4804
  %v4806 = vpop.f32.mrb[0].mxu0
  %v4807 = vadd.f32 0.0, %v4806
  %4808 = vdwg.mxu0
  %4809 = vmatprep.subr.mxu0 %v4736
  %4810 = vmatpush1.msra.mxu0 %v4733
  %4811 = vmatprep.subr.mxu0 0.0
  %4812 = vmatpush1.msra.mxu0 0.0
  %4813 = vmatprep.subr.mxu0 0.0
  %4814 = vmatpush1.msra.mxu0 0.0
  %4815 = vmatprep.subr.mxu0 0.0
  %4816 = vmatpush1.msra.mxu0 0.0
  %4817 = vmatprep.subr.mxu0 0.0
  %4818 = vmatpush1.msra.mxu0 0.0
  %4819 = vmatprep.subr.mxu0 0.0
  %4820 = vmatpush1.msra.mxu0 0.0
  %4821 = vmatprep.subr.mxu0 0.0
  %4822 = vmatpush1.msra.mxu0 0.0
  %4823 = vmatprep.subr.mxu0 0.0
  %4824 = vmatpush1.msra.mxu0 0.0
  %4825 = vmatprep.subr.mxu0 0.0
  %4826 = vmatpush1.msra.mxu0 0.0
  %4827 = vmatprep.subr.mxu0 0.0
  %4828 = vmatpush1.msra.mxu0 0.0
  %4829 = vmatprep.subr.mxu0 0.0
  %4830 = vmatpush1.msra.mxu0 0.0
  %4831 = vmatprep.subr.mxu0 0.0
  %4832 = vmatpush1.msra.mxu0 0.0
  %4833 = vmatprep.subr.mxu0 0.0
  %4834 = vmatpush1.msra.mxu0 0.0
  %4835 = vmatprep.subr.mxu0 0.0
  %4836 = vmatpush1.msra.mxu0 0.0
  %4837 = vmatprep.subr.mxu0 0.0
  %4838 = vmatpush1.msra.mxu0 0.0
  %4839 = vmatprep.subr.mxu0 0.0
  %4840 = vmatpush1.msra.mxu0 0.0
  %4841 = vmatprep.subr.mxu0 0.0
  %4842 = vmatpush1.msra.mxu0 0.0
  %4843 = vmatprep.subr.mxu0 0.0
  %4844 = vmatpush1.msra.mxu0 0.0
  %4845 = vmatprep.subr.mxu0 0.0
  %4846 = vmatpush1.msra.mxu0 0.0
  %4847 = vmatprep.subr.mxu0 0.0
  %4848 = vmatpush1.msra.mxu0 0.0
  %4849 = vmatprep.subr.mxu0 0.0
  %4850 = vmatpush1.msra.mxu0 0.0
  %4851 = vmatprep.subr.mxu0 0.0
  %4852 = vmatpush1.msra.mxu0 0.0
  %4853 = vmatprep.subr.mxu0 0.0
  %4854 = vmatpush1.msra.mxu0 0.0
  %4855 = vmatprep.subr.mxu0 0.0
  %4856 = vmatpush1.msra.mxu0 0.0
  %4857 = vmatprep.subr.mxu0 0.0
  %4858 = vmatpush1.msra.mxu0 0.0
  %4859 = vmatprep.subr.mxu0 0.0
  %4860 = vmatpush1.msra.mxu0 0.0
  %4861 = vmatprep.subr.mxu0 0.0
  %4862 = vmatpush1.msra.mxu0 0.0
  %4863 = vmatprep.subr.mxu0 0.0
  %4864 = vmatpush1.msra.mxu0 0.0
  %4865 = vmatprep.subr.mxu0 0.0
  %4866 = vmatpush1.msra.mxu0 0.0
  %4867 = vmatprep.subr.mxu0 0.0
  %4868 = vmatpush1.msra.mxu0 0.0
  %4869 = vmatprep.subr.mxu0 0.0
  %4870 = vmatpush1.msra.mxu0 0.0
  %4871 = vmatprep.subr.mxu0 0.0
  %4872 = vmatpush1.msra.mxu0 0.0
  %4873 = vmatprep.mubr.f32.mxu0 0.0
  %4874 = vmatmul.mubr.f32.gmra.mrb[0].mxu0 %v4724
  %v4875 = vpop.f32.mrb[0].mxu0
  %v4876 = vadd.f32 0.0, %v4875
  %v4877 = vpop.f32.mrb[0].mxu0
  %v4878 = vadd.f32 0.0, %v4877
  %4879 = vdwg.mxu0
  %v4880 = vadd.f32 %v4693, %v4805
  %v4881 = vadd.f32 %v4694, %v4807
  %v4882 = vadd.f32 %v4695, %v4876
  %v4883 = vadd.f32 %v4696, %v4878
  %4884 = vrot.lane.b32.xlu0 %v3783, 113
  %v4885 = vpop.permute.xlu0 %4884
  %4886 = vrot.lane.b32.xlu0 %v3789, 113
  %v4887 = vpop.permute.xlu0 %4886
  %4888 = vrot.lane.b32.xlu0 %v3784, 113
  %v4889 = vpop.permute.xlu0 %4888
  %4890 = vrot.lane.b32.xlu0 %v3790, 113
  %v4891 = vpop.permute.xlu0 %4890
  %v4892 = vsel %vm1345, %v4889, %v4891
  %v4893 = vsel %vm1345, %v4887, %v4889
  %v4894 = vsel %vm1345, %v4885, %v4887
  %v4895 = vsel %vm1345, %v4891, %v4885
  %v4896 = vmul.f32 %v4894, %v1353
  %v4897 = vmul.f32 %v4893, %v1357
  %v4898 = vmul.f32 %v4892, %v1361
  %v4899 = vmul.f32 %v4895, %v1365
  %v4900 = vadd.f32 %v4713, %v4896
  %v4901 = vadd.f32 %v4714, %v4897
  %v4902 = vadd.f32 %v4715, %v4898
  %v4903 = vadd.f32 %v4716, %v4899
  %v4904 = vmax.f32 %v4896, 0.0
  %v4905 = vmax.f32 %v4897, 0.0
  %v4906 = vmax.f32 %v4898, 0.0
  %v4907 = vmax.f32 %v4899, 0.0
  %s4908 = scalar_lea.vmem %s6, 24
  %v4909 = vld [vmem:[%s4908] sm:$0xf]
  %v4911 = vsel %vm130, %v4909, 0
  %v4914 = vsel %vm137, %v4904, 0
  %v4917 = vsel %vm137, %v4905, 0
  %v4920 = vsel %vm137, %v4906, 0
  %v4923 = vsel %vm137, %v4907, 0
  %4925 = vmatprep.subr.mxu0 %v4917
  %4926 = vmatpush1.msra.mxu0 %v4914
  %4927 = vmatprep.subr.mxu0 0.0
  %4928 = vmatpush1.msra.mxu0 0.0
  %4929 = vmatprep.subr.mxu0 0.0
  %4930 = vmatpush1.msra.mxu0 0.0
  %4931 = vmatprep.subr.mxu0 0.0
  %4932 = vmatpush1.msra.mxu0 0.0
  %4933 = vmatprep.subr.mxu0 0.0
  %4934 = vmatpush1.msra.mxu0 0.0
  %4935 = vmatprep.subr.mxu0 0.0
  %4936 = vmatpush1.msra.mxu0 0.0
  %4937 = vmatprep.subr.mxu0 0.0
  %4938 = vmatpush1.msra.mxu0 0.0
  %4939 = vmatprep.subr.mxu0 0.0
  %4940 = vmatpush1.msra.mxu0 0.0
  %4941 = vmatprep.subr.mxu0 0.0
  %4942 = vmatpush1.msra.mxu0 0.0
  %4943 = vmatprep.subr.mxu0 0.0
  %4944 = vmatpush1.msra.mxu0 0.0
  %4945 = vmatprep.subr.mxu0 0.0
  %4946 = vmatpush1.msra.mxu0 0.0
  %4947 = vmatprep.subr.mxu0 0.0
  %4948 = vmatpush1.msra.mxu0 0.0
  %4949 = vmatprep.subr.mxu0 0.0
  %4950 = vmatpush1.msra.mxu0 0.0
  %4951 = vmatprep.subr.mxu0 0.0
  %4952 = vmatpush1.msra.mxu0 0.0
  %4953 = vmatprep.subr.mxu0 0.0
  %4954 = vmatpush1.msra.mxu0 0.0
  %4955 = vmatprep.subr.mxu0 0.0
  %4956 = vmatpush1.msra.mxu0 0.0
  %4957 = vmatprep.subr.mxu0 0.0
  %4958 = vmatpush1.msra.mxu0 0.0
  %4959 = vmatprep.subr.mxu0 0.0
  %4960 = vmatpush1.msra.mxu0 0.0
  %4961 = vmatprep.subr.mxu0 0.0
  %4962 = vmatpush1.msra.mxu0 0.0
  %4963 = vmatprep.subr.mxu0 0.0
  %4964 = vmatpush1.msra.mxu0 0.0
  %4965 = vmatprep.subr.mxu0 0.0
  %4966 = vmatpush1.msra.mxu0 0.0
  %4967 = vmatprep.subr.mxu0 0.0
  %4968 = vmatpush1.msra.mxu0 0.0
  %4969 = vmatprep.subr.mxu0 0.0
  %4970 = vmatpush1.msra.mxu0 0.0
  %4971 = vmatprep.subr.mxu0 0.0
  %4972 = vmatpush1.msra.mxu0 0.0
  %4973 = vmatprep.subr.mxu0 0.0
  %4974 = vmatpush1.msra.mxu0 0.0
  %4975 = vmatprep.subr.mxu0 0.0
  %4976 = vmatpush1.msra.mxu0 0.0
  %4977 = vmatprep.subr.mxu0 0.0
  %4978 = vmatpush1.msra.mxu0 0.0
  %4979 = vmatprep.subr.mxu0 0.0
  %4980 = vmatpush1.msra.mxu0 0.0
  %4981 = vmatprep.subr.mxu0 0.0
  %4982 = vmatpush1.msra.mxu0 0.0
  %4983 = vmatprep.subr.mxu0 0.0
  %4984 = vmatpush1.msra.mxu0 0.0
  %4985 = vmatprep.subr.mxu0 0.0
  %4986 = vmatpush1.msra.mxu0 0.0
  %4987 = vmatprep.subr.mxu0 0.0
  %4988 = vmatpush1.msra.mxu0 0.0
  %4989 = vmatprep.mubr.f32.mxu0 0.0
  %4990 = vmatmul.mubr.f32.gmra.mrb[0].mxu0 %v4911
  %v4991 = vpop.f32.mrb[0].mxu0
  %v4992 = vadd.f32 0.0, %v4991
  %v4993 = vpop.f32.mrb[0].mxu0
  %v4994 = vadd.f32 0.0, %v4993
  %4995 = vdwg.mxu0
  %4996 = vmatprep.subr.mxu0 %v4923
  %4997 = vmatpush1.msra.mxu0 %v4920
  %4998 = vmatprep.subr.mxu0 0.0
  %4999 = vmatpush1.msra.mxu0 0.0
  %5000 = vmatprep.subr.mxu0 0.0
  %5001 = vmatpush1.msra.mxu0 0.0
  %5002 = vmatprep.subr.mxu0 0.0
  %5003 = vmatpush1.msra.mxu0 0.0
  %5004 = vmatprep.subr.mxu0 0.0
  %5005 = vmatpush1.msra.mxu0 0.0
  %5006 = vmatprep.subr.mxu0 0.0
  %5007 = vmatpush1.msra.mxu0 0.0
  %5008 = vmatprep.subr.mxu0 0.0
  %5009 = vmatpush1.msra.mxu0 0.0
  %5010 = vmatprep.subr.mxu0 0.0
  %5011 = vmatpush1.msra.mxu0 0.0
  %5012 = vmatprep.subr.mxu0 0.0
  %5013 = vmatpush1.msra.mxu0 0.0
  %5014 = vmatprep.subr.mxu0 0.0
  %5015 = vmatpush1.msra.mxu0 0.0
  %5016 = vmatprep.subr.mxu0 0.0
  %5017 = vmatpush1.msra.mxu0 0.0
  %5018 = vmatprep.subr.mxu0 0.0
  %5019 = vmatpush1.msra.mxu0 0.0
  %5020 = vmatprep.subr.mxu0 0.0
  %5021 = vmatpush1.msra.mxu0 0.0
  %5022 = vmatprep.subr.mxu0 0.0
  %5023 = vmatpush1.msra.mxu0 0.0
  %5024 = vmatprep.subr.mxu0 0.0
  %5025 = vmatpush1.msra.mxu0 0.0
  %5026 = vmatprep.subr.mxu0 0.0
  %5027 = vmatpush1.msra.mxu0 0.0
  %5028 = vmatprep.subr.mxu0 0.0
  %5029 = vmatpush1.msra.mxu0 0.0
  %5030 = vmatprep.subr.mxu0 0.0
  %5031 = vmatpush1.msra.mxu0 0.0
  %5032 = vmatprep.subr.mxu0 0.0
  %5033 = vmatpush1.msra.mxu0 0.0
  %5034 = vmatprep.subr.mxu0 0.0
  %5035 = vmatpush1.msra.mxu0 0.0
  %5036 = vmatprep.subr.mxu0 0.0
  %5037 = vmatpush1.msra.mxu0 0.0
  %5038 = vmatprep.subr.mxu0 0.0
  %5039 = vmatpush1.msra.mxu0 0.0
  %5040 = vmatprep.subr.mxu0 0.0
  %5041 = vmatpush1.msra.mxu0 0.0
  %5042 = vmatprep.subr.mxu0 0.0
  %5043 = vmatpush1.msra.mxu0 0.0
  %5044 = vmatprep.subr.mxu0 0.0
  %5045 = vmatpush1.msra.mxu0 0.0
  %5046 = vmatprep.subr.mxu0 0.0
  %5047 = vmatpush1.msra.mxu0 0.0
  %5048 = vmatprep.subr.mxu0 0.0
  %5049 = vmatpush1.msra.mxu0 0.0
  %5050 = vmatprep.subr.mxu0 0.0
  %5051 = vmatpush1.msra.mxu0 0.0
  %5052 = vmatprep.subr.mxu0 0.0
  %5053 = vmatpush1.msra.mxu0 0.0
  %5054 = vmatprep.subr.mxu0 0.0
  %5055 = vmatpush1.msra.mxu0 0.0
  %5056 = vmatprep.subr.mxu0 0.0
  %5057 = vmatpush1.msra.mxu0 0.0
  %5058 = vmatprep.subr.mxu0 0.0
  %5059 = vmatpush1.msra.mxu0 0.0
  %5060 = vmatprep.mubr.f32.mxu0 0.0
  %5061 = vmatmul.mubr.f32.gmra.mrb[0].mxu0 %v4911
  %v5062 = vpop.f32.mrb[0].mxu0
  %v5063 = vadd.f32 0.0, %v5062
  %v5064 = vpop.f32.mrb[0].mxu0
  %v5065 = vadd.f32 0.0, %v5064
  %5066 = vdwg.mxu0
  %v5067 = vadd.f32 %v4880, %v4992
  %v5068 = vadd.f32 %v4881, %v4994
  %v5069 = vadd.f32 %v4882, %v5063
  %v5070 = vadd.f32 %v4883, %v5065
  %5071 = vrot.lane.b32.xlu0 %v3783, 112
  %v5072 = vpop.permute.xlu0 %5071
  %5073 = vrot.lane.b32.xlu0 %v3789, 112
  %v5074 = vpop.permute.xlu0 %5073
  %5075 = vrot.lane.b32.xlu0 %v3784, 112
  %v5076 = vpop.permute.xlu0 %5075
  %5077 = vrot.lane.b32.xlu0 %v3790, 112
  %v5078 = vpop.permute.xlu0 %5077
  %v5079 = vsel %vm1569, %v5076, %v5078
  %v5080 = vsel %vm1569, %v5074, %v5076
  %v5081 = vsel %vm1569, %v5072, %v5074
  %v5082 = vsel %vm1569, %v5078, %v5072
  %v5083 = vmul.f32 %v5081, %v1577
  %v5084 = vmul.f32 %v5080, %v1581
  %v5085 = vmul.f32 %v5079, %v1585
  %v5086 = vmul.f32 %v5082, %v1589
  %v5087 = vadd.f32 %v4900, %v5083
  %v5088 = vadd.f32 %v4901, %v5084
  %v5089 = vadd.f32 %v4902, %v5085
  %v5090 = vadd.f32 %v4903, %v5086
  %v5091 = vmax.f32 %v5083, 0.0
  %v5092 = vmax.f32 %v5084, 0.0
  %v5093 = vmax.f32 %v5085, 0.0
  %v5094 = vmax.f32 %v5086, 0.0
  %s5095 = scalar_lea.vmem %s6, 28
  %v5096 = vld [vmem:[%s5095] sm:$0xf]
  %v5098 = vsel %vm130, %v5096, 0
  %v5101 = vsel %vm137, %v5091, 0
  %v5104 = vsel %vm137, %v5092, 0
  %v5107 = vsel %vm137, %v5093, 0
  %v5110 = vsel %vm137, %v5094, 0
  %5112 = vmatprep.subr.mxu0 %v5104
  %5113 = vmatpush1.msra.mxu0 %v5101
  %5114 = vmatprep.subr.mxu0 0.0
  %5115 = vmatpush1.msra.mxu0 0.0
  %5116 = vmatprep.subr.mxu0 0.0
  %5117 = vmatpush1.msra.mxu0 0.0
  %5118 = vmatprep.subr.mxu0 0.0
  %5119 = vmatpush1.msra.mxu0 0.0
  %5120 = vmatprep.subr.mxu0 0.0
  %5121 = vmatpush1.msra.mxu0 0.0
  %5122 = vmatprep.subr.mxu0 0.0
  %5123 = vmatpush1.msra.mxu0 0.0
  %5124 = vmatprep.subr.mxu0 0.0
  %5125 = vmatpush1.msra.mxu0 0.0
  %5126 = vmatprep.subr.mxu0 0.0
  %5127 = vmatpush1.msra.mxu0 0.0
  %5128 = vmatprep.subr.mxu0 0.0
  %5129 = vmatpush1.msra.mxu0 0.0
  %5130 = vmatprep.subr.mxu0 0.0
  %5131 = vmatpush1.msra.mxu0 0.0
  %5132 = vmatprep.subr.mxu0 0.0
  %5133 = vmatpush1.msra.mxu0 0.0
  %5134 = vmatprep.subr.mxu0 0.0
  %5135 = vmatpush1.msra.mxu0 0.0
  %5136 = vmatprep.subr.mxu0 0.0
  %5137 = vmatpush1.msra.mxu0 0.0
  %5138 = vmatprep.subr.mxu0 0.0
  %5139 = vmatpush1.msra.mxu0 0.0
  %5140 = vmatprep.subr.mxu0 0.0
  %5141 = vmatpush1.msra.mxu0 0.0
  %5142 = vmatprep.subr.mxu0 0.0
  %5143 = vmatpush1.msra.mxu0 0.0
  %5144 = vmatprep.subr.mxu0 0.0
  %5145 = vmatpush1.msra.mxu0 0.0
  %5146 = vmatprep.subr.mxu0 0.0
  %5147 = vmatpush1.msra.mxu0 0.0
  %5148 = vmatprep.subr.mxu0 0.0
  %5149 = vmatpush1.msra.mxu0 0.0
  %5150 = vmatprep.subr.mxu0 0.0
  %5151 = vmatpush1.msra.mxu0 0.0
  %5152 = vmatprep.subr.mxu0 0.0
  %5153 = vmatpush1.msra.mxu0 0.0
  %5154 = vmatprep.subr.mxu0 0.0
  %5155 = vmatpush1.msra.mxu0 0.0
  %5156 = vmatprep.subr.mxu0 0.0
  %5157 = vmatpush1.msra.mxu0 0.0
  %5158 = vmatprep.subr.mxu0 0.0
  %5159 = vmatpush1.msra.mxu0 0.0
  %5160 = vmatprep.subr.mxu0 0.0
  %5161 = vmatpush1.msra.mxu0 0.0
  %5162 = vmatprep.subr.mxu0 0.0
  %5163 = vmatpush1.msra.mxu0 0.0
  %5164 = vmatprep.subr.mxu0 0.0
  %5165 = vmatpush1.msra.mxu0 0.0
  %5166 = vmatprep.subr.mxu0 0.0
  %5167 = vmatpush1.msra.mxu0 0.0
  %5168 = vmatprep.subr.mxu0 0.0
  %5169 = vmatpush1.msra.mxu0 0.0
  %5170 = vmatprep.subr.mxu0 0.0
  %5171 = vmatpush1.msra.mxu0 0.0
  %5172 = vmatprep.subr.mxu0 0.0
  %5173 = vmatpush1.msra.mxu0 0.0
  %5174 = vmatprep.subr.mxu0 0.0
  %5175 = vmatpush1.msra.mxu0 0.0
  %5176 = vmatprep.mubr.f32.mxu0 0.0
  %5177 = vmatmul.mubr.f32.gmra.mrb[0].mxu0 %v5098
  %v5178 = vpop.f32.mrb[0].mxu0
  %v5179 = vadd.f32 0.0, %v5178
  %v5180 = vpop.f32.mrb[0].mxu0
  %v5181 = vadd.f32 0.0, %v5180
  %5182 = vdwg.mxu0
  %5183 = vmatprep.subr.mxu0 %v5110
  %5184 = vmatpush1.msra.mxu0 %v5107
  %5185 = vmatprep.subr.mxu0 0.0
  %5186 = vmatpush1.msra.mxu0 0.0
  %5187 = vmatprep.subr.mxu0 0.0
  %5188 = vmatpush1.msra.mxu0 0.0
  %5189 = vmatprep.subr.mxu0 0.0
  %5190 = vmatpush1.msra.mxu0 0.0
  %5191 = vmatprep.subr.mxu0 0.0
  %5192 = vmatpush1.msra.mxu0 0.0
  %5193 = vmatprep.subr.mxu0 0.0
  %5194 = vmatpush1.msra.mxu0 0.0
  %5195 = vmatprep.subr.mxu0 0.0
  %5196 = vmatpush1.msra.mxu0 0.0
  %5197 = vmatprep.subr.mxu0 0.0
  %5198 = vmatpush1.msra.mxu0 0.0
  %5199 = vmatprep.subr.mxu0 0.0
  %5200 = vmatpush1.msra.mxu0 0.0
  %5201 = vmatprep.subr.mxu0 0.0
  %5202 = vmatpush1.msra.mxu0 0.0
  %5203 = vmatprep.subr.mxu0 0.0
  %5204 = vmatpush1.msra.mxu0 0.0
  %5205 = vmatprep.subr.mxu0 0.0
  %5206 = vmatpush1.msra.mxu0 0.0
  %5207 = vmatprep.subr.mxu0 0.0
  %5208 = vmatpush1.msra.mxu0 0.0
  %5209 = vmatprep.subr.mxu0 0.0
  %5210 = vmatpush1.msra.mxu0 0.0
  %5211 = vmatprep.subr.mxu0 0.0
  %5212 = vmatpush1.msra.mxu0 0.0
  %5213 = vmatprep.subr.mxu0 0.0
  %5214 = vmatpush1.msra.mxu0 0.0
  %5215 = vmatprep.subr.mxu0 0.0
  %5216 = vmatpush1.msra.mxu0 0.0
  %5217 = vmatprep.subr.mxu0 0.0
  %5218 = vmatpush1.msra.mxu0 0.0
  %5219 = vmatprep.subr.mxu0 0.0
  %5220 = vmatpush1.msra.mxu0 0.0
  %5221 = vmatprep.subr.mxu0 0.0
  %5222 = vmatpush1.msra.mxu0 0.0
  %5223 = vmatprep.subr.mxu0 0.0
  %5224 = vmatpush1.msra.mxu0 0.0
  %5225 = vmatprep.subr.mxu0 0.0
  %5226 = vmatpush1.msra.mxu0 0.0
  %5227 = vmatprep.subr.mxu0 0.0
  %5228 = vmatpush1.msra.mxu0 0.0
  %5229 = vmatprep.subr.mxu0 0.0
  %5230 = vmatpush1.msra.mxu0 0.0
  %5231 = vmatprep.subr.mxu0 0.0
  %5232 = vmatpush1.msra.mxu0 0.0
  %5233 = vmatprep.subr.mxu0 0.0
  %5234 = vmatpush1.msra.mxu0 0.0
  %5235 = vmatprep.subr.mxu0 0.0
  %5236 = vmatpush1.msra.mxu0 0.0
  %5237 = vmatprep.subr.mxu0 0.0
  %5238 = vmatpush1.msra.mxu0 0.0
  %5239 = vmatprep.subr.mxu0 0.0
  %5240 = vmatpush1.msra.mxu0 0.0
  %5241 = vmatprep.subr.mxu0 0.0
  %5242 = vmatpush1.msra.mxu0 0.0
  %5243 = vmatprep.subr.mxu0 0.0
  %5244 = vmatpush1.msra.mxu0 0.0
  %5245 = vmatprep.subr.mxu0 0.0
  %5246 = vmatpush1.msra.mxu0 0.0
  %5247 = vmatprep.mubr.f32.mxu0 0.0
  %5248 = vmatmul.mubr.f32.gmra.mrb[0].mxu0 %v5098
  %v5249 = vpop.f32.mrb[0].mxu0
  %v5250 = vadd.f32 0.0, %v5249
  %v5251 = vpop.f32.mrb[0].mxu0
  %v5252 = vadd.f32 0.0, %v5251
  %5253 = vdwg.mxu0
  %v5254 = vadd.f32 %v5067, %v5179
  %v5255 = vadd.f32 %v5068, %v5181
  %v5256 = vadd.f32 %v5069, %v5250
  %v5257 = vadd.f32 %v5070, %v5252
  %5258 = vrot.lane.b32.xlu0 %v3783, 111
  %v5259 = vpop.permute.xlu0 %5258
  %5260 = vrot.lane.b32.xlu0 %v3789, 111
  %v5261 = vpop.permute.xlu0 %5260
  %5262 = vrot.lane.b32.xlu0 %v3784, 111
  %v5263 = vpop.permute.xlu0 %5262
  %5264 = vrot.lane.b32.xlu0 %v3790, 111
  %v5265 = vpop.permute.xlu0 %5264
  %v5266 = vsel %vm1793, %v5263, %v5265
  %v5267 = vsel %vm1793, %v5261, %v5263
  %v5268 = vsel %vm1793, %v5259, %v5261
  %v5269 = vsel %vm1793, %v5265, %v5259
  %v5270 = vmul.f32 %v5268, %v1801
  %v5271 = vmul.f32 %v5267, %v1805
  %v5272 = vmul.f32 %v5266, %v1809
  %v5273 = vmul.f32 %v5269, %v1813
  %v5274 = vadd.f32 %v5087, %v5270
  %v5275 = vadd.f32 %v5088, %v5271
  %v5276 = vadd.f32 %v5089, %v5272
  %v5277 = vadd.f32 %v5090, %v5273
  %v5278 = vmax.f32 %v5270, 0.0
  %v5279 = vmax.f32 %v5271, 0.0
  %v5280 = vmax.f32 %v5272, 0.0
  %v5281 = vmax.f32 %v5273, 0.0
  %s5282 = scalar_lea.vmem %s6, 32
  %v5283 = vld [vmem:[%s5282] sm:$0xf]
  %v5285 = vsel %vm130, %v5283, 0
  %v5288 = vsel %vm137, %v5278, 0
  %v5291 = vsel %vm137, %v5279, 0
  %v5294 = vsel %vm137, %v5280, 0
  %v5297 = vsel %vm137, %v5281, 0
  %5299 = vmatprep.subr.mxu0 %v5291
  %5300 = vmatpush1.msra.mxu0 %v5288
  %5301 = vmatprep.subr.mxu0 0.0
  %5302 = vmatpush1.msra.mxu0 0.0
  %5303 = vmatprep.subr.mxu0 0.0
  %5304 = vmatpush1.msra.mxu0 0.0
  %5305 = vmatprep.subr.mxu0 0.0
  %5306 = vmatpush1.msra.mxu0 0.0
  %5307 = vmatprep.subr.mxu0 0.0
  %5308 = vmatpush1.msra.mxu0 0.0
  %5309 = vmatprep.subr.mxu0 0.0
  %5310 = vmatpush1.msra.mxu0 0.0
  %5311 = vmatprep.subr.mxu0 0.0
  %5312 = vmatpush1.msra.mxu0 0.0
  %5313 = vmatprep.subr.mxu0 0.0
  %5314 = vmatpush1.msra.mxu0 0.0
  %5315 = vmatprep.subr.mxu0 0.0
  %5316 = vmatpush1.msra.mxu0 0.0
  %5317 = vmatprep.subr.mxu0 0.0
  %5318 = vmatpush1.msra.mxu0 0.0
  %5319 = vmatprep.subr.mxu0 0.0
  %5320 = vmatpush1.msra.mxu0 0.0
  %5321 = vmatprep.subr.mxu0 0.0
  %5322 = vmatpush1.msra.mxu0 0.0
  %5323 = vmatprep.subr.mxu0 0.0
  %5324 = vmatpush1.msra.mxu0 0.0
  %5325 = vmatprep.subr.mxu0 0.0
  %5326 = vmatpush1.msra.mxu0 0.0
  %5327 = vmatprep.subr.mxu0 0.0
  %5328 = vmatpush1.msra.mxu0 0.0
  %5329 = vmatprep.subr.mxu0 0.0
  %5330 = vmatpush1.msra.mxu0 0.0
  %5331 = vmatprep.subr.mxu0 0.0
  %5332 = vmatpush1.msra.mxu0 0.0
  %5333 = vmatprep.subr.mxu0 0.0
  %5334 = vmatpush1.msra.mxu0 0.0
  %5335 = vmatprep.subr.mxu0 0.0
  %5336 = vmatpush1.msra.mxu0 0.0
  %5337 = vmatprep.subr.mxu0 0.0
  %5338 = vmatpush1.msra.mxu0 0.0
  %5339 = vmatprep.subr.mxu0 0.0
  %5340 = vmatpush1.msra.mxu0 0.0
  %5341 = vmatprep.subr.mxu0 0.0
  %5342 = vmatpush1.msra.mxu0 0.0
  %5343 = vmatprep.subr.mxu0 0.0
  %5344 = vmatpush1.msra.mxu0 0.0
  %5345 = vmatprep.subr.mxu0 0.0
  %5346 = vmatpush1.msra.mxu0 0.0
  %5347 = vmatprep.subr.mxu0 0.0
  %5348 = vmatpush1.msra.mxu0 0.0
  %5349 = vmatprep.subr.mxu0 0.0
  %5350 = vmatpush1.msra.mxu0 0.0
  %5351 = vmatprep.subr.mxu0 0.0
  %5352 = vmatpush1.msra.mxu0 0.0
  %5353 = vmatprep.subr.mxu0 0.0
  %5354 = vmatpush1.msra.mxu0 0.0
  %5355 = vmatprep.subr.mxu0 0.0
  %5356 = vmatpush1.msra.mxu0 0.0
  %5357 = vmatprep.subr.mxu0 0.0
  %5358 = vmatpush1.msra.mxu0 0.0
  %5359 = vmatprep.subr.mxu0 0.0
  %5360 = vmatpush1.msra.mxu0 0.0
  %5361 = vmatprep.subr.mxu0 0.0
  %5362 = vmatpush1.msra.mxu0 0.0
  %5363 = vmatprep.mubr.f32.mxu0 0.0
  %5364 = vmatmul.mubr.f32.gmra.mrb[0].mxu0 %v5285
  %v5365 = vpop.f32.mrb[0].mxu0
  %v5366 = vadd.f32 0.0, %v5365
  %v5367 = vpop.f32.mrb[0].mxu0
  %v5368 = vadd.f32 0.0, %v5367
  %5369 = vdwg.mxu0
  %5370 = vmatprep.subr.mxu0 %v5297
  %5371 = vmatpush1.msra.mxu0 %v5294
  %5372 = vmatprep.subr.mxu0 0.0
  %5373 = vmatpush1.msra.mxu0 0.0
  %5374 = vmatprep.subr.mxu0 0.0
  %5375 = vmatpush1.msra.mxu0 0.0
  %5376 = vmatprep.subr.mxu0 0.0
  %5377 = vmatpush1.msra.mxu0 0.0
  %5378 = vmatprep.subr.mxu0 0.0
  %5379 = vmatpush1.msra.mxu0 0.0
  %5380 = vmatprep.subr.mxu0 0.0
  %5381 = vmatpush1.msra.mxu0 0.0
  %5382 = vmatprep.subr.mxu0 0.0
  %5383 = vmatpush1.msra.mxu0 0.0
  %5384 = vmatprep.subr.mxu0 0.0
  %5385 = vmatpush1.msra.mxu0 0.0
  %5386 = vmatprep.subr.mxu0 0.0
  %5387 = vmatpush1.msra.mxu0 0.0
  %5388 = vmatprep.subr.mxu0 0.0
  %5389 = vmatpush1.msra.mxu0 0.0
  %5390 = vmatprep.subr.mxu0 0.0
  %5391 = vmatpush1.msra.mxu0 0.0
  %5392 = vmatprep.subr.mxu0 0.0
  %5393 = vmatpush1.msra.mxu0 0.0
  %5394 = vmatprep.subr.mxu0 0.0
  %5395 = vmatpush1.msra.mxu0 0.0
  %5396 = vmatprep.subr.mxu0 0.0
  %5397 = vmatpush1.msra.mxu0 0.0
  %5398 = vmatprep.subr.mxu0 0.0
  %5399 = vmatpush1.msra.mxu0 0.0
  %5400 = vmatprep.subr.mxu0 0.0
  %5401 = vmatpush1.msra.mxu0 0.0
  %5402 = vmatprep.subr.mxu0 0.0
  %5403 = vmatpush1.msra.mxu0 0.0
  %5404 = vmatprep.subr.mxu0 0.0
  %5405 = vmatpush1.msra.mxu0 0.0
  %5406 = vmatprep.subr.mxu0 0.0
  %5407 = vmatpush1.msra.mxu0 0.0
  %5408 = vmatprep.subr.mxu0 0.0
  %5409 = vmatpush1.msra.mxu0 0.0
  %5410 = vmatprep.subr.mxu0 0.0
  %5411 = vmatpush1.msra.mxu0 0.0
  %5412 = vmatprep.subr.mxu0 0.0
  %5413 = vmatpush1.msra.mxu0 0.0
  %5414 = vmatprep.subr.mxu0 0.0
  %5415 = vmatpush1.msra.mxu0 0.0
  %5416 = vmatprep.subr.mxu0 0.0
  %5417 = vmatpush1.msra.mxu0 0.0
  %5418 = vmatprep.subr.mxu0 0.0
  %5419 = vmatpush1.msra.mxu0 0.0
  %5420 = vmatprep.subr.mxu0 0.0
  %5421 = vmatpush1.msra.mxu0 0.0
  %5422 = vmatprep.subr.mxu0 0.0
  %5423 = vmatpush1.msra.mxu0 0.0
  %5424 = vmatprep.subr.mxu0 0.0
  %5425 = vmatpush1.msra.mxu0 0.0
  %5426 = vmatprep.subr.mxu0 0.0
  %5427 = vmatpush1.msra.mxu0 0.0
  %5428 = vmatprep.subr.mxu0 0.0
  %5429 = vmatpush1.msra.mxu0 0.0
  %5430 = vmatprep.subr.mxu0 0.0
  %5431 = vmatpush1.msra.mxu0 0.0
  %5432 = vmatprep.subr.mxu0 0.0
  %5433 = vmatpush1.msra.mxu0 0.0
  %5434 = vmatprep.mubr.f32.mxu0 0.0
  %5435 = vmatmul.mubr.f32.gmra.mrb[0].mxu0 %v5285
  %v5436 = vpop.f32.mrb[0].mxu0
  %v5437 = vadd.f32 0.0, %v5436
  %v5438 = vpop.f32.mrb[0].mxu0
  %v5439 = vadd.f32 0.0, %v5438
  %5440 = vdwg.mxu0
  %v5441 = vadd.f32 %v5254, %v5366
  %v5442 = vadd.f32 %v5255, %v5368
  %v5443 = vadd.f32 %v5256, %v5437
  %v5444 = vadd.f32 %v5257, %v5439
  %v5445 = vld [vmem:[%s7] sm:$0xf]
  %5447 = vset.pattern.permute.xlu0 0
  %5448 = vperm.xlu0 %5447, %v5445
  %v5449 = vpop.permute.xlu0 %5448
  %v5451 = vadd.f32 %v5441, %v5449
  %v5452 = vadd.f32 %v5442, %v5449
  %v5453 = vadd.f32 %v5443, %v5449
  %v5454 = vadd.f32 %v5444, %v5449
  %v5455 = vmul.f32 %v5274, %v2032
  %v5456 = vmul.f32 %v5275, %v2036
  %v5457 = vmul.f32 %v5276, %v2040
  %v5458 = vmul.f32 %v5277, %v2044
  %v5463 = vcombine.low %v5455, %v5456
  %v5464 = vcombine.low %v5457, %v5458
  %v5467 = vadd.f32 %v3783, %v5463
  %v5468 = vadd.f32 %v3784, %v5464
  %v5473 = vcombine.low %v5451, %v5452
  %v5474 = vcombine.low %v5453, %v5454
  %v5477 = vadd.f32 %v5467, %v5473
  %v5478 = vadd.f32 %v5468, %v5474
  %v5479 = vadd.f32 %v3785, %v5477
  %v5480 = vadd.f32 %v3786, %v5478
  %5481 = vst [vmem:[%s8] sm:$0xff] %v5479
  %5482 = vst [vmem:[%s8 + $0x8] sm:$0xff] %v5480
  // Predicated region
  $region34: #{search_cell_pallas.1} parent=0 // pred_check
    _
  $region35: #{search_cell_pallas.1} parent=0 // pred_check_branch
    %5484 = sbr.rel (0) target = $region37
  $region36: #{search_cell_pallas.1} parent=0 // pred_region
    _
  $region37: #{search_cell_pallas.1} parent=0 // pred_fallthru
    _
  // Predicated region
  $region38: #{search_cell_pallas.1} parent=0 // pred_check
    _
  $region39: #{search_cell_pallas.1} parent=0 // pred_check_branch
    %5486 = sbr.rel (0) target = $region41
  $region40: #{search_cell_pallas.1} parent=0 // pred_region
    _
  $region41: #{search_cell_pallas.1} parent=0 // pred_fallthru
    _

</llo_original>
